<compile_context>
chip_gen: v6e
topology: v6e:2x2x1
jax: 0.10.0
libtpu: 0.0.40
codegen_flags: <defaults>
</compile_context>

<pallas_src>
import jax
import jax.numpy as jnp
from jax import lax
from jax.experimental import pallas as pl
from jax.experimental.pallas import tpu as pltpu


# ------------------------------------------------------------------ helpers

def _linear(x2, w_ref, b_ref):
    """x2: (n, in) f32, w_ref: (out, in), b_ref: (1, out) -> x @ W^T + b."""
    y = lax.dot_general(x2, w_ref[...], (((1,), (1,)), ((), ())),
                        preferred_element_type=jnp.float32)
    return y + b_ref[...]


def _softmax_last(x):
    m = jnp.max(x, axis=-1, keepdims=True)
    e = jnp.exp(x - m)
    return e / jnp.sum(e, axis=-1, keepdims=True)


def _first_argmax_onehot(v):
    """Row-wise one-hot of the first maximum of v (TB, L). Forward value of
    F.gumbel_softmax(logits, hard=True) when v = logits + gumbel_noise."""
    tb, l = v.shape
    m = jnp.max(v, axis=1, keepdims=True)
    iota = lax.broadcasted_iota(jnp.int32, (tb, l), 1)
    idx = jnp.min(jnp.where(v >= m, iota, l), axis=1, keepdims=True)
    return (iota == idx).astype(jnp.float32)


# ------------------------------------------------------------------ kernels

def _review_gate_kernel(emb_ref, w1_ref, b1_ref, w2_ref, b2_ref, o_ref):
    # emb_ref: (TB, L, N, d)  ->  o_ref: (TB, L, d)
    tb, l, _, d = emb_ref.shape
    s = jnp.sum(emb_ref[...], axis=2).reshape(tb * l, d)           # sum over words
    g = (jax.nn.sigmoid(_linear(s, w1_ref, b1_ref))
         * jnp.tanh(_linear(s, w2_ref, b2_ref)))
    o_ref[...] = g.reshape(tb, l, d)


def _review_coatt_kernel(u_ref, i_ref, wu_ref, bu_ref, wi_ref, bi_ref, m_ref,
                         gu_ref, gi_ref, pu_ref, pi_ref):
    # u_ref: (TB, L1, d), i_ref: (TB, L2, d)  ->  one-hot pointers (TB,L1),(TB,L2)
    tb, l1, d = u_ref.shape
    _, l2, _ = i_ref.shape
    u = _linear(u_ref[...].reshape(tb * l1, d), wu_ref, bu_ref)     # fc_u
    i = _linear(i_ref[...].reshape(tb * l2, d), wi_ref, bi_ref)     # fc_i
    um = jnp.dot(u, m_ref[...], preferred_element_type=jnp.float32)  # u @ M
    s = jnp.einsum('bld,bkd->blk',
                   um.reshape(tb, l1, d), i.reshape(tb, l2, d),
                   preferred_element_type=jnp.float32)              # (TB,L1,L2)
    u_score = jnp.max(s, axis=2)                                    # max pooling
    i_score = jnp.max(s, axis=1)
    # hard Gumbel-softmax forward == one-hot(argmax(score + gumbel noise))
    pu_ref[...] = _first_argmax_onehot(u_score + gu_ref[...])
    pi_ref[...] = _first_argmax_onehot(i_score + gi_ref[...])


def _word_coatt_feat_kernel(u_ref, i_ref, wu_ref, bu_ref, wi_ref, bi_ref,
                            m_ref, uf_ref, if_ref):
    # u_ref/i_ref: (TB, N, d) -> pointer-weighted features (TB, d) each
    tb, n1, d = u_ref.shape
    _, n2, _ = i_ref.shape
    u_words = u_ref[...]
    u = _linear(u_words.reshape(tb * n1, d), wu_ref, bu_ref)
    i = _linear(i_ref[...].reshape(tb * n2, d), wi_ref, bi_ref)
    um = jnp.dot(u, m_ref[...], preferred_element_type=jnp.float32)
    s = jnp.einsum('bld,bkd->blk',
                   um.reshape(tb, n1, d), i.reshape(tb, n2, d),
                   preferred_element_type=jnp.float32)              # (TB,N1,N2)
    p_u = _softmax_last(jnp.mean(s, axis=2))                        # avg pooling
    p_i = _softmax_last(jnp.mean(s, axis=1))
    # NOTE: the reference PyTorch uses u_words for BOTH features (apparent
    # upstream bug, requires N1 == N2); reproduced faithfully.
    uf_ref[...] = jnp.sum(u_words * p_u[:, :, None], axis=1)        # (TB, d)
    if_ref[...] = jnp.sum(u_words * p_i[:, :, None], axis=1)        # (TB, d)


def _fc_head_kernel(x_ref, w1_ref, b1_ref, w2_ref, b2_ref, o_ref):
    # Linear -> ReLU -> Linear
    h = jnp.maximum(_linear(x_ref[...], w1_ref, b1_ref), 0.0)
    o_ref[...] = _linear(h, w2_ref, b2_ref)


# ----------------------------------------------------------- pallas wrappers

_PARALLEL = pltpu.CompilerParams(dimension_semantics=("parallel",))


def review_gate(embs, w1, b1, w2, b2, tb):
    b_pad, l, n, d = embs.shape
    return pl.pallas_call(
        _review_gate_kernel,
        out_shape=jax.ShapeDtypeStruct((b_pad, l, d), jnp.float32),
        grid=(b_pad // tb,),
        in_specs=[
            pl.BlockSpec((tb, l, n, d), lambda i: (i, 0, 0, 0)),
            pl.BlockSpec((d, d), lambda i: (0, 0)),
            pl.BlockSpec((1, d), lambda i: (0, 0)),
            pl.BlockSpec((d, d), lambda i: (0, 0)),
            pl.BlockSpec((1, d), lambda i: (0, 0)),
        ],
        out_specs=pl.BlockSpec((tb, l, d), lambda i: (i, 0, 0)),
        compiler_params=_PARALLEL,
    )(embs, w1, b1.reshape(1, d), w2, b2.reshape(1, d))


def review_coatt(u_fea, i_fea, p, gu, gi, tb):
    b_pad, l1, d = u_fea.shape
    _, l2, _ = i_fea.shape
    flops = 2 * b_pad * d * (l1 * d + l2 * d + l1 * d + l1 * l2)
    bytes_accessed = 4 * (u_fea.size + i_fea.size + 3 * d * d + 2 * d
                          + gu.size + gi.size + b_pad * (l1 + l2))
    return pl.pallas_call(
        _review_coatt_kernel,
        out_shape=(jax.ShapeDtypeStruct((b_pad, l1), jnp.float32),
                   jax.ShapeDtypeStruct((b_pad, l2), jnp.float32)),
        grid=(b_pad // tb,),
        in_specs=[
            pl.BlockSpec((tb, l1, d), lambda i: (i, 0, 0)),
            pl.BlockSpec((tb, l2, d), lambda i: (i, 0, 0)),
            pl.BlockSpec((d, d), lambda i: (0, 0)),
            pl.BlockSpec((1, d), lambda i: (0, 0)),
            pl.BlockSpec((d, d), lambda i: (0, 0)),
            pl.BlockSpec((1, d), lambda i: (0, 0)),
            pl.BlockSpec((d, d), lambda i: (0, 0)),
            pl.BlockSpec((tb, l1), lambda i: (i, 0)),
            pl.BlockSpec((tb, l2), lambda i: (i, 0)),
        ],
        out_specs=(pl.BlockSpec((tb, l1), lambda i: (i, 0)),
                   pl.BlockSpec((tb, l2), lambda i: (i, 0))),
        compiler_params=_PARALLEL,
        cost_estimate=pl.CostEstimate(flops=flops, transcendentals=0,
                                      bytes_accessed=bytes_accessed),
    )(u_fea, i_fea, p['wu'], p['bu'].reshape(1, d),
      p['wi'], p['bi'].reshape(1, d), p['M'], gu, gi)


def word_coatt_feat(u_words, i_words, p, tb):
    b_pad, n1, d = u_words.shape
    _, n2, _ = i_words.shape
    return pl.pallas_call(
        _word_coatt_feat_kernel,
        out_shape=(jax.ShapeDtypeStruct((b_pad, d), jnp.float32),
                   jax.ShapeDtypeStruct((b_pad, d), jnp.float32)),
        grid=(b_pad // tb,),
        in_specs=[
            pl.BlockSpec((tb, n1, d), lambda i: (i, 0, 0)),
            pl.BlockSpec((tb, n2, d), lambda i: (i, 0, 0)),
            pl.BlockSpec((d, d), lambda i: (0, 0)),
            pl.BlockSpec((1, d), lambda i: (0, 0)),
            pl.BlockSpec((d, d), lambda i: (0, 0)),
            pl.BlockSpec((1, d), lambda i: (0, 0)),
            pl.BlockSpec((d, d), lambda i: (0, 0)),
        ],
        out_specs=(pl.BlockSpec((tb, d), lambda i: (i, 0)),
                   pl.BlockSpec((tb, d), lambda i: (i, 0))),
        compiler_params=_PARALLEL,
    )(u_words, i_words, p['wu'], p['bu'].reshape(1, d),
      p['wi'], p['bi'].reshape(1, d), p['M'])


def fc_head(x, w1, b1, w2, b2, tb):
    b_pad, d_in = x.shape
    d_hid, d_out = w1.shape[0], w2.shape[0]
    return pl.pallas_call(
        _fc_head_kernel,
        out_shape=jax.ShapeDtypeStruct((b_pad, d_out), jnp.float32),
        grid=(b_pad // tb,),
        in_specs=[
            pl.BlockSpec((tb, d_in), lambda i: (i, 0)),
            pl.BlockSpec((d_hid, d_in), lambda i: (0, 0)),
            pl.BlockSpec((1, d_hid), lambda i: (0, 0)),
            pl.BlockSpec((d_out, d_hid), lambda i: (0, 0)),
            pl.BlockSpec((1, d_out), lambda i: (0, 0)),
        ],
        out_specs=pl.BlockSpec((tb, d_out), lambda i: (i, 0)),
        compiler_params=_PARALLEL,
    )(x, w1, b1.reshape(1, d_hid), w2, b2.reshape(1, d_out))


# ------------------------------------------------------------- full forward

def mpcn_forward(params, user_reviews, item_reviews, gumbel_noise):
    """user_reviews: (B,L1,N) int32, item_reviews: (B,L2,N) int32.
    gumbel_noise: per-head tuples ((B,L1),(B,L2)) of pre-sampled Gumbel noise.
    Returns (u_out (B,1,id_emb), i_out (B,1,id_emb))."""
    head = len(params['review_coatt'])
    b = user_reviews.shape[0]

    tb = b if b <= 8 else 8                       # batch tile per grid step
    b_pad = -(-b // tb) * tb
    if b_pad != b:
        pad3 = ((0, b_pad - b), (0, 0), (0, 0))
        user_reviews = jnp.pad(user_reviews, pad3)
        item_reviews = jnp.pad(item_reviews, pad3)
        gumbel_noise = [(jnp.pad(gu, ((0, b_pad - b), (0, 0))),
                         jnp.pad(gi, ((0, b_pad - b), (0, 0))))
                        for gu, gi in gumbel_noise]

    u_table = params['user_word_embs']
    i_table = params['item_word_embs']

    # TODO(synk): embedding gathers stay in plain JAX (data-dependent gather
    # has no clean BlockSpec pattern at these shapes).
    u_word_embs = jnp.take(u_table, user_reviews, axis=0)   # (B, L1, N, d)
    i_word_embs = jnp.take(i_table, item_reviews, axis=0)   # (B, L2, N, d)

    u_reviews = review_gate(u_word_embs, params['fc_g1_w'], params['fc_g1_b'],
                            params['fc_g2_w'], params['fc_g2_b'], tb)
    i_reviews = review_gate(i_word_embs, params['fc_g1_w'], params['fc_g1_b'],
                            params['fc_g2_w'], params['fc_g2_b'], tb)

    u_fea, i_fea = [], []
    for h in range(head):
        gu, gi = gumbel_noise[h]
        p_u, p_i = review_coatt(u_reviews, i_reviews,
                                params['review_coatt'][h], gu, gi, tb)
        # hard pointer picks one review's word ids (one-hot bmm, exact ints)
        u_sel = jnp.round(jnp.einsum(
            'bln,bl->bn', user_reviews.astype(jnp.float32), p_u)).astype(jnp.int32)
        i_sel = jnp.round(jnp.einsum(
            'bln,bl->bn', item_reviews.astype(jnp.float32), p_i)).astype(jnp.int32)
        u_words = jnp.take(u_table, u_sel, axis=0)           # (B, N, d)
        i_words = jnp.take(i_table, i_sel, axis=0)           # (B, N, d)
        u_w, i_w = word_coatt_feat(u_words, i_words,
                                   params['word_coatt'][h], tb)
        u_fea.append(u_w)
        i_fea.append(i_w)

    u_cat = jnp.concatenate(u_fea, axis=1)                   # (B, head*d)
    i_cat = jnp.concatenate(i_fea, axis=1)

    # TODO(synk): nn.Dropout treated as identity (inference-mode forward).
    u_out = fc_head(u_cat, params['u_fc1_w'], params['u_fc1_b'],
                    params['u_fc2_w'], params['u_fc2_b'], tb)
    i_out = fc_head(i_cat, params['i_fc1_w'], params['i_fc1_b'],
                    params['i_fc2_w'], params['i_fc2_b'], tb)
    return u_out[:b, None, :], i_out[:b, None, :]


# --------------------------------------------------------- pure-JAX reference

def _reference(params, user_reviews, item_reviews, gumbel_noise):
    u_table, i_table = params['user_word_embs'], params['item_word_embs']

    def lin(x, w, b):
        return x @ w.T + b

    def gate(emb4):
        s = emb4.sum(2)
        return (jax.nn.sigmoid(lin(s, params['fc_g1_w'], params['fc_g1_b']))
                * jnp.tanh(lin(s, params['fc_g2_w'], params['fc_g2_b'])))

    def coatt(uf, itf, p, pooling, gumbel, noise=None):
        u = lin(uf, p['wu'], p['bu'])
        i = lin(itf, p['wi'], p['bi'])
        s = jnp.einsum('bld,de,bke->blk', u, p['M'], i)
        if pooling == 'max':
            u_s, i_s = s.max(2), s.max(1)
        else:
            u_s, i_s = s.mean(2), s.mean(1)
        if gumbel:
            gu, gi = noise
            p_u = jax.nn.one_hot(jnp.argmax(u_s + gu, 1), u_s.shape[1])
            p_i = jax.nn.one_hot(jnp.argmax(i_s + gi, 1), i_s.shape[1])
        else:
            p_u = jax.nn.softmax(u_s, axis=1)
            p_i = jax.nn.softmax(i_s, axis=1)
        return p_u, p_i

    u_reviews = gate(jnp.take(u_table, user_reviews, axis=0))
    i_reviews = gate(jnp.take(i_table, item_reviews, axis=0))

    u_fea, i_fea = [], []
    for h in range(len(params['review_coatt'])):
        p_u, p_i = coatt(u_reviews, i_reviews, params['review_coatt'][h],
                         'max', True, gumbel_noise[h])
        u_sel = jnp.round(jnp.einsum(
            'bln,bl->bn', user_reviews.astype(jnp.float32), p_u)).astype(jnp.int32)
        i_sel = jnp.round(jnp.einsum(
            'bln,bl->bn', item_reviews.astype(jnp.float32), p_i)).astype(jnp.int32)
        u_words = jnp.take(u_table, u_sel, axis=0)
        i_words = jnp.take(i_table, i_sel, axis=0)
        p_u, p_i = coatt(u_words, i_words, params['word_coatt'][h], 'avg', False)
        u_fea.append(jnp.einsum('bnd,bn->bd', u_words, p_u))
        i_fea.append(jnp.einsum('bnd,bn->bd', u_words, p_i))   # upstream bug kept
    u_cat = jnp.concatenate(u_fea, 1)
    i_cat = jnp.concatenate(i_fea, 1)
    u_out = lin(jnp.maximum(lin(u_cat, params['u_fc1_w'], params['u_fc1_b']), 0.),
                params['u_fc2_w'], params['u_fc2_b'])
    i_out = lin(jnp.maximum(lin(i_cat, params['i_fc1_w'], params['i_fc1_b']), 0.),
                params['i_fc2_w'], params['i_fc2_b'])
    return u_out[:, None, :], i_out[:, None, :]


# --------------------------------------------------------------------- main

if __name__ == "__main__":
    B, L1, L2, N = 2, 5, 6, 7
    vocab_size, word_dim, id_emb_size, head = 57, 32, 8, 3

    key = jax.random.PRNGKey(0)
    keys = iter(jax.random.split(key, 64))

    def unif(shape):
        return jax.random.uniform(next(keys), shape, jnp.float32, -0.1, 0.1)

    def coatt_params():
        return {'M': 0.1 * jax.random.normal(next(keys), (word_dim, word_dim),
                                             jnp.float32),
                'wu': unif((word_dim, word_dim)), 'bu': unif((word_dim,)),
                'wi': unif((word_dim, word_dim)), 'bi': unif((word_dim,))}

    params = {
        'user_word_embs': unif((vocab_size, word_dim)),
        'item_word_embs': unif((vocab_size, word_dim)),
        'fc_g1_w': unif((word_dim, word_dim)), 'fc_g1_b': unif((word_dim,)),
        'fc_g2_w': unif((word_dim, word_dim)), 'fc_g2_b': unif((word_dim,)),
        'review_coatt': [coatt_params() for _ in range(head)],
        'word_coatt': [coatt_params() for _ in range(head)],
        'u_fc1_w': unif((word_dim, word_dim * head)), 'u_fc1_b': unif((word_dim,)),
        'u_fc2_w': unif((id_emb_size, word_dim)), 'u_fc2_b': unif((id_emb_size,)),
        'i_fc1_w': unif((word_dim, word_dim * head)), 'i_fc1_b': unif((word_dim,)),
        'i_fc2_w': unif((id_emb_size, word_dim)), 'i_fc2_b': unif((id_emb_size,)),
    }

    user_reviews = jax.random.randint(next(keys), (B, L1, N), 0, vocab_size,
                                      jnp.int32)
    item_reviews = jax.random.randint(next(keys), (B, L2, N), 0, vocab_size,
                                      jnp.int32)
    # Gumbel noise for the hard (stochastic) review pointers, pre-sampled so
    # kernel and reference see identical noise.
    gumbel_noise = [(jax.random.gumbel(next(keys), (B, L1), jnp.float32),
                     jax.random.gumbel(next(keys), (B, L2), jnp.float32))
                    for _ in range(head)]

    u_out, i_out = jax.jit(mpcn_forward)(params, user_reviews, item_reviews,
                                         gumbel_noise)
    u_out, i_out = jax.block_until_ready((u_out, i_out))

    u_ref, i_ref = _reference(params, user_reviews, item_reviews, gumbel_noise)
    assert u_out.shape == (B, 1, id_emb_size)
    assert i_out.shape == (B, 1, id_emb_size)
    assert jnp.allclose(u_out, u_ref, atol=1e-4, rtol=1e-4), (u_out, u_ref)
    assert jnp.allclose(i_out, i_ref, atol=1e-4, rtol=1e-4), (i_out, i_ref)
    print("KERNEL_OK")
</pallas_src>

<mosaic_0001>
module attributes {stable_mosaic.version = 11 : i64} {
  func.func @_review_gate_kernel(%arg0: i32, %arg1: memref<2x6x7x32xf32, #tpu.memory_space<vmem>>, %arg2: memref<32x32xf32, #tpu.memory_space<vmem>>, %arg3: memref<1x32xf32, #tpu.memory_space<vmem>>, %arg4: memref<32x32xf32, #tpu.memory_space<vmem>>, %arg5: memref<1x32xf32, #tpu.memory_space<vmem>>, %arg6: memref<2x6x32xf32, #tpu.memory_space<vmem>>) attributes {dimension_semantics = [#tpu.dimension_semantics<parallel>], iteration_bounds = array<i64: 1>, scalar_prefetch = 0 : i64, scratch_operands = 0 : i64, tpu.core_type = #tpu.core_type<tc>, window_params = [{transform_indices = @transform_0, window_bounds = array<i64: 2, 6, 7, 32>}, {pipeline_mode = #tpu.pipeline_mode<synchronous>, transform_indices = @transform_1, window_bounds = array<i64: 32, 32>}, {pipeline_mode = #tpu.pipeline_mode<synchronous>, transform_indices = @transform_2, window_bounds = array<i64: 1, 32>}, {pipeline_mode = #tpu.pipeline_mode<synchronous>, transform_indices = @transform_3, window_bounds = array<i64: 32, 32>}, {pipeline_mode = #tpu.pipeline_mode<synchronous>, transform_indices = @transform_4, window_bounds = array<i64: 1, 32>}, {transform_indices = @transform_5, window_bounds = array<i64: 2, 6, 32>}]} {
    %c0 = arith.constant 0 : index
    %c0_0 = arith.constant 0 : index
    %c0_1 = arith.constant 0 : index
    %c0_2 = arith.constant 0 : index
    %0 = vector.load %arg1[%c0, %c0_0, %c0_1, %c0_2] : memref<2x6x7x32xf32, #tpu.memory_space<vmem>>, vector<2x6x7x32xf32>
    %cst = arith.constant dense<0.000000e+00> : vector<2x6x32xf32>
    %1 = vector.multi_reduction <add>, %0, %cst [2] : vector<2x6x7x32xf32> to vector<2x6x32xf32>
    %2 = vector.shape_cast %1 : vector<2x6x32xf32> to vector<12x32xf32>
    %c0_3 = arith.constant 0 : index
    %c0_4 = arith.constant 0 : index
    %3 = vector.load %arg2[%c0_3, %c0_4] : memref<32x32xf32, #tpu.memory_space<vmem>>, vector<32x32xf32>
    %cst_5 = arith.constant dense<0.000000e+00> : vector<12x32xf32>
    %4 = tpu.matmul %2, %3, %cst_5 {dimension_numbers = #tpu.dot_dimension_numbers<[1], [1], [0], [0], [0, 0, 1, 0], [], []>} : vector<12x32xf32>, vector<32x32xf32>, vector<12x32xf32> -> vector<12x32xf32>
    %c0_6 = arith.constant 0 : index
    %c0_7 = arith.constant 0 : index
    %5 = vector.load %arg3[%c0_6, %c0_7] : memref<1x32xf32, #tpu.memory_space<vmem>>, vector<1x32xf32>
    %6 = vector.broadcast %5 : vector<1x32xf32> to vector<12x32xf32>
    %7 = arith.addf %4, %6 : vector<12x32xf32>
    %8 = arith.negf %7 : vector<12x32xf32>
    %9 = math.exp %8 : vector<12x32xf32>
    %cst_8 = arith.constant 1.000000e+00 : f32
    %10 = vector.broadcast %cst_8 : f32 to vector<12x32xf32>
    %11 = arith.addf %10, %9 : vector<12x32xf32>
    %12 = arith.divf %10, %11 : vector<12x32xf32>
    %c0_9 = arith.constant 0 : index
    %c0_10 = arith.constant 0 : index
    %13 = vector.load %arg4[%c0_9, %c0_10] : memref<32x32xf32, #tpu.memory_space<vmem>>, vector<32x32xf32>
    %cst_11 = arith.constant dense<0.000000e+00> : vector<12x32xf32>
    %14 = tpu.matmul %2, %13, %cst_11 {dimension_numbers = #tpu.dot_dimension_numbers<[1], [1], [0], [0], [0, 0, 1, 0], [], []>} : vector<12x32xf32>, vector<32x32xf32>, vector<12x32xf32> -> vector<12x32xf32>
    %c0_12 = arith.constant 0 : index
    %c0_13 = arith.constant 0 : index
    %15 = vector.load %arg5[%c0_12, %c0_13] : memref<1x32xf32, #tpu.memory_space<vmem>>, vector<1x32xf32>
    %16 = vector.broadcast %15 : vector<1x32xf32> to vector<12x32xf32>
    %17 = arith.addf %14, %16 : vector<12x32xf32>
    %18 = math.tanh %17 : vector<12x32xf32>
    %19 = arith.mulf %12, %18 : vector<12x32xf32>
    %20 = vector.shape_cast %19 : vector<12x32xf32> to vector<2x6x32xf32>
    %c0_14 = arith.constant 0 : index
    %c0_15 = arith.constant 0 : index
    %c0_16 = arith.constant 0 : index
    %21 = vector.load %arg6[%c0_14, %c0_15, %c0_16] : memref<2x6x32xf32, #tpu.memory_space<vmem>>, vector<2x6x32xf32>
    tpu.vector_store %arg6[%c0_14, %c0_15, %c0_16], %20 {strides = array<i32>} : memref<2x6x32xf32, #tpu.memory_space<vmem>>, vector<2x6x32xf32>,
    return
  }
  func.func @transform_0(%arg0: i32) -> (i32, i32, i32, i32) {
    %c0_i32 = arith.constant 0 : i32
    %c0_i32_0 = arith.constant 0 : i32
    %c0_i32_1 = arith.constant 0 : i32
    %c0_i32_2 = arith.constant 0 : i32
    return %arg0, %c0_i32, %c0_i32_0, %c0_i32_1 : i32, i32, i32, i32
  }
  func.func @transform_1(%arg0: i32) -> (i32, i32) {
    %c0_i32 = arith.constant 0 : i32
    %c0_i32_0 = arith.constant 0 : i32
    %c0_i32_1 = arith.constant 0 : i32
    return %c0_i32, %c0_i32_0 : i32, i32
  }
  func.func @transform_2(%arg0: i32) -> (i32, i32) {
    %c0_i32 = arith.constant 0 : i32
    %c0_i32_0 = arith.constant 0 : i32
    %c0_i32_1 = arith.constant 0 : i32
    return %c0_i32, %c0_i32_0 : i32, i32
  }
  func.func @transform_3(%arg0: i32) -> (i32, i32) {
    %c0_i32 = arith.constant 0 : i32
    %c0_i32_0 = arith.constant 0 : i32
    %c0_i32_1 = arith.constant 0 : i32
    return %c0_i32, %c0_i32_0 : i32, i32
  }
  func.func @transform_4(%arg0: i32) -> (i32, i32) {
    %c0_i32 = arith.constant 0 : i32
    %c0_i32_0 = arith.constant 0 : i32
    %c0_i32_1 = arith.constant 0 : i32
    return %c0_i32, %c0_i32_0 : i32, i32
  }
  func.func @transform_5(%arg0: i32) -> (i32, i32, i32) {
    %c0_i32 = arith.constant 0 : i32
    %c0_i32_0 = arith.constant 0 : i32
    %c0_i32_1 = arith.constant 0 : i32
    return %arg0, %c0_i32, %c0_i32_0 : i32, i32, i32
  }
}

module attributes {stable_mosaic.version = 11 : i64} {
  func.func @_review_gate_kernel(%arg0: i32, %arg1: memref<2x5x7x32xf32, #tpu.memory_space<vmem>>, %arg2: memref<32x32xf32, #tpu.memory_space<vmem>>, %arg3: memref<1x32xf32, #tpu.memory_space<vmem>>, %arg4: memref<32x32xf32, #tpu.memory_space<vmem>>, %arg5: memref<1x32xf32, #tpu.memory_space<vmem>>, %arg6: memref<2x5x32xf32, #tpu.memory_space<vmem>>) attributes {dimension_semantics = [#tpu.dimension_semantics<parallel>], iteration_bounds = array<i64: 1>, scalar_prefetch = 0 : i64, scratch_operands = 0 : i64, tpu.core_type = #tpu.core_type<tc>, window_params = [{transform_indices = @transform_0, window_bounds = array<i64: 2, 5, 7, 32>}, {pipeline_mode = #tpu.pipeline_mode<synchronous>, transform_indices = @transform_1, window_bounds = array<i64: 32, 32>}, {pipeline_mode = #tpu.pipeline_mode<synchronous>, transform_indices = @transform_2, window_bounds = array<i64: 1, 32>}, {pipeline_mode = #tpu.pipeline_mode<synchronous>, transform_indices = @transform_3, window_bounds = array<i64: 32, 32>}, {pipeline_mode = #tpu.pipeline_mode<synchronous>, transform_indices = @transform_4, window_bounds = array<i64: 1, 32>}, {transform_indices = @transform_5, window_bounds = array<i64: 2, 5, 32>}]} {
    %c0 = arith.constant 0 : index
    %c0_0 = arith.constant 0 : index
    %c0_1 = arith.constant 0 : index
    %c0_2 = arith.constant 0 : index
    %0 = vector.load %arg1[%c0, %c0_0, %c0_1, %c0_2] : memref<2x5x7x32xf32, #tpu.memory_space<vmem>>, vector<2x5x7x32xf32>
    %cst = arith.constant dense<0.000000e+00> : vector<2x5x32xf32>
    %1 = vector.multi_reduction <add>, %0, %cst [2] : vector<2x5x7x32xf32> to vector<2x5x32xf32>
    %2 = vector.shape_cast %1 : vector<2x5x32xf32> to vector<10x32xf32>
    %c0_3 = arith.constant 0 : index
    %c0_4 = arith.constant 0 : index
    %3 = vector.load %arg2[%c0_3, %c0_4] : memref<32x32xf32, #tpu.memory_space<vmem>>, vector<32x32xf32>
    %cst_5 = arith.constant dense<0.000000e+00> : vector<10x32xf32>
    %4 = tpu.matmul %2, %3, %cst_5 {dimension_numbers = #tpu.dot_dimension_numbers<[1], [1], [0], [0], [0, 0, 1, 0], [], []>} : vector<10x32xf32>, vector<32x32xf32>, vector<10x32xf32> -> vector<10x32xf32>
    %c0_6 = arith.constant 0 : index
    %c0_7 = arith.constant 0 : index
    %5 = vector.load %arg3[%c0_6, %c0_7] : memref<1x32xf32, #tpu.memory_space<vmem>>, vector<1x32xf32>
    %6 = vector.broadcast %5 : vector<1x32xf32> to vector<10x32xf32>
    %7 = arith.addf %4, %6 : vector<10x32xf32>
    %8 = arith.negf %7 : vector<10x32xf32>
    %9 = math.exp %8 : vector<10x32xf32>
    %cst_8 = arith.constant 1.000000e+00 : f32
    %10 = vector.broadcast %cst_8 : f32 to vector<10x32xf32>
    %11 = arith.addf %10, %9 : vector<10x32xf32>
    %12 = arith.divf %10, %11 : vector<10x32xf32>
    %c0_9 = arith.constant 0 : index
    %c0_10 = arith.constant 0 : index
    %13 = vector.load %arg4[%c0_9, %c0_10] : memref<32x32xf32, #tpu.memory_space<vmem>>, vector<32x32xf32>
    %cst_11 = arith.constant dense<0.000000e+00> : vector<10x32xf32>
    %14 = tpu.matmul %2, %13, %cst_11 {dimension_numbers = #tpu.dot_dimension_numbers<[1], [1], [0], [0], [0, 0, 1, 0], [], []>} : vector<10x32xf32>, vector<32x32xf32>, vector<10x32xf32> -> vector<10x32xf32>
    %c0_12 = arith.constant 0 : index
    %c0_13 = arith.constant 0 : index
    %15 = vector.load %arg5[%c0_12, %c0_13] : memref<1x32xf32, #tpu.memory_space<vmem>>, vector<1x32xf32>
    %16 = vector.broadcast %15 : vector<1x32xf32> to vector<10x32xf32>
    %17 = arith.addf %14, %16 : vector<10x32xf32>
    %18 = math.tanh %17 : vector<10x32xf32>
    %19 = arith.mulf %12, %18 : vector<10x32xf32>
    %20 = vector.shape_cast %19 : vector<10x32xf32> to vector<2x5x32xf32>
    %c0_14 = arith.constant 0 : index
    %c0_15 = arith.constant 0 : index
    %c0_16 = arith.constant 0 : index
    %21 = vector.load %arg6[%c0_14, %c0_15, %c0_16] : memref<2x5x32xf32, #tpu.memory_space<vmem>>, vector<2x5x32xf32>
    tpu.vector_store %arg6[%c0_14, %c0_15, %c0_16], %20 {strides = array<i32>} : memref<2x5x32xf32, #tpu.memory_space<vmem>>, vector<2x5x32xf32>,
    return
  }
  func.func @transform_0(%arg0: i32) -> (i32, i32, i32, i32) {
    %c0_i32 = arith.constant 0 : i32
    %c0_i32_0 = arith.constant 0 : i32
    %c0_i32_1 = arith.constant 0 : i32
    %c0_i32_2 = arith.constant 0 : i32
    return %arg0, %c0_i32, %c0_i32_0, %c0_i32_1 : i32, i32, i32, i32
  }
  func.func @transform_1(%arg0: i32) -> (i32, i32) {
    %c0_i32 = arith.constant 0 : i32
    %c0_i32_0 = arith.constant 0 : i32
    %c0_i32_1 = arith.constant 0 : i32
    return %c0_i32, %c0_i32_0 : i32, i32
  }
  func.func @transform_2(%arg0: i32) -> (i32, i32) {
    %c0_i32 = arith.constant 0 : i32
    %c0_i32_0 = arith.constant 0 : i32
    %c0_i32_1 = arith.constant 0 : i32
    return %c0_i32, %c0_i32_0 : i32, i32
  }
  func.func @transform_3(%arg0: i32) -> (i32, i32) {
    %c0_i32 = arith.constant 0 : i32
    %c0_i32_0 = arith.constant 0 : i32
    %c0_i32_1 = arith.constant 0 : i32
    return %c0_i32, %c0_i32_0 : i32, i32
  }
  func.func @transform_4(%arg0: i32) -> (i32, i32) {
    %c0_i32 = arith.constant 0 : i32
    %c0_i32_0 = arith.constant 0 : i32
    %c0_i32_1 = arith.constant 0 : i32
    return %c0_i32, %c0_i32_0 : i32, i32
  }
  func.func @transform_5(%arg0: i32) -> (i32, i32, i32) {
    %c0_i32 = arith.constant 0 : i32
    %c0_i32_0 = arith.constant 0 : i32
    %c0_i32_1 = arith.constant 0 : i32
    return %arg0, %c0_i32, %c0_i32_0 : i32, i32, i32
  }
}

module attributes {stable_mosaic.version = 11 : i64} {
  func.func @_review_coatt_kernel(%arg0: i32, %arg1: memref<2x5x32xf32, #tpu.memory_space<vmem>>, %arg2: memref<2x6x32xf32, #tpu.memory_space<vmem>>, %arg3: memref<32x32xf32, #tpu.memory_space<vmem>>, %arg4: memref<1x32xf32, #tpu.memory_space<vmem>>, %arg5: memref<32x32xf32, #tpu.memory_space<vmem>>, %arg6: memref<1x32xf32, #tpu.memory_space<vmem>>, %arg7: memref<32x32xf32, #tpu.memory_space<vmem>>, %arg8: memref<2x5xf32, #tpu.memory_space<vmem>>, %arg9: memref<2x6xf32, #tpu.memory_space<vmem>>, %arg10: memref<2x5xf32, #tpu.memory_space<vmem>>, %arg11: memref<2x6xf32, #tpu.memory_space<vmem>>) attributes {dimension_semantics = [#tpu.dimension_semantics<parallel>], iteration_bounds = array<i64: 1>, scalar_prefetch = 0 : i64, scratch_operands = 0 : i64, tpu.core_type = #tpu.core_type<tc>, window_params = [{transform_indices = @transform_0, window_bounds = array<i64: 2, 5, 32>}, {transform_indices = @transform_1, window_bounds = array<i64: 2, 6, 32>}, {pipeline_mode = #tpu.pipeline_mode<synchronous>, transform_indices = @transform_2, window_bounds = array<i64: 32, 32>}, {pipeline_mode = #tpu.pipeline_mode<synchronous>, transform_indices = @transform_3, window_bounds = array<i64: 1, 32>}, {pipeline_mode = #tpu.pipeline_mode<synchronous>, transform_indices = @transform_4, window_bounds = array<i64: 32, 32>}, {pipeline_mode = #tpu.pipeline_mode<synchronous>, transform_indices = @transform_5, window_bounds = array<i64: 1, 32>}, {pipeline_mode = #tpu.pipeline_mode<synchronous>, transform_indices = @transform_6, window_bounds = array<i64: 32, 32>}, {transform_indices = @transform_7, window_bounds = array<i64: 2, 5>}, {transform_indices = @transform_8, window_bounds = array<i64: 2, 6>}, {transform_indices = @transform_9, window_bounds = array<i64: 2, 5>}, {transform_indices = @transform_10, window_bounds = array<i64: 2, 6>}]} {
    %c0 = arith.constant 0 : index
    %c0_0 = arith.constant 0 : index
    %c0_1 = arith.constant 0 : index
    %0 = vector.load %arg1[%c0, %c0_0, %c0_1] : memref<2x5x32xf32, #tpu.memory_space<vmem>>, vector<2x5x32xf32>
    %1 = vector.shape_cast %0 : vector<2x5x32xf32> to vector<10x32xf32>
    %c0_2 = arith.constant 0 : index
    %c0_3 = arith.constant 0 : index
    %2 = vector.load %arg3[%c0_2, %c0_3] : memref<32x32xf32, #tpu.memory_space<vmem>>, vector<32x32xf32>
    %cst = arith.constant dense<0.000000e+00> : vector<10x32xf32>
    %3 = tpu.matmul %1, %2, %cst {dimension_numbers = #tpu.dot_dimension_numbers<[1], [1], [0], [0], [0, 0, 1, 0], [], []>} : vector<10x32xf32>, vector<32x32xf32>, vector<10x32xf32> -> vector<10x32xf32>
    %c0_4 = arith.constant 0 : index
    %c0_5 = arith.constant 0 : index
    %4 = vector.load %arg4[%c0_4, %c0_5] : memref<1x32xf32, #tpu.memory_space<vmem>>, vector<1x32xf32>
    %5 = vector.broadcast %4 : vector<1x32xf32> to vector<10x32xf32>
    %6 = arith.addf %3, %5 : vector<10x32xf32>
    %c0_6 = arith.constant 0 : index
    %c0_7 = arith.constant 0 : index
    %c0_8 = arith.constant 0 : index
    %7 = vector.load %arg2[%c0_6, %c0_7, %c0_8] : memref<2x6x32xf32, #tpu.memory_space<vmem>>, vector<2x6x32xf32>
    %8 = vector.shape_cast %7 : vector<2x6x32xf32> to vector<12x32xf32>
    %c0_9 = arith.constant 0 : index
    %c0_10 = arith.constant 0 : index
    %9 = vector.load %arg5[%c0_9, %c0_10] : memref<32x32xf32, #tpu.memory_space<vmem>>, vector<32x32xf32>
    %cst_11 = arith.constant dense<0.000000e+00> : vector<12x32xf32>
    %10 = tpu.matmul %8, %9, %cst_11 {dimension_numbers = #tpu.dot_dimension_numbers<[1], [1], [0], [0], [0, 0, 1, 0], [], []>} : vector<12x32xf32>, vector<32x32xf32>, vector<12x32xf32> -> vector<12x32xf32>
    %c0_12 = arith.constant 0 : index
    %c0_13 = arith.constant 0 : index
    %11 = vector.load %arg6[%c0_12, %c0_13] : memref<1x32xf32, #tpu.memory_space<vmem>>, vector<1x32xf32>
    %12 = vector.broadcast %11 : vector<1x32xf32> to vector<12x32xf32>
    %13 = arith.addf %10, %12 : vector<12x32xf32>
    %c0_14 = arith.constant 0 : index
    %c0_15 = arith.constant 0 : index
    %14 = vector.load %arg7[%c0_14, %c0_15] : memref<32x32xf32, #tpu.memory_space<vmem>>, vector<32x32xf32>
    %cst_16 = arith.constant dense<0.000000e+00> : vector<10x32xf32>
    %15 = tpu.matmul %6, %14, %cst_16 {dimension_numbers = #tpu.dot_dimension_numbers<[1], [0], [0], [1], [0, 0, 1, 1], [], []>} : vector<10x32xf32>, vector<32x32xf32>, vector<10x32xf32> -> vector<10x32xf32>
    %16 = vector.shape_cast %15 : vector<10x32xf32> to vector<2x5x32xf32>
    %17 = vector.shape_cast %13 : vector<12x32xf32> to vector<2x6x32xf32>
    "tpu.trace_start"() <{level = 10 : i32, message = "bld,bkd->blk"}> : () -> ()
    %cst_17 = arith.constant dense<0.000000e+00> : vector<2x5x6xf32>
    %18 = tpu.matmul %16, %17, %cst_17 {dimension_numbers = #tpu.dot_dimension_numbers<[2], [2], [1], [1], [0, 0, 0, 1, 1, 1], [0], [0]>} : vector<2x5x32xf32>, vector<2x6x32xf32>, vector<2x5x6xf32> -> vector<2x5x6xf32>
    "tpu.trace_stop"() : () -> ()
    %cst_18 = arith.constant dense<0xFF800000> : vector<2x5xf32>
    %19 = vector.multi_reduction <maximumf>, %18, %cst_18 [2] : vector<2x5x6xf32> to vector<2x5xf32>
    %cst_19 = arith.constant dense<0xFF800000> : vector<2x6xf32>
    %20 = vector.multi_reduction <maximumf>, %18, %cst_19 [1] : vector<2x5x6xf32> to vector<2x6xf32>
    %c0_20 = arith.constant 0 : index
    %c0_21 = arith.constant 0 : index
    %21 = vector.load %arg8[%c0_20, %c0_21] : memref<2x5xf32, #tpu.memory_space<vmem>>, vector<2x5xf32>
    %22 = arith.addf %19, %21 : vector<2x5xf32>
    %cst_22 = arith.constant dense<0xFF800000> : vector<2xf32>
    %23 = vector.multi_reduction <maximumf>, %22, %cst_22 [1] : vector<2x5xf32> to vector<2xf32>
    %24 = vector.shape_cast %23 : vector<2xf32> to vector<2x1xf32>
    %25 = tpu.iota {dimensions = array<i32: 1>} : vector<2x5xi32>
    %26 = vector.broadcast %24 : vector<2x1xf32> to vector<2x5xf32>
    %27 = arith.cmpf oge, %22, %26 : vector<2x5xf32>
    %c5_i32 = arith.constant 5 : i32
    %28 = vector.broadcast %c5_i32 : i32 to vector<2x5xi32>
    %29 = arith.select %27, %25, %28 : vector<2x5xi1>, vector<2x5xi32>
    %cst_23 = arith.constant dense<2147483647> : vector<2xi32>
    %30 = vector.multi_reduction <minsi>, %29, %cst_23 [1] : vector<2x5xi32> to vector<2xi32>
    %31 = vector.shape_cast %30 : vector<2xi32> to vector<2x1xi32>
    %32 = vector.broadcast %31 : vector<2x1xi32> to vector<2x5xi32>
    %33 = arith.cmpi eq, %25, %32 : vector<2x5xi32>
    %34 = arith.extui %33 : vector<2x5xi1> to vector<2x5xi32>
    %35 = arith.sitofp %34 : vector<2x5xi32> to vector<2x5xf32>
    %c0_24 = arith.constant 0 : index
    %c0_25 = arith.constant 0 : index
    %36 = vector.load %arg10[%c0_24, %c0_25] : memref<2x5xf32, #tpu.memory_space<vmem>>, vector<2x5xf32>
    tpu.vector_store %arg10[%c0_24, %c0_25], %35 {strides = array<i32>} : memref<2x5xf32, #tpu.memory_space<vmem>>, vector<2x5xf32>,
    %c0_26 = arith.constant 0 : index
    %c0_27 = arith.constant 0 : index
    %37 = vector.load %arg9[%c0_26, %c0_27] : memref<2x6xf32, #tpu.memory_space<vmem>>, vector<2x6xf32>
    %38 = arith.addf %20, %37 : vector<2x6xf32>
    %cst_28 = arith.constant dense<0xFF800000> : vector<2xf32>
    %39 = vector.multi_reduction <maximumf>, %38, %cst_28 [1] : vector<2x6xf32> to vector<2xf32>
    %40 = vector.shape_cast %39 : vector<2xf32> to vector<2x1xf32>
    %41 = tpu.iota {dimensions = array<i32: 1>} : vector<2x6xi32>
    %42 = vector.broadcast %40 : vector<2x1xf32> to vector<2x6xf32>
    %43 = arith.cmpf oge, %38, %42 : vector<2x6xf32>
    %c6_i32 = arith.constant 6 : i32
    %44 = vector.broadcast %c6_i32 : i32 to vector<2x6xi32>
    %45 = arith.select %43, %41, %44 : vector<2x6xi1>, vector<2x6xi32>
    %cst_29 = arith.constant dense<2147483647> : vector<2xi32>
    %46 = vector.multi_reduction <minsi>, %45, %cst_29 [1] : vector<2x6xi32> to vector<2xi32>
    %47 = vector.shape_cast %46 : vector<2xi32> to vector<2x1xi32>
    %48 = vector.broadcast %47 : vector<2x1xi32> to vector<2x6xi32>
    %49 = arith.cmpi eq, %41, %48 : vector<2x6xi32>
    %50 = arith.extui %49 : vector<2x6xi1> to vector<2x6xi32>
    %51 = arith.sitofp %50 : vector<2x6xi32> to vector<2x6xf32>
    %c0_30 = arith.constant 0 : index
    %c0_31 = arith.constant 0 : index
    %52 = vector.load %arg11[%c0_30, %c0_31] : memref<2x6xf32, #tpu.memory_space<vmem>>, vector<2x6xf32>
    tpu.vector_store %arg11[%c0_30, %c0_31], %51 {strides = array<i32>} : memref<2x6xf32, #tpu.memory_space<vmem>>, vector<2x6xf32>,
    return
  }
  func.func @transform_0(%arg0: i32) -> (i32, i32, i32) {
    %c0_i32 = arith.constant 0 : i32
    %c0_i32_0 = arith.constant 0 : i32
    %c0_i32_1 = arith.constant 0 : i32
    return %arg0, %c0_i32, %c0_i32_0 : i32, i32, i32
  }
  func.func @transform_1(%arg0: i32) -> (i32, i32, i32) {
    %c0_i32 = arith.constant 0 : i32
    %c0_i32_0 = arith.constant 0 : i32
    %c0_i32_1 = arith.constant 0 : i32
    return %arg0, %c0_i32, %c0_i32_0 : i32, i32, i32
  }
  func.func @transform_2(%arg0: i32) -> (i32, i32) {
    %c0_i32 = arith.constant 0 : i32
    %c0_i32_0 = arith.constant 0 : i32
    %c0_i32_1 = arith.constant 0 : i32
    return %c0_i32, %c0_i32_0 : i32, i32
  }
  func.func @transform_3(%arg0: i32) -> (i32, i32) {
    %c0_i32 = arith.constant 0 : i32
    %c0_i32_0 = arith.constant 0 : i32
    %c0_i32_1 = arith.constant 0 : i32
    return %c0_i32, %c0_i32_0 : i32, i32
  }
  func.func @transform_4(%arg0: i32) -> (i32, i32) {
    %c0_i32 = arith.constant 0 : i32
    %c0_i32_0 = arith.constant 0 : i32
    %c0_i32_1 = arith.constant 0 : i32
    return %c0_i32, %c0_i32_0 : i32, i32
  }
  func.func @transform_5(%arg0: i32) -> (i32, i32) {
    %c0_i32 = arith.constant 0 : i32
    %c0_i32_0 = arith.constant 0 : i32
    %c0_i32_1 = arith.constant 0 : i32
    return %c0_i32, %c0_i32_0 : i32, i32
  }
  func.func @transform_6(%arg0: i32) -> (i32, i32) {
    %c0_i32 = arith.constant 0 : i32
    %c0_i32_0 = arith.constant 0 : i32
    %c0_i32_1 = arith.constant 0 : i32
    return %c0_i32, %c0_i32_0 : i32, i32
  }
  func.func @transform_7(%arg0: i32) -> (i32, i32) {
    %c0_i32 = arith.constant 0 : i32
    %c0_i32_0 = arith.constant 0 : i32
    return %arg0, %c0_i32 : i32, i32
  }
  func.func @transform_8(%arg0: i32) -> (i32, i32) {
    %c0_i32 = arith.constant 0 : i32
    %c0_i32_0 = arith.constant 0 : i32
    return %arg0, %c0_i32 : i32, i32
  }
  func.func @transform_9(%arg0: i32) -> (i32, i32) {
    %c0_i32 = arith.constant 0 : i32
    %c0_i32_0 = arith.constant 0 : i32
    return %arg0, %c0_i32 : i32, i32
  }
  func.func @transform_10(%arg0: i32) -> (i32, i32) {
    %c0_i32 = arith.constant 0 : i32
    %c0_i32_0 = arith.constant 0 : i32
    return %arg0, %c0_i32 : i32, i32
  }
}

module attributes {stable_mosaic.version = 11 : i64} {
  func.func @_word_coatt_feat_kernel(%arg0: i32, %arg1: memref<2x7x32xf32, #tpu.memory_space<vmem>>, %arg2: memref<2x7x32xf32, #tpu.memory_space<vmem>>, %arg3: memref<32x32xf32, #tpu.memory_space<vmem>>, %arg4: memref<1x32xf32, #tpu.memory_space<vmem>>, %arg5: memref<32x32xf32, #tpu.memory_space<vmem>>, %arg6: memref<1x32xf32, #tpu.memory_space<vmem>>, %arg7: memref<32x32xf32, #tpu.memory_space<vmem>>, %arg8: memref<2x32xf32, #tpu.memory_space<vmem>>, %arg9: memref<2x32xf32, #tpu.memory_space<vmem>>) attributes {dimension_semantics = [#tpu.dimension_semantics<parallel>], iteration_bounds = array<i64: 1>, scalar_prefetch = 0 : i64, scratch_operands = 0 : i64, tpu.core_type = #tpu.core_type<tc>, window_params = [{transform_indices = @transform_0, window_bounds = array<i64: 2, 7, 32>}, {transform_indices = @transform_1, window_bounds = array<i64: 2, 7, 32>}, {pipeline_mode = #tpu.pipeline_mode<synchronous>, transform_indices = @transform_2, window_bounds = array<i64: 32, 32>}, {pipeline_mode = #tpu.pipeline_mode<synchronous>, transform_indices = @transform_3, window_bounds = array<i64: 1, 32>}, {pipeline_mode = #tpu.pipeline_mode<synchronous>, transform_indices = @transform_4, window_bounds = array<i64: 32, 32>}, {pipeline_mode = #tpu.pipeline_mode<synchronous>, transform_indices = @transform_5, window_bounds = array<i64: 1, 32>}, {pipeline_mode = #tpu.pipeline_mode<synchronous>, transform_indices = @transform_6, window_bounds = array<i64: 32, 32>}, {transform_indices = @transform_7, window_bounds = array<i64: 2, 32>}, {transform_indices = @transform_8, window_bounds = array<i64: 2, 32>}]} {
    %c0 = arith.constant 0 : index
    %c0_0 = arith.constant 0 : index
    %c0_1 = arith.constant 0 : index
    %0 = vector.load %arg1[%c0, %c0_0, %c0_1] : memref<2x7x32xf32, #tpu.memory_space<vmem>>, vector<2x7x32xf32>
    %1 = vector.shape_cast %0 : vector<2x7x32xf32> to vector<14x32xf32>
    %c0_2 = arith.constant 0 : index
    %c0_3 = arith.constant 0 : index
    %2 = vector.load %arg3[%c0_2, %c0_3] : memref<32x32xf32, #tpu.memory_space<vmem>>, vector<32x32xf32>
    %cst = arith.constant dense<0.000000e+00> : vector<14x32xf32>
    %3 = tpu.matmul %1, %2, %cst {dimension_numbers = #tpu.dot_dimension_numbers<[1], [1], [0], [0], [0, 0, 1, 0], [], []>} : vector<14x32xf32>, vector<32x32xf32>, vector<14x32xf32> -> vector<14x32xf32>
    %c0_4 = arith.constant 0 : index
    %c0_5 = arith.constant 0 : index
    %4 = vector.load %arg4[%c0_4, %c0_5] : memref<1x32xf32, #tpu.memory_space<vmem>>, vector<1x32xf32>
    %5 = vector.broadcast %4 : vector<1x32xf32> to vector<14x32xf32>
    %6 = arith.addf %3, %5 : vector<14x32xf32>
    %c0_6 = arith.constant 0 : index
    %c0_7 = arith.constant 0 : index
    %c0_8 = arith.constant 0 : index
    %7 = vector.load %arg2[%c0_6, %c0_7, %c0_8] : memref<2x7x32xf32, #tpu.memory_space<vmem>>, vector<2x7x32xf32>
    %8 = vector.shape_cast %7 : vector<2x7x32xf32> to vector<14x32xf32>
    %c0_9 = arith.constant 0 : index
    %c0_10 = arith.constant 0 : index
    %9 = vector.load %arg5[%c0_9, %c0_10] : memref<32x32xf32, #tpu.memory_space<vmem>>, vector<32x32xf32>
    %cst_11 = arith.constant dense<0.000000e+00> : vector<14x32xf32>
    %10 = tpu.matmul %8, %9, %cst_11 {dimension_numbers = #tpu.dot_dimension_numbers<[1], [1], [0], [0], [0, 0, 1, 0], [], []>} : vector<14x32xf32>, vector<32x32xf32>, vector<14x32xf32> -> vector<14x32xf32>
    %c0_12 = arith.constant 0 : index
    %c0_13 = arith.constant 0 : index
    %11 = vector.load %arg6[%c0_12, %c0_13] : memref<1x32xf32, #tpu.memory_space<vmem>>, vector<1x32xf32>
    %12 = vector.broadcast %11 : vector<1x32xf32> to vector<14x32xf32>
    %13 = arith.addf %10, %12 : vector<14x32xf32>
    %c0_14 = arith.constant 0 : index
    %c0_15 = arith.constant 0 : index
    %14 = vector.load %arg7[%c0_14, %c0_15] : memref<32x32xf32, #tpu.memory_space<vmem>>, vector<32x32xf32>
    %cst_16 = arith.constant dense<0.000000e+00> : vector<14x32xf32>
    %15 = tpu.matmul %6, %14, %cst_16 {dimension_numbers = #tpu.dot_dimension_numbers<[1], [0], [0], [1], [0, 0, 1, 1], [], []>} : vector<14x32xf32>, vector<32x32xf32>, vector<14x32xf32> -> vector<14x32xf32>
    %16 = vector.shape_cast %15 : vector<14x32xf32> to vector<2x7x32xf32>
    %17 = vector.shape_cast %13 : vector<14x32xf32> to vector<2x7x32xf32>
    "tpu.trace_start"() <{level = 10 : i32, message = "bld,bkd->blk"}> : () -> ()
    %cst_17 = arith.constant dense<0.000000e+00> : vector<2x7x7xf32>
    %18 = tpu.matmul %16, %17, %cst_17 {dimension_numbers = #tpu.dot_dimension_numbers<[2], [2], [1], [1], [0, 0, 0, 1, 1, 1], [0], [0]>} : vector<2x7x32xf32>, vector<2x7x32xf32>, vector<2x7x7xf32> -> vector<2x7x7xf32>
    "tpu.trace_stop"() : () -> ()
    %cst_18 = arith.constant dense<0.000000e+00> : vector<2x7xf32>
    %19 = vector.multi_reduction <add>, %18, %cst_18 [2] : vector<2x7x7xf32> to vector<2x7xf32>
    %cst_19 = arith.constant 7.000000e+00 : f32
    %20 = vector.broadcast %cst_19 : f32 to vector<2x7xf32>
    %21 = arith.divf %19, %20 : vector<2x7xf32>
    %cst_20 = arith.constant dense<0xFF800000> : vector<2xf32>
    %22 = vector.multi_reduction <maximumf>, %21, %cst_20 [1] : vector<2x7xf32> to vector<2xf32>
    %23 = vector.shape_cast %22 : vector<2xf32> to vector<2x1xf32>
    %24 = vector.broadcast %23 : vector<2x1xf32> to vector<2x7xf32>
    %25 = arith.subf %21, %24 : vector<2x7xf32>
    %26 = math.exp %25 : vector<2x7xf32>
    %cst_21 = arith.constant dense<0.000000e+00> : vector<2xf32>
    %27 = vector.multi_reduction <add>, %26, %cst_21 [1] : vector<2x7xf32> to vector<2xf32>
    %28 = vector.shape_cast %27 : vector<2xf32> to vector<2x1xf32>
    %29 = vector.broadcast %28 : vector<2x1xf32> to vector<2x7xf32>
    %30 = arith.divf %26, %29 : vector<2x7xf32>
    %cst_22 = arith.constant dense<0.000000e+00> : vector<2x7xf32>
    %31 = vector.multi_reduction <add>, %18, %cst_22 [1] : vector<2x7x7xf32> to vector<2x7xf32>
    %cst_23 = arith.constant 7.000000e+00 : f32
    %32 = vector.broadcast %cst_23 : f32 to vector<2x7xf32>
    %33 = arith.divf %31, %32 : vector<2x7xf32>
    %cst_24 = arith.constant dense<0xFF800000> : vector<2xf32>
    %34 = vector.multi_reduction <maximumf>, %33, %cst_24 [1] : vector<2x7xf32> to vector<2xf32>
    %35 = vector.shape_cast %34 : vector<2xf32> to vector<2x1xf32>
    %36 = vector.broadcast %35 : vector<2x1xf32> to vector<2x7xf32>
    %37 = arith.subf %33, %36 : vector<2x7xf32>
    %38 = math.exp %37 : vector<2x7xf32>
    %cst_25 = arith.constant dense<0.000000e+00> : vector<2xf32>
    %39 = vector.multi_reduction <add>, %38, %cst_25 [1] : vector<2x7xf32> to vector<2xf32>
    %40 = vector.shape_cast %39 : vector<2xf32> to vector<2x1xf32>
    %41 = vector.broadcast %40 : vector<2x1xf32> to vector<2x7xf32>
    %42 = arith.divf %38, %41 : vector<2x7xf32>
    %43 = vector.shape_cast %30 : vector<2x7xf32> to vector<2x7x1xf32>
    %44 = vector.broadcast %43 : vector<2x7x1xf32> to vector<2x7x32xf32>
    %45 = arith.mulf %0, %44 : vector<2x7x32xf32>
    %cst_26 = arith.constant dense<0.000000e+00> : vector<2x32xf32>
    %46 = vector.multi_reduction <add>, %45, %cst_26 [1] : vector<2x7x32xf32> to vector<2x32xf32>
    %c0_27 = arith.constant 0 : index
    %c0_28 = arith.constant 0 : index
    %47 = vector.load %arg8[%c0_27, %c0_28] : memref<2x32xf32, #tpu.memory_space<vmem>>, vector<2x32xf32>
    tpu.vector_store %arg8[%c0_27, %c0_28], %46 {strides = array<i32>} : memref<2x32xf32, #tpu.memory_space<vmem>>, vector<2x32xf32>,
    %48 = vector.shape_cast %42 : vector<2x7xf32> to vector<2x7x1xf32>
    %49 = vector.broadcast %48 : vector<2x7x1xf32> to vector<2x7x32xf32>
    %50 = arith.mulf %0, %49 : vector<2x7x32xf32>
    %cst_29 = arith.constant dense<0.000000e+00> : vector<2x32xf32>
    %51 = vector.multi_reduction <add>, %50, %cst_29 [1] : vector<2x7x32xf32> to vector<2x32xf32>
    %c0_30 = arith.constant 0 : index
    %c0_31 = arith.constant 0 : index
    %52 = vector.load %arg9[%c0_30, %c0_31] : memref<2x32xf32, #tpu.memory_space<vmem>>, vector<2x32xf32>
    tpu.vector_store %arg9[%c0_30, %c0_31], %51 {strides = array<i32>} : memref<2x32xf32, #tpu.memory_space<vmem>>, vector<2x32xf32>,
    return
  }
  func.func @transform_0(%arg0: i32) -> (i32, i32, i32) {
    %c0_i32 = arith.constant 0 : i32
    %c0_i32_0 = arith.constant 0 : i32
    %c0_i32_1 = arith.constant 0 : i32
    return %arg0, %c0_i32, %c0_i32_0 : i32, i32, i32
  }
  func.func @transform_1(%arg0: i32) -> (i32, i32, i32) {
    %c0_i32 = arith.constant 0 : i32
    %c0_i32_0 = arith.constant 0 : i32
    %c0_i32_1 = arith.constant 0 : i32
    return %arg0, %c0_i32, %c0_i32_0 : i32, i32, i32
  }
  func.func @transform_2(%arg0: i32) -> (i32, i32) {
    %c0_i32 = arith.constant 0 : i32
    %c0_i32_0 = arith.constant 0 : i32
    %c0_i32_1 = arith.constant 0 : i32
    return %c0_i32, %c0_i32_0 : i32, i32
  }
  func.func @transform_3(%arg0: i32) -> (i32, i32) {
    %c0_i32 = arith.constant 0 : i32
    %c0_i32_0 = arith.constant 0 : i32
    %c0_i32_1 = arith.constant 0 : i32
    return %c0_i32, %c0_i32_0 : i32, i32
  }
  func.func @transform_4(%arg0: i32) -> (i32, i32) {
    %c0_i32 = arith.constant 0 : i32
    %c0_i32_0 = arith.constant 0 : i32
    %c0_i32_1 = arith.constant 0 : i32
    return %c0_i32, %c0_i32_0 : i32, i32
  }
  func.func @transform_5(%arg0: i32) -> (i32, i32) {
    %c0_i32 = arith.constant 0 : i32
    %c0_i32_0 = arith.constant 0 : i32
    %c0_i32_1 = arith.constant 0 : i32
    return %c0_i32, %c0_i32_0 : i32, i32
  }
  func.func @transform_6(%arg0: i32) -> (i32, i32) {
    %c0_i32 = arith.constant 0 : i32
    %c0_i32_0 = arith.constant 0 : i32
    %c0_i32_1 = arith.constant 0 : i32
    return %c0_i32, %c0_i32_0 : i32, i32
  }
  func.func @transform_7(%arg0: i32) -> (i32, i32) {
    %c0_i32 = arith.constant 0 : i32
    %c0_i32_0 = arith.constant 0 : i32
    return %arg0, %c0_i32 : i32, i32
  }
  func.func @transform_8(%arg0: i32) -> (i32, i32) {
    %c0_i32 = arith.constant 0 : i32
    %c0_i32_0 = arith.constant 0 : i32
    return %arg0, %c0_i32 : i32, i32
  }
}

module attributes {stable_mosaic.version = 11 : i64} {
  func.func @_fc_head_kernel(%arg0: i32, %arg1: memref<2x96xf32, #tpu.memory_space<vmem>>, %arg2: memref<32x96xf32, #tpu.memory_space<vmem>>, %arg3: memref<1x32xf32, #tpu.memory_space<vmem>>, %arg4: memref<8x32xf32, #tpu.memory_space<vmem>>, %arg5: memref<1x8xf32, #tpu.memory_space<vmem>>, %arg6: memref<2x8xf32, #tpu.memory_space<vmem>>) attributes {dimension_semantics = [#tpu.dimension_semantics<parallel>], iteration_bounds = array<i64: 1>, scalar_prefetch = 0 : i64, scratch_operands = 0 : i64, tpu.core_type = #tpu.core_type<tc>, window_params = [{transform_indices = @transform_0, window_bounds = array<i64: 2, 96>}, {pipeline_mode = #tpu.pipeline_mode<synchronous>, transform_indices = @transform_1, window_bounds = array<i64: 32, 96>}, {pipeline_mode = #tpu.pipeline_mode<synchronous>, transform_indices = @transform_2, window_bounds = array<i64: 1, 32>}, {pipeline_mode = #tpu.pipeline_mode<synchronous>, transform_indices = @transform_3, window_bounds = array<i64: 8, 32>}, {pipeline_mode = #tpu.pipeline_mode<synchronous>, transform_indices = @transform_4, window_bounds = array<i64: 1, 8>}, {transform_indices = @transform_5, window_bounds = array<i64: 2, 8>}]} {
    %c0 = arith.constant 0 : index
    %c0_0 = arith.constant 0 : index
    %0 = vector.load %arg1[%c0, %c0_0] : memref<2x96xf32, #tpu.memory_space<vmem>>, vector<2x96xf32>
    %c0_1 = arith.constant 0 : index
    %c0_2 = arith.constant 0 : index
    %1 = vector.load %arg2[%c0_1, %c0_2] : memref<32x96xf32, #tpu.memory_space<vmem>>, vector<32x96xf32>
    %cst = arith.constant dense<0.000000e+00> : vector<2x32xf32>
    %2 = tpu.matmul %0, %1, %cst {dimension_numbers = #tpu.dot_dimension_numbers<[1], [1], [0], [0], [0, 0, 1, 0], [], []>} : vector<2x96xf32>, vector<32x96xf32>, vector<2x32xf32> -> vector<2x32xf32>
    %c0_3 = arith.constant 0 : index
    %c0_4 = arith.constant 0 : index
    %3 = vector.load %arg3[%c0_3, %c0_4] : memref<1x32xf32, #tpu.memory_space<vmem>>, vector<1x32xf32>
    %4 = vector.broadcast %3 : vector<1x32xf32> to vector<2x32xf32>
    %5 = arith.addf %2, %4 : vector<2x32xf32>
    %cst_5 = arith.constant 0.000000e+00 : f32
    %6 = vector.broadcast %cst_5 : f32 to vector<2x32xf32>
    %7 = arith.maximumf %5, %6 : vector<2x32xf32>
    %c0_6 = arith.constant 0 : index
    %c0_7 = arith.constant 0 : index
    %8 = vector.load %arg4[%c0_6, %c0_7] : memref<8x32xf32, #tpu.memory_space<vmem>>, vector<8x32xf32>
    %cst_8 = arith.constant dense<0.000000e+00> : vector<2x8xf32>
    %9 = tpu.matmul %7, %8, %cst_8 {dimension_numbers = #tpu.dot_dimension_numbers<[1], [1], [0], [0], [0, 0, 1, 0], [], []>} : vector<2x32xf32>, vector<8x32xf32>, vector<2x8xf32> -> vector<2x8xf32>
    %c0_9 = arith.constant 0 : index
    %c0_10 = arith.constant 0 : index
    %10 = vector.load %arg5[%c0_9, %c0_10] : memref<1x8xf32, #tpu.memory_space<vmem>>, vector<1x8xf32>
    %11 = vector.broadcast %10 : vector<1x8xf32> to vector<2x8xf32>
    %12 = arith.addf %9, %11 : vector<2x8xf32>
    %c0_11 = arith.constant 0 : index
    %c0_12 = arith.constant 0 : index
    %13 = vector.load %arg6[%c0_11, %c0_12] : memref<2x8xf32, #tpu.memory_space<vmem>>, vector<2x8xf32>
    tpu.vector_store %arg6[%c0_11, %c0_12], %12 {strides = array<i32>} : memref<2x8xf32, #tpu.memory_space<vmem>>, vector<2x8xf32>,
    return
  }
  func.func @transform_0(%arg0: i32) -> (i32, i32) {
    %c0_i32 = arith.constant 0 : i32
    %c0_i32_0 = arith.constant 0 : i32
    return %arg0, %c0_i32 : i32, i32
  }
  func.func @transform_1(%arg0: i32) -> (i32, i32) {
    %c0_i32 = arith.constant 0 : i32
    %c0_i32_0 = arith.constant 0 : i32
    %c0_i32_1 = arith.constant 0 : i32
    return %c0_i32, %c0_i32_0 : i32, i32
  }
  func.func @transform_2(%arg0: i32) -> (i32, i32) {
    %c0_i32 = arith.constant 0 : i32
    %c0_i32_0 = arith.constant 0 : i32
    %c0_i32_1 = arith.constant 0 : i32
    return %c0_i32, %c0_i32_0 : i32, i32
  }
  func.func @transform_3(%arg0: i32) -> (i32, i32) {
    %c0_i32 = arith.constant 0 : i32
    %c0_i32_0 = arith.constant 0 : i32
    %c0_i32_1 = arith.constant 0 : i32
    return %c0_i32, %c0_i32_0 : i32, i32
  }
  func.func @transform_4(%arg0: i32) -> (i32, i32) {
    %c0_i32 = arith.constant 0 : i32
    %c0_i32_0 = arith.constant 0 : i32
    %c0_i32_1 = arith.constant 0 : i32
    return %c0_i32, %c0_i32_0 : i32, i32
  }
  func.func @transform_5(%arg0: i32) -> (i32, i32) {
    %c0_i32 = arith.constant 0 : i32
    %c0_i32_0 = arith.constant 0 : i32
    return %arg0, %c0_i32 : i32, i32
  }
}

</mosaic_0001>

<llo_original>
// kernel: mpcn_forward.10
$region0: #{mpcn_forward.10}
  #allocation0 [shape = 'u32[]', space=smem, size = 0x4, offset = 0x4, fixed_abs, tag = 'smem constant byte address 0x4 - core index']
  #allocation1 [shape = 'u32[144,128]{1,0:T(1,128)}', space=vmem, size = 0x12000, scoped, tag = 'internal scratch']
  %s0 = inlined_call_operand.vmem [shape: f32[2,5,7,32], index: 0, kind: input, shape index: {}]
  %s1 = inlined_call_operand.vmem [shape: f32[32,32], index: 1, kind: input, shape index: {}]
  %s2 = inlined_call_operand.vmem [shape: f32[1,32], index: 2, kind: input, shape index: {}]
  %s3 = inlined_call_operand.vmem [shape: f32[32,32], index: 3, kind: input, shape index: {}]
  %s4 = inlined_call_operand.vmem [shape: f32[1,32], index: 4, kind: input, shape index: {}]
  %s5 = inlined_call_operand.vmem [shape: f32[2,5,32], index: 5, kind: output, shape index: {}]
  %s6 = sld [smem:[#allocation0]]
  $region30: #{mpcn_forward.10} parent=0
    _
  %s8 = ssub.s32 1, %s6
  %s9 = scalar_select 0, %s8, %s6
  // Predicated region
  $region2: #{mpcn_forward.10} parent=0 // pred_check
    _
  $region3: #{mpcn_forward.10} parent=0 // pred_check_branch
    %11 = sbr.rel (0) target = $region5
  $region4: #{mpcn_forward.10} parent=0 // pred_region
    _
  $region5: #{mpcn_forward.10} parent=0 // pred_fallthru
    _
  // Predicated region
  $region6: #{mpcn_forward.10} parent=0 // pred_check
    _
  $region7: #{mpcn_forward.10} parent=0 // pred_check_branch
    %13 = sbr.rel (0) target = $region9
  $region8: #{mpcn_forward.10} parent=0 // pred_region
    _
  $region9: #{mpcn_forward.10} parent=0 // pred_fallthru
    _
  // Predicated region
  $region10: #{mpcn_forward.10} parent=0 // pred_check
    _
  $region11: #{mpcn_forward.10} parent=0 // pred_check_branch
    %15 = sbr.rel (0) target = $region13
  $region12: #{mpcn_forward.10} parent=0 // pred_region
    _
  $region13: #{mpcn_forward.10} parent=0 // pred_fallthru
    _
  // Predicated region
  $region14: #{mpcn_forward.10} parent=0 // pred_check
    _
  $region15: #{mpcn_forward.10} parent=0 // pred_check_branch
    %17 = sbr.rel (0) target = $region17
  $region16: #{mpcn_forward.10} parent=0 // pred_region
    _
  $region17: #{mpcn_forward.10} parent=0 // pred_fallthru
    _
  // Predicated region
  $region18: #{mpcn_forward.10} parent=0 // pred_check
    _
  $region19: #{mpcn_forward.10} parent=0 // pred_check_branch
    %19 = sbr.rel (0) target = $region21
  $region20: #{mpcn_forward.10} parent=0 // pred_region
    _
  $region21: #{mpcn_forward.10} parent=0 // pred_fallthru
    _
  %v20 = vld [vmem:[%s0] sm:$0x7f]
  %v21 = vld [vmem:[%s0 + $0x8] sm:$0x7f]
  %v22 = vld [vmem:[%s0 + $0x10] sm:$0x7f]
  %v23 = vld [vmem:[%s0 + $0x18] sm:$0x7f]
  %v24 = vld [vmem:[%s0 + $0x20] sm:$0x7f]
  %v25 = vld [vmem:[%s0 + $0x28] sm:$0x7f]
  %v26 = vld [vmem:[%s0 + $0x30] sm:$0x7f]
  %v27 = vld [vmem:[%s0 + $0x38] sm:$0x7f]
  %v28 = vld [vmem:[%s0 + $0x40] sm:$0x7f]
  %v29 = vld [vmem:[%s0 + $0x48] sm:$0x7f]
  %vm30 = vcmask 260096
  %v31 = vsel %vm30, %v20, 0.0
  %v32 = vrot.slane %v31, 4
  %v33 = vadd.f32 %v31, %v32
  %v34 = vrot.slane %v33, 2
  %v35 = vadd.f32 %v33, %v34
  %v36 = vrot.slane %v35, 1
  %v37 = vadd.f32 %v35, %v36
  %v38 = vsel %vm30, %v21, 0.0
  %v39 = vrot.slane %v38, 4
  %v40 = vadd.f32 %v38, %v39
  %v41 = vrot.slane %v40, 2
  %v42 = vadd.f32 %v40, %v41
  %v43 = vrot.slane %v42, 1
  %v44 = vadd.f32 %v42, %v43
  %v45 = vsel %vm30, %v22, 0.0
  %v46 = vrot.slane %v45, 4
  %v47 = vadd.f32 %v45, %v46
  %v48 = vrot.slane %v47, 2
  %v49 = vadd.f32 %v47, %v48
  %v50 = vrot.slane %v49, 1
  %v51 = vadd.f32 %v49, %v50
  %v52 = vsel %vm30, %v23, 0.0
  %v53 = vrot.slane %v52, 4
  %v54 = vadd.f32 %v52, %v53
  %v55 = vrot.slane %v54, 2
  %v56 = vadd.f32 %v54, %v55
  %v57 = vrot.slane %v56, 1
  %v58 = vadd.f32 %v56, %v57
  %v59 = vsel %vm30, %v24, 0.0
  %v60 = vrot.slane %v59, 4
  %v61 = vadd.f32 %v59, %v60
  %v62 = vrot.slane %v61, 2
  %v63 = vadd.f32 %v61, %v62
  %v64 = vrot.slane %v63, 1
  %v65 = vadd.f32 %v63, %v64
  %v66 = vsel %vm30, %v25, 0.0
  %v67 = vrot.slane %v66, 4
  %v68 = vadd.f32 %v66, %v67
  %v69 = vrot.slane %v68, 2
  %v70 = vadd.f32 %v68, %v69
  %v71 = vrot.slane %v70, 1
  %v72 = vadd.f32 %v70, %v71
  %v73 = vsel %vm30, %v26, 0.0
  %v74 = vrot.slane %v73, 4
  %v75 = vadd.f32 %v73, %v74
  %v76 = vrot.slane %v75, 2
  %v77 = vadd.f32 %v75, %v76
  %v78 = vrot.slane %v77, 1
  %v79 = vadd.f32 %v77, %v78
  %v80 = vsel %vm30, %v27, 0.0
  %v81 = vrot.slane %v80, 4
  %v82 = vadd.f32 %v80, %v81
  %v83 = vrot.slane %v82, 2
  %v84 = vadd.f32 %v82, %v83
  %v85 = vrot.slane %v84, 1
  %v86 = vadd.f32 %v84, %v85
  %v87 = vsel %vm30, %v28, 0.0
  %v88 = vrot.slane %v87, 4
  %v89 = vadd.f32 %v87, %v88
  %v90 = vrot.slane %v89, 2
  %v91 = vadd.f32 %v89, %v90
  %v92 = vrot.slane %v91, 1
  %v93 = vadd.f32 %v91, %v92
  %v94 = vsel %vm30, %v29, 0.0
  %v95 = vrot.slane %v94, 4
  %v96 = vadd.f32 %v94, %v95
  %v97 = vrot.slane %v96, 2
  %v98 = vadd.f32 %v96, %v97
  %v99 = vrot.slane %v98, 1
  %v100 = vadd.f32 %v98, %v99
  %v101 = vld [vmem:[%s1] sm:$0xff]
  %v102 = vld [vmem:[%s1 + $0x8] sm:$0xff]
  %v103 = vld [vmem:[%s1 + $0x10] sm:$0xff]
  %v104 = vld [vmem:[%s1 + $0x18] sm:$0xff]
  %v105 = vld [vmem:[%s2] sm:$0x1]
  %v107 = vlaneseq
  %v108 = vshrl.u32 %v107, 7
  %v109 = vsub.s32 0, %v108
  %v110 = vrot.slane %v105, %v109
  %vm122 = vcmask 1041409
  %v123 = vsel %vm122, %v44, %v37
  %vm124 = vcmask 1042434
  %v125 = vsel %vm124, %v51, %v123
  %vm126 = vcmask 1043459
  %v127 = vsel %vm126, %v58, %v125
  %vm128 = vcmask 1044484
  %v129 = vsel %vm128, %v65, %v127
  %vm130 = vcmask 1045509
  %v131 = vsel %vm130, %v72, %v129
  %vm132 = vcmask 1046534
  %v133 = vsel %vm132, %v79, %v131
  %vm134 = vcmask 1047559
  %v135 = vsel %vm134, %v86, %v133
  %v136 = vsel %vm122, %v100, %v93
  %vm137 = vcmask 261120
  %v138 = vsel %vm137, %v135, 0
  %v140 = vsel %vm137, %v136, 0
  %v143 = vsel %vm137, %v101, 0
  %v146 = vsel %vm137, %v102, 0
  %v149 = vsel %vm137, %v103, 0
  %v152 = vsel %vm137, %v104, 0
  %154 = vmatprep.subr.mxu0 0.0
  %155 = vmatpush1.xpose.msra.mxu0 0.0
  %156 = vmatprep.subr.mxu0 0.0
  %157 = vmatpush1.xpose.msra.mxu0 0.0
  %158 = vmatprep.subr.mxu0 0.0
  %159 = vmatpush1.xpose.msra.mxu0 0.0
  %160 = vmatprep.subr.mxu0 0.0
  %161 = vmatpush1.xpose.msra.mxu0 0.0
  %162 = vmatprep.subr.mxu0 0.0
  %163 = vmatpush1.xpose.msra.mxu0 0.0
  %164 = vmatprep.subr.mxu0 0.0
  %165 = vmatpush1.xpose.msra.mxu0 0.0
  %166 = vmatprep.subr.mxu0 0.0
  %167 = vmatpush1.xpose.msra.mxu0 0.0
  %168 = vmatprep.subr.mxu0 0.0
  %169 = vmatpush1.xpose.msra.mxu0 0.0
  %170 = vmatprep.subr.mxu0 0.0
  %171 = vmatpush1.xpose.msra.mxu0 0.0
  %172 = vmatprep.subr.mxu0 0.0
  %173 = vmatpush1.xpose.msra.mxu0 0.0
  %174 = vmatprep.subr.mxu0 0.0
  %175 = vmatpush1.xpose.msra.mxu0 0.0
  %176 = vmatprep.subr.mxu0 0.0
  %177 = vmatpush1.xpose.msra.mxu0 0.0
  %178 = vmatprep.subr.mxu0 0.0
  %179 = vmatpush1.xpose.msra.mxu0 %v152
  %180 = vmatprep.subr.mxu0 0.0
  %181 = vmatpush1.xpose.msra.mxu0 %v149
  %182 = vmatprep.subr.mxu0 0.0
  %183 = vmatpush1.xpose.msra.mxu0 %v146
  %184 = vmatprep.subr.mxu0 0.0
  %185 = vmatpush1.xpose.msra.mxu0 %v143
  %186 = vmatprep.subr.mxu0 0.0
  %187 = vmatpush2.xpose.msra.mxu0 0.0
  %188 = vmatprep.subr.mxu0 0.0
  %189 = vmatpush2.xpose.msra.mxu0 0.0
  %190 = vmatprep.subr.mxu0 0.0
  %191 = vmatpush2.xpose.msra.mxu0 0.0
  %192 = vmatprep.subr.mxu0 0.0
  %193 = vmatpush2.xpose.msra.mxu0 0.0
  %194 = vmatprep.subr.mxu0 0.0
  %195 = vmatpush2.xpose.msra.mxu0 0.0
  %196 = vmatprep.subr.mxu0 0.0
  %197 = vmatpush2.xpose.msra.mxu0 0.0
  %198 = vmatprep.subr.mxu0 0.0
  %199 = vmatpush2.xpose.msra.mxu0 0.0
  %200 = vmatprep.subr.mxu0 0.0
  %201 = vmatpush2.xpose.msra.mxu0 0.0
  %202 = vmatprep.subr.mxu0 0.0
  %203 = vmatpush2.xpose.msra.mxu0 0.0
  %204 = vmatprep.subr.mxu0 0.0
  %205 = vmatpush2.xpose.msra.mxu0 0.0
  %206 = vmatprep.subr.mxu0 0.0
  %207 = vmatpush2.xpose.msra.mxu0 0.0
  %208 = vmatprep.subr.mxu0 0.0
  %209 = vmatpush2.xpose.msra.mxu0 0.0
  %210 = vmatprep.subr.mxu0 0.0
  %211 = vmatpush2.xpose.msra.mxu0 0.0
  %212 = vmatprep.subr.mxu0 0.0
  %213 = vmatpush2.xpose.msra.mxu0 0.0
  %214 = vmatprep.subr.mxu0 0.0
  %215 = vmatpush2.xpose.msra.mxu0 0.0
  %216 = vmatprep.subr.mxu0 0.0
  %217 = vmatpush2.xpose.msra.mxu0 0.0
  %218 = vmatprep.mubr.f32.mxu0 0.0
  %219 = vmatmul.mubr.f32.gmra.mxu0 %v138
  %v220 = vpop.f32.mrf.mxu0
  %v221 = vadd.f32 %v110, %v220
  %v222 = vpop.f32.mrf.mxu0
  %223 = vmatprep.mubr.f32.mxu0 0.0
  %224 = vmatmul.mubr.f32.gmra.mxu0 %v140
  %v225 = vpop.f32.mrf.mxu0
  %v226 = vadd.f32 %v110, %v225
  %v227 = vpop.f32.mrf.mxu0
  %228 = vdwg.mxu0
  %v229 = vxor.u32 %v221, 2147483648
  %v230 = vxor.u32 %v226, 2147483648
  %v231 = vmul.f32 %v229, 1.442695
  %v232 = vpow.pop %v231
  %v233 = vmul.f32 %v230, 1.442695
  %v234 = vpow.pop %v233
  %v235 = vadd.f32 %v232, 1.0
  %v236 = vadd.f32 %v234, 1.0
  %v237 = vrcp.pop %v235
  %v238 = vmul.f32 1.0, %v237
  %v239 = vrcp.pop %v236
  %v240 = vmul.f32 1.0, %v239
  %v241 = vld [vmem:[%s3] sm:$0xff]
  %v242 = vld [vmem:[%s3 + $0x8] sm:$0xff]
  %v243 = vld [vmem:[%s3 + $0x10] sm:$0xff]
  %v244 = vld [vmem:[%s3 + $0x18] sm:$0xff]
  %v245 = vld [vmem:[%s4] sm:$0x1]
  %v247 = vlaneseq
  %v248 = vshrl.u32 %v247, 7
  %v249 = vsub.s32 0, %v248
  %v250 = vrot.slane %v245, %v249
  %v253 = vsel %vm137, %v241, 0
  %v256 = vsel %vm137, %v242, 0
  %v259 = vsel %vm137, %v243, 0
  %v262 = vsel %vm137, %v244, 0
  %264 = vmatprep.subr.mxu0 0.0
  %265 = vmatpush1.xpose.msra.mxu0 0.0
  %266 = vmatprep.subr.mxu0 0.0
  %267 = vmatpush1.xpose.msra.mxu0 0.0
  %268 = vmatprep.subr.mxu0 0.0
  %269 = vmatpush1.xpose.msra.mxu0 0.0
  %270 = vmatprep.subr.mxu0 0.0
  %271 = vmatpush1.xpose.msra.mxu0 0.0
  %272 = vmatprep.subr.mxu0 0.0
  %273 = vmatpush1.xpose.msra.mxu0 0.0
  %274 = vmatprep.subr.mxu0 0.0
  %275 = vmatpush1.xpose.msra.mxu0 0.0
  %276 = vmatprep.subr.mxu0 0.0
  %277 = vmatpush1.xpose.msra.mxu0 0.0
  %278 = vmatprep.subr.mxu0 0.0
  %279 = vmatpush1.xpose.msra.mxu0 0.0
  %280 = vmatprep.subr.mxu0 0.0
  %281 = vmatpush1.xpose.msra.mxu0 0.0
  %282 = vmatprep.subr.mxu0 0.0
  %283 = vmatpush1.xpose.msra.mxu0 0.0
  %284 = vmatprep.subr.mxu0 0.0
  %285 = vmatpush1.xpose.msra.mxu0 0.0
  %286 = vmatprep.subr.mxu0 0.0
  %287 = vmatpush1.xpose.msra.mxu0 0.0
  %288 = vmatprep.subr.mxu0 0.0
  %289 = vmatpush1.xpose.msra.mxu0 %v262
  %290 = vmatprep.subr.mxu0 0.0
  %291 = vmatpush1.xpose.msra.mxu0 %v259
  %292 = vmatprep.subr.mxu0 0.0
  %293 = vmatpush1.xpose.msra.mxu0 %v256
  %294 = vmatprep.subr.mxu0 0.0
  %295 = vmatpush1.xpose.msra.mxu0 %v253
  %296 = vmatprep.subr.mxu0 0.0
  %297 = vmatpush2.xpose.msra.mxu0 0.0
  %298 = vmatprep.subr.mxu0 0.0
  %299 = vmatpush2.xpose.msra.mxu0 0.0
  %300 = vmatprep.subr.mxu0 0.0
  %301 = vmatpush2.xpose.msra.mxu0 0.0
  %302 = vmatprep.subr.mxu0 0.0
  %303 = vmatpush2.xpose.msra.mxu0 0.0
  %304 = vmatprep.subr.mxu0 0.0
  %305 = vmatpush2.xpose.msra.mxu0 0.0
  %306 = vmatprep.subr.mxu0 0.0
  %307 = vmatpush2.xpose.msra.mxu0 0.0
  %308 = vmatprep.subr.mxu0 0.0
  %309 = vmatpush2.xpose.msra.mxu0 0.0
  %310 = vmatprep.subr.mxu0 0.0
  %311 = vmatpush2.xpose.msra.mxu0 0.0
  %312 = vmatprep.subr.mxu0 0.0
  %313 = vmatpush2.xpose.msra.mxu0 0.0
  %314 = vmatprep.subr.mxu0 0.0
  %315 = vmatpush2.xpose.msra.mxu0 0.0
  %316 = vmatprep.subr.mxu0 0.0
  %317 = vmatpush2.xpose.msra.mxu0 0.0
  %318 = vmatprep.subr.mxu0 0.0
  %319 = vmatpush2.xpose.msra.mxu0 0.0
  %320 = vmatprep.subr.mxu0 0.0
  %321 = vmatpush2.xpose.msra.mxu0 0.0
  %322 = vmatprep.subr.mxu0 0.0
  %323 = vmatpush2.xpose.msra.mxu0 0.0
  %324 = vmatprep.subr.mxu0 0.0
  %325 = vmatpush2.xpose.msra.mxu0 0.0
  %326 = vmatprep.subr.mxu0 0.0
  %327 = vmatpush2.xpose.msra.mxu0 0.0
  %328 = vmatprep.mubr.f32.mxu0 0.0
  %329 = vmatmul.mubr.f32.gmra.mxu0 %v138
  %v330 = vpop.f32.mrf.mxu0
  %v331 = vadd.f32 %v250, %v330
  %v332 = vpop.f32.mrf.mxu0
  %333 = vmatprep.mubr.f32.mxu0 0.0
  %334 = vmatmul.mubr.f32.gmra.mxu0 %v140
  %v335 = vpop.f32.mrf.mxu0
  %v336 = vadd.f32 %v250, %v335
  %v337 = vpop.f32.mrf.mxu0
  %338 = vdwg.mxu0
  %v339 = vtanh.pop %v331
  %v340 = vtanh.pop %v336
  %v341 = vmul.f32 %v238, %v339
  %v342 = vmul.f32 %v240, %v340
  %v345 = vcombine.high %v341, %v341
  %v347 = vunpack.c.l.s4 1966171168
  %v348 = vunpack.c.0.s8 %v347
  %v349 = vlaneseq
  %v350 = vshrl.u32 %v349, 7
  %v351 = vsub.s32 %v348, %v350
  %v352 = vrot.slane %v341, %v351
  %v354 = vunpack.c.l.s4 1966171168
  %v355 = vunpack.c.0.s8 %v354
  %v356 = vlaneseq
  %v357 = vshrl.u32 %v356, 7
  %v358 = vsub.s32 %v355, %v357
  %v359 = vrot.slane %v345, %v358
  %v360 = vcombine.high %v352, %v352
  %v361 = vcombine.high %v359, %v359
  %v363 = vunpack.c.l.s4 1966171168
  %v364 = vunpack.c.0.s8 %v363
  %v365 = vlaneseq
  %v366 = vshrl.u32 %v365, 7
  %v367 = vsub.s32 %v364, %v366
  %v368 = vrot.slane %v352, %v367
  %v370 = vunpack.c.l.s4 1966171168
  %v371 = vunpack.c.0.s8 %v370
  %v372 = vlaneseq
  %v373 = vshrl.u32 %v372, 7
  %v374 = vsub.s32 %v371, %v373
  %v375 = vrot.slane %v359, %v374
  %v377 = vunpack.c.l.s4 1966171168
  %v378 = vunpack.c.0.s8 %v377
  %v379 = vlaneseq
  %v380 = vshrl.u32 %v379, 7
  %v381 = vsub.s32 %v378, %v380
  %v382 = vrot.slane %v360, %v381
  %v384 = vunpack.c.l.s4 1966171168
  %v385 = vunpack.c.0.s8 %v384
  %v386 = vlaneseq
  %v387 = vshrl.u32 %v386, 7
  %v388 = vsub.s32 %v385, %v387
  %v389 = vrot.slane %v361, %v388
  %v390 = vcombine.high %v368, %v368
  %v391 = vcombine.high %v375, %v375
  %v392 = vcombine.high %v382, %v382
  %v393 = vcombine.high %v389, %v389
  %v395 = vunpack.c.l.s4 1966171168
  %v396 = vunpack.c.0.s8 %v395
  %v397 = vlaneseq
  %v398 = vshrl.u32 %v397, 7
  %v399 = vsub.s32 %v396, %v398
  %v400 = vrot.slane %v342, %v399
  %v401 = vcombine.high %v400, %v400
  %v403 = vunpack.c.l.s4 1966171168
  %v404 = vunpack.c.0.s8 %v403
  %v405 = vlaneseq
  %v406 = vshrl.u32 %v405, 7
  %v407 = vsub.s32 %v404, %v406
  %v408 = vrot.slane %v400, %v407
  %v410 = vunpack.c.l.s4 1966171168
  %v411 = vunpack.c.0.s8 %v410
  %v412 = vlaneseq
  %v413 = vshrl.u32 %v412, 7
  %v414 = vsub.s32 %v411, %v413
  %v415 = vrot.slane %v401, %v414
  %v416 = vcombine.low %v368, %v382
  %v417 = vcombine.low %v390, %v392
  %v419 = vunpack.c.l.s4 1966171168
  %v420 = vunpack.c.0.s8 %v419
  %v421 = vlaneseq
  %v422 = vshrl.u32 %v421, 7
  %v423 = vsub.s32 %v420, %v422
  %v424 = vrot.slane %v416, %v423
  %v426 = vunpack.c.l.s4 1966171168
  %v427 = vunpack.c.0.s8 %v426
  %v428 = vlaneseq
  %v429 = vshrl.u32 %v428, 7
  %v430 = vsub.s32 %v427, %v429
  %v431 = vrot.slane %v417, %v430
  %v433 = vunpack.c.l.s4 1966171168
  %v434 = vunpack.c.0.s8 %v433
  %v435 = vlaneseq
  %v436 = vshrl.u32 %v435, 7
  %v437 = vsub.s32 %v434, %v436
  %v438 = vrot.slane %v375, %v437
  %v439 = vcombine.low %v424, %v431
  %v441 = vunpack.c.l.s4 1966171168
  %v442 = vunpack.c.0.s8 %v441
  %v443 = vlaneseq
  %v444 = vshrl.u32 %v443, 7
  %v445 = vsub.s32 %v442, %v444
  %v446 = vrot.slane %v439, %v445
  %v448 = vunpack.c.l.s4 1966171168
  %v449 = vunpack.c.0.s8 %v448
  %v450 = vlaneseq
  %v451 = vshrl.u32 %v450, 7
  %v452 = vsub.s32 %v449, %v451
  %v453 = vrot.slane %v438, %v452
  %v454 = vcombine.low %v446, %v453
  %v455 = vcombine.low %v389, %v391
  %v456 = vcombine.low %v393, %v408
  %v458 = vunpack.c.l.s4 1966171168
  %v459 = vunpack.c.0.s8 %v458
  %v460 = vlaneseq
  %v461 = vshrl.u32 %v460, 7
  %v462 = vsub.s32 %v459, %v461
  %v463 = vrot.slane %v455, %v462
  %v465 = vunpack.c.l.s4 1966171168
  %v466 = vunpack.c.0.s8 %v465
  %v467 = vlaneseq
  %v468 = vshrl.u32 %v467, 7
  %v469 = vsub.s32 %v466, %v468
  %v470 = vrot.slane %v456, %v469
  %v472 = vunpack.c.l.s4 1966171168
  %v473 = vunpack.c.0.s8 %v472
  %v474 = vlaneseq
  %v475 = vshrl.u32 %v474, 7
  %v476 = vsub.s32 %v473, %v475
  %v477 = vrot.slane %v415, %v476
  %v478 = vcombine.low %v463, %v470
  %v480 = vunpack.c.l.s4 1966171168
  %v481 = vunpack.c.0.s8 %v480
  %v482 = vlaneseq
  %v483 = vshrl.u32 %v482, 7
  %v484 = vsub.s32 %v481, %v483
  %v485 = vrot.slane %v478, %v484
  %v487 = vunpack.c.l.s4 1966171168
  %v488 = vunpack.c.0.s8 %v487
  %v489 = vlaneseq
  %v490 = vshrl.u32 %v489, 7
  %v491 = vsub.s32 %v488, %v490
  %v492 = vrot.slane %v477, %v491
  %v493 = vcombine.low %v485, %v492
  %vm496 = vcmask 258048
  %497 = vst.msk [vmem:[%s5] sm:$0x1f] %vm496, %v454
  %498 = vst.msk [vmem:[%s5 + $0x8] sm:$0x1f] %vm496, %v493
  // Predicated region
  $region22: #{mpcn_forward.10} parent=0 // pred_check
    _
  $region23: #{mpcn_forward.10} parent=0 // pred_check_branch
    %500 = sbr.rel (0) target = $region25
  $region24: #{mpcn_forward.10} parent=0 // pred_region
    _
  $region25: #{mpcn_forward.10} parent=0 // pred_fallthru
    _
  // Predicated region
  $region26: #{mpcn_forward.10} parent=0 // pred_check
    _
  $region27: #{mpcn_forward.10} parent=0 // pred_check_branch
    %502 = sbr.rel (0) target = $region29
  $region28: #{mpcn_forward.10} parent=0 // pred_region
    _
  $region29: #{mpcn_forward.10} parent=0 // pred_fallthru
    _

// kernel: mpcn_forward.11
$region0: #{mpcn_forward.11}
  #allocation0 [shape = 'u32[]', space=smem, size = 0x4, offset = 0x4, fixed_abs, tag = 'smem constant byte address 0x4 - core index']
  #allocation1 [shape = 'u32[144,128]{1,0:T(1,128)}', space=vmem, size = 0x12000, scoped, tag = 'internal scratch']
  %s0 = inlined_call_operand.vmem [shape: f32[2,6,7,32], index: 0, kind: input, shape index: {}]
  %s1 = inlined_call_operand.vmem [shape: f32[32,32], index: 1, kind: input, shape index: {}]
  %s2 = inlined_call_operand.vmem [shape: f32[1,32], index: 2, kind: input, shape index: {}]
  %s3 = inlined_call_operand.vmem [shape: f32[32,32], index: 3, kind: input, shape index: {}]
  %s4 = inlined_call_operand.vmem [shape: f32[1,32], index: 4, kind: input, shape index: {}]
  %s5 = inlined_call_operand.vmem [shape: f32[2,6,32], index: 5, kind: output, shape index: {}]
  %s6 = sld [smem:[#allocation0]]
  $region30: #{mpcn_forward.11} parent=0
    _
  %s8 = ssub.s32 1, %s6
  %s9 = scalar_select 0, %s8, %s6
  // Predicated region
  $region2: #{mpcn_forward.11} parent=0 // pred_check
    _
  $region3: #{mpcn_forward.11} parent=0 // pred_check_branch
    %11 = sbr.rel (0) target = $region5
  $region4: #{mpcn_forward.11} parent=0 // pred_region
    _
  $region5: #{mpcn_forward.11} parent=0 // pred_fallthru
    _
  // Predicated region
  $region6: #{mpcn_forward.11} parent=0 // pred_check
    _
  $region7: #{mpcn_forward.11} parent=0 // pred_check_branch
    %13 = sbr.rel (0) target = $region9
  $region8: #{mpcn_forward.11} parent=0 // pred_region
    _
  $region9: #{mpcn_forward.11} parent=0 // pred_fallthru
    _
  // Predicated region
  $region10: #{mpcn_forward.11} parent=0 // pred_check
    _
  $region11: #{mpcn_forward.11} parent=0 // pred_check_branch
    %15 = sbr.rel (0) target = $region13
  $region12: #{mpcn_forward.11} parent=0 // pred_region
    _
  $region13: #{mpcn_forward.11} parent=0 // pred_fallthru
    _
  // Predicated region
  $region14: #{mpcn_forward.11} parent=0 // pred_check
    _
  $region15: #{mpcn_forward.11} parent=0 // pred_check_branch
    %17 = sbr.rel (0) target = $region17
  $region16: #{mpcn_forward.11} parent=0 // pred_region
    _
  $region17: #{mpcn_forward.11} parent=0 // pred_fallthru
    _
  // Predicated region
  $region18: #{mpcn_forward.11} parent=0 // pred_check
    _
  $region19: #{mpcn_forward.11} parent=0 // pred_check_branch
    %19 = sbr.rel (0) target = $region21
  $region20: #{mpcn_forward.11} parent=0 // pred_region
    _
  $region21: #{mpcn_forward.11} parent=0 // pred_fallthru
    _
  %v20 = vld [vmem:[%s0] sm:$0x7f]
  %v21 = vld [vmem:[%s0 + $0x8] sm:$0x7f]
  %v22 = vld [vmem:[%s0 + $0x10] sm:$0x7f]
  %v23 = vld [vmem:[%s0 + $0x18] sm:$0x7f]
  %v24 = vld [vmem:[%s0 + $0x20] sm:$0x7f]
  %v25 = vld [vmem:[%s0 + $0x28] sm:$0x7f]
  %v26 = vld [vmem:[%s0 + $0x30] sm:$0x7f]
  %v27 = vld [vmem:[%s0 + $0x38] sm:$0x7f]
  %v28 = vld [vmem:[%s0 + $0x40] sm:$0x7f]
  %v29 = vld [vmem:[%s0 + $0x48] sm:$0x7f]
  %v30 = vld [vmem:[%s0 + $0x50] sm:$0x7f]
  %v31 = vld [vmem:[%s0 + $0x58] sm:$0x7f]
  %vm32 = vcmask 260096
  %v33 = vsel %vm32, %v20, 0.0
  %v34 = vrot.slane %v33, 4
  %v35 = vadd.f32 %v33, %v34
  %v36 = vrot.slane %v35, 2
  %v37 = vadd.f32 %v35, %v36
  %v38 = vrot.slane %v37, 1
  %v39 = vadd.f32 %v37, %v38
  %v40 = vsel %vm32, %v21, 0.0
  %v41 = vrot.slane %v40, 4
  %v42 = vadd.f32 %v40, %v41
  %v43 = vrot.slane %v42, 2
  %v44 = vadd.f32 %v42, %v43
  %v45 = vrot.slane %v44, 1
  %v46 = vadd.f32 %v44, %v45
  %v47 = vsel %vm32, %v22, 0.0
  %v48 = vrot.slane %v47, 4
  %v49 = vadd.f32 %v47, %v48
  %v50 = vrot.slane %v49, 2
  %v51 = vadd.f32 %v49, %v50
  %v52 = vrot.slane %v51, 1
  %v53 = vadd.f32 %v51, %v52
  %v54 = vsel %vm32, %v23, 0.0
  %v55 = vrot.slane %v54, 4
  %v56 = vadd.f32 %v54, %v55
  %v57 = vrot.slane %v56, 2
  %v58 = vadd.f32 %v56, %v57
  %v59 = vrot.slane %v58, 1
  %v60 = vadd.f32 %v58, %v59
  %v61 = vsel %vm32, %v24, 0.0
  %v62 = vrot.slane %v61, 4
  %v63 = vadd.f32 %v61, %v62
  %v64 = vrot.slane %v63, 2
  %v65 = vadd.f32 %v63, %v64
  %v66 = vrot.slane %v65, 1
  %v67 = vadd.f32 %v65, %v66
  %v68 = vsel %vm32, %v25, 0.0
  %v69 = vrot.slane %v68, 4
  %v70 = vadd.f32 %v68, %v69
  %v71 = vrot.slane %v70, 2
  %v72 = vadd.f32 %v70, %v71
  %v73 = vrot.slane %v72, 1
  %v74 = vadd.f32 %v72, %v73
  %v75 = vsel %vm32, %v26, 0.0
  %v76 = vrot.slane %v75, 4
  %v77 = vadd.f32 %v75, %v76
  %v78 = vrot.slane %v77, 2
  %v79 = vadd.f32 %v77, %v78
  %v80 = vrot.slane %v79, 1
  %v81 = vadd.f32 %v79, %v80
  %v82 = vsel %vm32, %v27, 0.0
  %v83 = vrot.slane %v82, 4
  %v84 = vadd.f32 %v82, %v83
  %v85 = vrot.slane %v84, 2
  %v86 = vadd.f32 %v84, %v85
  %v87 = vrot.slane %v86, 1
  %v88 = vadd.f32 %v86, %v87
  %v89 = vsel %vm32, %v28, 0.0
  %v90 = vrot.slane %v89, 4
  %v91 = vadd.f32 %v89, %v90
  %v92 = vrot.slane %v91, 2
  %v93 = vadd.f32 %v91, %v92
  %v94 = vrot.slane %v93, 1
  %v95 = vadd.f32 %v93, %v94
  %v96 = vsel %vm32, %v29, 0.0
  %v97 = vrot.slane %v96, 4
  %v98 = vadd.f32 %v96, %v97
  %v99 = vrot.slane %v98, 2
  %v100 = vadd.f32 %v98, %v99
  %v101 = vrot.slane %v100, 1
  %v102 = vadd.f32 %v100, %v101
  %v103 = vsel %vm32, %v30, 0.0
  %v104 = vrot.slane %v103, 4
  %v105 = vadd.f32 %v103, %v104
  %v106 = vrot.slane %v105, 2
  %v107 = vadd.f32 %v105, %v106
  %v108 = vrot.slane %v107, 1
  %v109 = vadd.f32 %v107, %v108
  %v110 = vsel %vm32, %v31, 0.0
  %v111 = vrot.slane %v110, 4
  %v112 = vadd.f32 %v110, %v111
  %v113 = vrot.slane %v112, 2
  %v114 = vadd.f32 %v112, %v113
  %v115 = vrot.slane %v114, 1
  %v116 = vadd.f32 %v114, %v115
  %v117 = vld [vmem:[%s1] sm:$0xff]
  %v118 = vld [vmem:[%s1 + $0x8] sm:$0xff]
  %v119 = vld [vmem:[%s1 + $0x10] sm:$0xff]
  %v120 = vld [vmem:[%s1 + $0x18] sm:$0xff]
  %v121 = vld [vmem:[%s2] sm:$0x1]
  %v123 = vlaneseq
  %v124 = vshrl.u32 %v123, 7
  %v125 = vsub.s32 0, %v124
  %v126 = vrot.slane %v121, %v125
  %vm140 = vcmask 1041409
  %v141 = vsel %vm140, %v46, %v39
  %vm142 = vcmask 1042434
  %v143 = vsel %vm142, %v53, %v141
  %vm144 = vcmask 1043459
  %v145 = vsel %vm144, %v60, %v143
  %vm146 = vcmask 1044484
  %v147 = vsel %vm146, %v67, %v145
  %vm148 = vcmask 1045509
  %v149 = vsel %vm148, %v74, %v147
  %vm150 = vcmask 1046534
  %v151 = vsel %vm150, %v81, %v149
  %vm152 = vcmask 1047559
  %v153 = vsel %vm152, %v88, %v151
  %v154 = vsel %vm140, %v102, %v95
  %v155 = vsel %vm142, %v109, %v154
  %v156 = vsel %vm144, %v116, %v155
  %vm157 = vcmask 261120
  %v158 = vsel %vm157, %v153, 0
  %v160 = vsel %vm157, %v156, 0
  %v163 = vsel %vm157, %v117, 0
  %v166 = vsel %vm157, %v118, 0
  %v169 = vsel %vm157, %v119, 0
  %v172 = vsel %vm157, %v120, 0
  %174 = vmatprep.subr.mxu0 0.0
  %175 = vmatpush1.xpose.msra.mxu0 0.0
  %176 = vmatprep.subr.mxu0 0.0
  %177 = vmatpush1.xpose.msra.mxu0 0.0
  %178 = vmatprep.subr.mxu0 0.0
  %179 = vmatpush1.xpose.msra.mxu0 0.0
  %180 = vmatprep.subr.mxu0 0.0
  %181 = vmatpush1.xpose.msra.mxu0 0.0
  %182 = vmatprep.subr.mxu0 0.0
  %183 = vmatpush1.xpose.msra.mxu0 0.0
  %184 = vmatprep.subr.mxu0 0.0
  %185 = vmatpush1.xpose.msra.mxu0 0.0
  %186 = vmatprep.subr.mxu0 0.0
  %187 = vmatpush1.xpose.msra.mxu0 0.0
  %188 = vmatprep.subr.mxu0 0.0
  %189 = vmatpush1.xpose.msra.mxu0 0.0
  %190 = vmatprep.subr.mxu0 0.0
  %191 = vmatpush1.xpose.msra.mxu0 0.0
  %192 = vmatprep.subr.mxu0 0.0
  %193 = vmatpush1.xpose.msra.mxu0 0.0
  %194 = vmatprep.subr.mxu0 0.0
  %195 = vmatpush1.xpose.msra.mxu0 0.0
  %196 = vmatprep.subr.mxu0 0.0
  %197 = vmatpush1.xpose.msra.mxu0 0.0
  %198 = vmatprep.subr.mxu0 0.0
  %199 = vmatpush1.xpose.msra.mxu0 %v172
  %200 = vmatprep.subr.mxu0 0.0
  %201 = vmatpush1.xpose.msra.mxu0 %v169
  %202 = vmatprep.subr.mxu0 0.0
  %203 = vmatpush1.xpose.msra.mxu0 %v166
  %204 = vmatprep.subr.mxu0 0.0
  %205 = vmatpush1.xpose.msra.mxu0 %v163
  %206 = vmatprep.subr.mxu0 0.0
  %207 = vmatpush2.xpose.msra.mxu0 0.0
  %208 = vmatprep.subr.mxu0 0.0
  %209 = vmatpush2.xpose.msra.mxu0 0.0
  %210 = vmatprep.subr.mxu0 0.0
  %211 = vmatpush2.xpose.msra.mxu0 0.0
  %212 = vmatprep.subr.mxu0 0.0
  %213 = vmatpush2.xpose.msra.mxu0 0.0
  %214 = vmatprep.subr.mxu0 0.0
  %215 = vmatpush2.xpose.msra.mxu0 0.0
  %216 = vmatprep.subr.mxu0 0.0
  %217 = vmatpush2.xpose.msra.mxu0 0.0
  %218 = vmatprep.subr.mxu0 0.0
  %219 = vmatpush2.xpose.msra.mxu0 0.0
  %220 = vmatprep.subr.mxu0 0.0
  %221 = vmatpush2.xpose.msra.mxu0 0.0
  %222 = vmatprep.subr.mxu0 0.0
  %223 = vmatpush2.xpose.msra.mxu0 0.0
  %224 = vmatprep.subr.mxu0 0.0
  %225 = vmatpush2.xpose.msra.mxu0 0.0
  %226 = vmatprep.subr.mxu0 0.0
  %227 = vmatpush2.xpose.msra.mxu0 0.0
  %228 = vmatprep.subr.mxu0 0.0
  %229 = vmatpush2.xpose.msra.mxu0 0.0
  %230 = vmatprep.subr.mxu0 0.0
  %231 = vmatpush2.xpose.msra.mxu0 0.0
  %232 = vmatprep.subr.mxu0 0.0
  %233 = vmatpush2.xpose.msra.mxu0 0.0
  %234 = vmatprep.subr.mxu0 0.0
  %235 = vmatpush2.xpose.msra.mxu0 0.0
  %236 = vmatprep.subr.mxu0 0.0
  %237 = vmatpush2.xpose.msra.mxu0 0.0
  %238 = vmatprep.mubr.f32.mxu0 0.0
  %239 = vmatmul.mubr.f32.gmra.mxu0 %v158
  %v240 = vpop.f32.mrf.mxu0
  %v241 = vadd.f32 %v126, %v240
  %v242 = vpop.f32.mrf.mxu0
  %243 = vmatprep.mubr.f32.mxu0 0.0
  %244 = vmatmul.mubr.f32.gmra.mxu0 %v160
  %v245 = vpop.f32.mrf.mxu0
  %v246 = vadd.f32 %v126, %v245
  %v247 = vpop.f32.mrf.mxu0
  %248 = vdwg.mxu0
  %v249 = vxor.u32 %v241, 2147483648
  %v250 = vxor.u32 %v246, 2147483648
  %v251 = vmul.f32 %v249, 1.442695
  %v252 = vpow.pop %v251
  %v253 = vmul.f32 %v250, 1.442695
  %v254 = vpow.pop %v253
  %v255 = vadd.f32 %v252, 1.0
  %v256 = vadd.f32 %v254, 1.0
  %v257 = vrcp.pop %v255
  %v258 = vmul.f32 1.0, %v257
  %v259 = vrcp.pop %v256
  %v260 = vmul.f32 1.0, %v259
  %v261 = vld [vmem:[%s3] sm:$0xff]
  %v262 = vld [vmem:[%s3 + $0x8] sm:$0xff]
  %v263 = vld [vmem:[%s3 + $0x10] sm:$0xff]
  %v264 = vld [vmem:[%s3 + $0x18] sm:$0xff]
  %v265 = vld [vmem:[%s4] sm:$0x1]
  %v267 = vlaneseq
  %v268 = vshrl.u32 %v267, 7
  %v269 = vsub.s32 0, %v268
  %v270 = vrot.slane %v265, %v269
  %v273 = vsel %vm157, %v261, 0
  %v276 = vsel %vm157, %v262, 0
  %v279 = vsel %vm157, %v263, 0
  %v282 = vsel %vm157, %v264, 0
  %284 = vmatprep.subr.mxu0 0.0
  %285 = vmatpush1.xpose.msra.mxu0 0.0
  %286 = vmatprep.subr.mxu0 0.0
  %287 = vmatpush1.xpose.msra.mxu0 0.0
  %288 = vmatprep.subr.mxu0 0.0
  %289 = vmatpush1.xpose.msra.mxu0 0.0
  %290 = vmatprep.subr.mxu0 0.0
  %291 = vmatpush1.xpose.msra.mxu0 0.0
  %292 = vmatprep.subr.mxu0 0.0
  %293 = vmatpush1.xpose.msra.mxu0 0.0
  %294 = vmatprep.subr.mxu0 0.0
  %295 = vmatpush1.xpose.msra.mxu0 0.0
  %296 = vmatprep.subr.mxu0 0.0
  %297 = vmatpush1.xpose.msra.mxu0 0.0
  %298 = vmatprep.subr.mxu0 0.0
  %299 = vmatpush1.xpose.msra.mxu0 0.0
  %300 = vmatprep.subr.mxu0 0.0
  %301 = vmatpush1.xpose.msra.mxu0 0.0
  %302 = vmatprep.subr.mxu0 0.0
  %303 = vmatpush1.xpose.msra.mxu0 0.0
  %304 = vmatprep.subr.mxu0 0.0
  %305 = vmatpush1.xpose.msra.mxu0 0.0
  %306 = vmatprep.subr.mxu0 0.0
  %307 = vmatpush1.xpose.msra.mxu0 0.0
  %308 = vmatprep.subr.mxu0 0.0
  %309 = vmatpush1.xpose.msra.mxu0 %v282
  %310 = vmatprep.subr.mxu0 0.0
  %311 = vmatpush1.xpose.msra.mxu0 %v279
  %312 = vmatprep.subr.mxu0 0.0
  %313 = vmatpush1.xpose.msra.mxu0 %v276
  %314 = vmatprep.subr.mxu0 0.0
  %315 = vmatpush1.xpose.msra.mxu0 %v273
  %316 = vmatprep.subr.mxu0 0.0
  %317 = vmatpush2.xpose.msra.mxu0 0.0
  %318 = vmatprep.subr.mxu0 0.0
  %319 = vmatpush2.xpose.msra.mxu0 0.0
  %320 = vmatprep.subr.mxu0 0.0
  %321 = vmatpush2.xpose.msra.mxu0 0.0
  %322 = vmatprep.subr.mxu0 0.0
  %323 = vmatpush2.xpose.msra.mxu0 0.0
  %324 = vmatprep.subr.mxu0 0.0
  %325 = vmatpush2.xpose.msra.mxu0 0.0
  %326 = vmatprep.subr.mxu0 0.0
  %327 = vmatpush2.xpose.msra.mxu0 0.0
  %328 = vmatprep.subr.mxu0 0.0
  %329 = vmatpush2.xpose.msra.mxu0 0.0
  %330 = vmatprep.subr.mxu0 0.0
  %331 = vmatpush2.xpose.msra.mxu0 0.0
  %332 = vmatprep.subr.mxu0 0.0
  %333 = vmatpush2.xpose.msra.mxu0 0.0
  %334 = vmatprep.subr.mxu0 0.0
  %335 = vmatpush2.xpose.msra.mxu0 0.0
  %336 = vmatprep.subr.mxu0 0.0
  %337 = vmatpush2.xpose.msra.mxu0 0.0
  %338 = vmatprep.subr.mxu0 0.0
  %339 = vmatpush2.xpose.msra.mxu0 0.0
  %340 = vmatprep.subr.mxu0 0.0
  %341 = vmatpush2.xpose.msra.mxu0 0.0
  %342 = vmatprep.subr.mxu0 0.0
  %343 = vmatpush2.xpose.msra.mxu0 0.0
  %344 = vmatprep.subr.mxu0 0.0
  %345 = vmatpush2.xpose.msra.mxu0 0.0
  %346 = vmatprep.subr.mxu0 0.0
  %347 = vmatpush2.xpose.msra.mxu0 0.0
  %348 = vmatprep.mubr.f32.mxu0 0.0
  %349 = vmatmul.mubr.f32.gmra.mxu0 %v158
  %v350 = vpop.f32.mrf.mxu0
  %v351 = vadd.f32 %v270, %v350
  %v352 = vpop.f32.mrf.mxu0
  %353 = vmatprep.mubr.f32.mxu0 0.0
  %354 = vmatmul.mubr.f32.gmra.mxu0 %v160
  %v355 = vpop.f32.mrf.mxu0
  %v356 = vadd.f32 %v270, %v355
  %v357 = vpop.f32.mrf.mxu0
  %358 = vdwg.mxu0
  %v359 = vtanh.pop %v351
  %v360 = vtanh.pop %v356
  %v361 = vmul.f32 %v258, %v359
  %v362 = vmul.f32 %v260, %v360
  %v365 = vcombine.high %v361, %v361
  %v367 = vunpack.c.l.s4 1983009808
  %v368 = vunpack.c.0.s8 %v367
  %v369 = vlaneseq
  %v370 = vshrl.u32 %v369, 7
  %v371 = vsub.s32 %v368, %v370
  %v372 = vrot.slane %v361, %v371
  %v374 = vunpack.c.l.s4 1983009808
  %v375 = vunpack.c.0.s8 %v374
  %v376 = vlaneseq
  %v377 = vshrl.u32 %v376, 7
  %v378 = vsub.s32 %v375, %v377
  %v379 = vrot.slane %v365, %v378
  %v380 = vcombine.high %v372, %v372
  %v381 = vcombine.high %v379, %v379
  %v383 = vunpack.c.l.s4 1983009808
  %v384 = vunpack.c.0.s8 %v383
  %v385 = vlaneseq
  %v386 = vshrl.u32 %v385, 7
  %v387 = vsub.s32 %v384, %v386
  %v388 = vrot.slane %v362, %v387
  %v389 = vcombine.high %v388, %v388
  %v390 = vcombine.low %v372, %v380
  %v392 = vunpack.c.l.s4 1983009808
  %v393 = vunpack.c.0.s8 %v392
  %v394 = vlaneseq
  %v395 = vshrl.u32 %v394, 7
  %v396 = vsub.s32 %v393, %v395
  %v397 = vrot.slane %v390, %v396
  %v399 = vunpack.c.l.s4 1983009808
  %v400 = vunpack.c.0.s8 %v399
  %v401 = vlaneseq
  %v402 = vshrl.u32 %v401, 7
  %v403 = vsub.s32 %v400, %v402
  %v404 = vrot.slane %v379, %v403
  %v405 = vcombine.low %v397, %v404
  %v406 = vcombine.low %v381, %v388
  %v408 = vunpack.c.l.s4 1983009808
  %v409 = vunpack.c.0.s8 %v408
  %v410 = vlaneseq
  %v411 = vshrl.u32 %v410, 7
  %v412 = vsub.s32 %v409, %v411
  %v413 = vrot.slane %v406, %v412
  %v415 = vunpack.c.l.s4 1983009808
  %v416 = vunpack.c.0.s8 %v415
  %v417 = vlaneseq
  %v418 = vshrl.u32 %v417, 7
  %v419 = vsub.s32 %v416, %v418
  %v420 = vrot.slane %v389, %v419
  %v421 = vcombine.low %v413, %v420
  %vm424 = vcmask 259072
  %425 = vst.msk [vmem:[%s5] sm:$0x3f] %vm424, %v405
  %426 = vst.msk [vmem:[%s5 + $0x8] sm:$0x3f] %vm424, %v421
  // Predicated region
  $region22: #{mpcn_forward.11} parent=0 // pred_check
    _
  $region23: #{mpcn_forward.11} parent=0 // pred_check_branch
    %428 = sbr.rel (0) target = $region25
  $region24: #{mpcn_forward.11} parent=0 // pred_region
    _
  $region25: #{mpcn_forward.11} parent=0 // pred_fallthru
    _
  // Predicated region
  $region26: #{mpcn_forward.11} parent=0 // pred_check
    _
  $region27: #{mpcn_forward.11} parent=0 // pred_check_branch
    %430 = sbr.rel (0) target = $region29
  $region28: #{mpcn_forward.11} parent=0 // pred_region
    _
  $region29: #{mpcn_forward.11} parent=0 // pred_fallthru
    _

// kernel: mpcn_forward.12
$region0: #{mpcn_forward.12}
  #allocation0 [shape = 'u32[]', space=smem, size = 0x4, offset = 0x4, fixed_abs, tag = 'smem constant byte address 0x4 - core index']
  #allocation1 [shape = 'u32[144,128]{1,0:T(1,128)}', space=vmem, size = 0x12000, scoped, tag = 'internal scratch']
  %s0 = inlined_call_operand.vmem [shape: f32[2,5,32], index: 0, kind: input, shape index: {}]
  %s1 = inlined_call_operand.vmem [shape: f32[2,6,32], index: 1, kind: input, shape index: {}]
  %s2 = inlined_call_operand.vmem [shape: f32[32,32], index: 2, kind: input, shape index: {}]
  %s3 = inlined_call_operand.vmem [shape: f32[1,32], index: 3, kind: input, shape index: {}]
  %s4 = inlined_call_operand.vmem [shape: f32[32,32], index: 4, kind: input, shape index: {}]
  %s5 = inlined_call_operand.vmem [shape: f32[1,32], index: 5, kind: input, shape index: {}]
  %s6 = inlined_call_operand.vmem [shape: f32[32,32], index: 6, kind: input, shape index: {}]
  %s7 = inlined_call_operand.vmem [shape: f32[2,5], index: 7, kind: input, shape index: {}]
  %s8 = inlined_call_operand.vmem [shape: f32[2,6], index: 8, kind: input, shape index: {}]
  %s9 = inlined_call_operand.vmem [shape: f32[2,5], index: 9, kind: output, shape index: {0}]
  %s10 = inlined_call_operand.vmem [shape: f32[2,6], index: 10, kind: output, shape index: {1}]
  %11 = xla_tuple %s9, %s10
  %s12 = sld [smem:[#allocation0]]
  $region54: #{mpcn_forward.12} parent=0
    _
  %s14 = ssub.s32 1, %s12
  %s15 = scalar_select 0, %s14, %s12
  // Predicated region
  $region2: #{mpcn_forward.12} parent=0 // pred_check
    _
  $region3: #{mpcn_forward.12} parent=0 // pred_check_branch
    %17 = sbr.rel (0) target = $region5
  $region4: #{mpcn_forward.12} parent=0 // pred_region
    _
  $region5: #{mpcn_forward.12} parent=0 // pred_fallthru
    _
  // Predicated region
  $region6: #{mpcn_forward.12} parent=0 // pred_check
    _
  $region7: #{mpcn_forward.12} parent=0 // pred_check_branch
    %19 = sbr.rel (0) target = $region9
  $region8: #{mpcn_forward.12} parent=0 // pred_region
    _
  $region9: #{mpcn_forward.12} parent=0 // pred_fallthru
    _
  // Predicated region
  $region10: #{mpcn_forward.12} parent=0 // pred_check
    _
  $region11: #{mpcn_forward.12} parent=0 // pred_check_branch
    %21 = sbr.rel (0) target = $region13
  $region12: #{mpcn_forward.12} parent=0 // pred_region
    _
  $region13: #{mpcn_forward.12} parent=0 // pred_fallthru
    _
  // Predicated region
  $region14: #{mpcn_forward.12} parent=0 // pred_check
    _
  $region15: #{mpcn_forward.12} parent=0 // pred_check_branch
    %23 = sbr.rel (0) target = $region17
  $region16: #{mpcn_forward.12} parent=0 // pred_region
    _
  $region17: #{mpcn_forward.12} parent=0 // pred_fallthru
    _
  // Predicated region
  $region18: #{mpcn_forward.12} parent=0 // pred_check
    _
  $region19: #{mpcn_forward.12} parent=0 // pred_check_branch
    %25 = sbr.rel (0) target = $region21
  $region20: #{mpcn_forward.12} parent=0 // pred_region
    _
  $region21: #{mpcn_forward.12} parent=0 // pred_fallthru
    _
  // Predicated region
  $region22: #{mpcn_forward.12} parent=0 // pred_check
    _
  $region23: #{mpcn_forward.12} parent=0 // pred_check_branch
    %27 = sbr.rel (0) target = $region25
  $region24: #{mpcn_forward.12} parent=0 // pred_region
    _
  $region25: #{mpcn_forward.12} parent=0 // pred_fallthru
    _
  // Predicated region
  $region26: #{mpcn_forward.12} parent=0 // pred_check
    _
  $region27: #{mpcn_forward.12} parent=0 // pred_check_branch
    %29 = sbr.rel (0) target = $region29
  $region28: #{mpcn_forward.12} parent=0 // pred_region
    _
  $region29: #{mpcn_forward.12} parent=0 // pred_fallthru
    _
  // Predicated region
  $region30: #{mpcn_forward.12} parent=0 // pred_check
    _
  $region31: #{mpcn_forward.12} parent=0 // pred_check_branch
    %31 = sbr.rel (0) target = $region33
  $region32: #{mpcn_forward.12} parent=0 // pred_region
    _
  $region33: #{mpcn_forward.12} parent=0 // pred_fallthru
    _
  // Predicated region
  $region34: #{mpcn_forward.12} parent=0 // pred_check
    _
  $region35: #{mpcn_forward.12} parent=0 // pred_check_branch
    %33 = sbr.rel (0) target = $region37
  $region36: #{mpcn_forward.12} parent=0 // pred_region
    _
  $region37: #{mpcn_forward.12} parent=0 // pred_fallthru
    _
  %v34 = vld [vmem:[%s0] sm:$0x1f]
  %v35 = vld [vmem:[%s0 + $0x8] sm:$0x1f]
  %v38 = vcombine.high %v34, %v34
  %v40 = vunpack.c.l.s4 1966171168
  %v41 = vunpack.c.0.s8 %v40
  %v42 = vlaneseq
  %v43 = vshrl.u32 %v42, 7
  %v44 = vsub.s32 %v41, %v43
  %v45 = vrot.slane %v34, %v44
  %v47 = vunpack.c.l.s4 1966171168
  %v48 = vunpack.c.0.s8 %v47
  %v49 = vlaneseq
  %v50 = vshrl.u32 %v49, 7
  %v51 = vsub.s32 %v48, %v50
  %v52 = vrot.slane %v38, %v51
  %v53 = vcombine.high %v45, %v45
  %v55 = vunpack.c.l.s4 1966171168
  %v56 = vunpack.c.0.s8 %v55
  %v57 = vlaneseq
  %v58 = vshrl.u32 %v57, 7
  %v59 = vsub.s32 %v56, %v58
  %v60 = vrot.slane %v45, %v59
  %v62 = vunpack.c.l.s4 1966171168
  %v63 = vunpack.c.0.s8 %v62
  %v64 = vlaneseq
  %v65 = vshrl.u32 %v64, 7
  %v66 = vsub.s32 %v63, %v65
  %v67 = vrot.slane %v52, %v66
  %v69 = vunpack.c.l.s4 1966171168
  %v70 = vunpack.c.0.s8 %v69
  %v71 = vlaneseq
  %v72 = vshrl.u32 %v71, 7
  %v73 = vsub.s32 %v70, %v72
  %v74 = vrot.slane %v53, %v73
  %v75 = vcombine.high %v60, %v60
  %v76 = vcombine.high %v74, %v74
  %v77 = vcombine.high %v35, %v35
  %v79 = vunpack.c.l.s4 1966171168
  %v80 = vunpack.c.0.s8 %v79
  %v81 = vlaneseq
  %v82 = vshrl.u32 %v81, 7
  %v83 = vsub.s32 %v80, %v82
  %v84 = vrot.slane %v35, %v83
  %v86 = vunpack.c.l.s4 1966171168
  %v87 = vunpack.c.0.s8 %v86
  %v88 = vlaneseq
  %v89 = vshrl.u32 %v88, 7
  %v90 = vsub.s32 %v87, %v89
  %v91 = vrot.slane %v77, %v90
  %v92 = vcombine.high %v84, %v84
  %v94 = vunpack.c.l.s4 1966171168
  %v95 = vunpack.c.0.s8 %v94
  %v96 = vlaneseq
  %v97 = vshrl.u32 %v96, 7
  %v98 = vsub.s32 %v95, %v97
  %v99 = vrot.slane %v84, %v98
  %v101 = vunpack.c.l.s4 1966171168
  %v102 = vunpack.c.0.s8 %v101
  %v103 = vlaneseq
  %v104 = vshrl.u32 %v103, 7
  %v105 = vsub.s32 %v102, %v104
  %v106 = vrot.slane %v91, %v105
  %v108 = vunpack.c.l.s4 1966171168
  %v109 = vunpack.c.0.s8 %v108
  %v110 = vlaneseq
  %v111 = vshrl.u32 %v110, 7
  %v112 = vsub.s32 %v109, %v111
  %v113 = vrot.slane %v92, %v112
  %v114 = vcombine.high %v99, %v99
  %v115 = vcombine.high %v113, %v113
  %v116 = vld [vmem:[%s2] sm:$0xff]
  %v117 = vld [vmem:[%s2 + $0x8] sm:$0xff]
  %v118 = vld [vmem:[%s2 + $0x10] sm:$0xff]
  %v119 = vld [vmem:[%s2 + $0x18] sm:$0xff]
  %v120 = vld [vmem:[%s3] sm:$0x1]
  %v122 = vlaneseq
  %v123 = vshrl.u32 %v122, 7
  %v124 = vsub.s32 0, %v123
  %v125 = vrot.slane %v120, %v124
  %v127 = vcombine.low %v60, %v74
  %v128 = vcombine.low %v75, %v76
  %v129 = vcombine.low %v67, %v99
  %v130 = vcombine.low %v113, %v114
  %v132 = vunpack.c.l.s4 1966171168
  %v133 = vunpack.c.0.s8 %v132
  %v134 = vlaneseq
  %v135 = vshrl.u32 %v134, 7
  %v136 = vsub.s32 %v133, %v135
  %v137 = vrot.slane %v127, %v136
  %v139 = vunpack.c.l.s4 1966171168
  %v140 = vunpack.c.0.s8 %v139
  %v141 = vlaneseq
  %v142 = vshrl.u32 %v141, 7
  %v143 = vsub.s32 %v140, %v142
  %v144 = vrot.slane %v128, %v143
  %v146 = vunpack.c.l.s4 1966171168
  %v147 = vunpack.c.0.s8 %v146
  %v148 = vlaneseq
  %v149 = vshrl.u32 %v148, 7
  %v150 = vsub.s32 %v147, %v149
  %v151 = vrot.slane %v129, %v150
  %v153 = vunpack.c.l.s4 1966171168
  %v154 = vunpack.c.0.s8 %v153
  %v155 = vlaneseq
  %v156 = vshrl.u32 %v155, 7
  %v157 = vsub.s32 %v154, %v156
  %v158 = vrot.slane %v130, %v157
  %v159 = vcombine.low %v137, %v144
  %v160 = vcombine.low %v151, %v158
  %v162 = vunpack.c.l.s4 1966171168
  %v163 = vunpack.c.0.s8 %v162
  %v164 = vlaneseq
  %v165 = vshrl.u32 %v164, 7
  %v166 = vsub.s32 %v163, %v165
  %v167 = vrot.slane %v159, %v166
  %v169 = vunpack.c.l.s4 1966171168
  %v170 = vunpack.c.0.s8 %v169
  %v171 = vlaneseq
  %v172 = vshrl.u32 %v171, 7
  %v173 = vsub.s32 %v170, %v172
  %v174 = vrot.slane %v160, %v173
  %v175 = vcombine.low %v167, %v174
  %v176 = vcombine.low %v115, %v106
  %v178 = vunpack.c.l.s4 1966171168
  %v179 = vunpack.c.0.s8 %v178
  %v180 = vlaneseq
  %v181 = vshrl.u32 %v180, 7
  %v182 = vsub.s32 %v179, %v181
  %v183 = vrot.slane %v176, %v182
  %v185 = vunpack.c.l.s4 1966171168
  %v186 = vunpack.c.0.s8 %v185
  %v187 = vlaneseq
  %v188 = vshrl.u32 %v187, 7
  %v189 = vsub.s32 %v186, %v188
  %v190 = vrot.slane %v183, %v189
  %vm191 = vcmask 261120
  %v192 = vsel %vm191, %v175, 0
  %v194 = vsel %vm191, %v190, 0
  %v197 = vsel %vm191, %v116, 0
  %v200 = vsel %vm191, %v117, 0
  %v203 = vsel %vm191, %v118, 0
  %v206 = vsel %vm191, %v119, 0
  %208 = vmatprep.subr.mxu0 0.0
  %209 = vmatpush1.xpose.msra.mxu0 0.0
  %210 = vmatprep.subr.mxu0 0.0
  %211 = vmatpush1.xpose.msra.mxu0 0.0
  %212 = vmatprep.subr.mxu0 0.0
  %213 = vmatpush1.xpose.msra.mxu0 0.0
  %214 = vmatprep.subr.mxu0 0.0
  %215 = vmatpush1.xpose.msra.mxu0 0.0
  %216 = vmatprep.subr.mxu0 0.0
  %217 = vmatpush1.xpose.msra.mxu0 0.0
  %218 = vmatprep.subr.mxu0 0.0
  %219 = vmatpush1.xpose.msra.mxu0 0.0
  %220 = vmatprep.subr.mxu0 0.0
  %221 = vmatpush1.xpose.msra.mxu0 0.0
  %222 = vmatprep.subr.mxu0 0.0
  %223 = vmatpush1.xpose.msra.mxu0 0.0
  %224 = vmatprep.subr.mxu0 0.0
  %225 = vmatpush1.xpose.msra.mxu0 0.0
  %226 = vmatprep.subr.mxu0 0.0
  %227 = vmatpush1.xpose.msra.mxu0 0.0
  %228 = vmatprep.subr.mxu0 0.0
  %229 = vmatpush1.xpose.msra.mxu0 0.0
  %230 = vmatprep.subr.mxu0 0.0
  %231 = vmatpush1.xpose.msra.mxu0 0.0
  %232 = vmatprep.subr.mxu0 0.0
  %233 = vmatpush1.xpose.msra.mxu0 %v206
  %234 = vmatprep.subr.mxu0 0.0
  %235 = vmatpush1.xpose.msra.mxu0 %v203
  %236 = vmatprep.subr.mxu0 0.0
  %237 = vmatpush1.xpose.msra.mxu0 %v200
  %238 = vmatprep.subr.mxu0 0.0
  %239 = vmatpush1.xpose.msra.mxu0 %v197
  %240 = vmatprep.subr.mxu0 0.0
  %241 = vmatpush2.xpose.msra.mxu0 0.0
  %242 = vmatprep.subr.mxu0 0.0
  %243 = vmatpush2.xpose.msra.mxu0 0.0
  %244 = vmatprep.subr.mxu0 0.0
  %245 = vmatpush2.xpose.msra.mxu0 0.0
  %246 = vmatprep.subr.mxu0 0.0
  %247 = vmatpush2.xpose.msra.mxu0 0.0
  %248 = vmatprep.subr.mxu0 0.0
  %249 = vmatpush2.xpose.msra.mxu0 0.0
  %250 = vmatprep.subr.mxu0 0.0
  %251 = vmatpush2.xpose.msra.mxu0 0.0
  %252 = vmatprep.subr.mxu0 0.0
  %253 = vmatpush2.xpose.msra.mxu0 0.0
  %254 = vmatprep.subr.mxu0 0.0
  %255 = vmatpush2.xpose.msra.mxu0 0.0
  %256 = vmatprep.subr.mxu0 0.0
  %257 = vmatpush2.xpose.msra.mxu0 0.0
  %258 = vmatprep.subr.mxu0 0.0
  %259 = vmatpush2.xpose.msra.mxu0 0.0
  %260 = vmatprep.subr.mxu0 0.0
  %261 = vmatpush2.xpose.msra.mxu0 0.0
  %262 = vmatprep.subr.mxu0 0.0
  %263 = vmatpush2.xpose.msra.mxu0 0.0
  %264 = vmatprep.subr.mxu0 0.0
  %265 = vmatpush2.xpose.msra.mxu0 0.0
  %266 = vmatprep.subr.mxu0 0.0
  %267 = vmatpush2.xpose.msra.mxu0 0.0
  %268 = vmatprep.subr.mxu0 0.0
  %269 = vmatpush2.xpose.msra.mxu0 0.0
  %270 = vmatprep.subr.mxu0 0.0
  %271 = vmatpush2.xpose.msra.mxu0 0.0
  %272 = vmatprep.mubr.f32.mxu0 0.0
  %273 = vmatmul.mubr.f32.gmra.mxu0 %v192
  %v274 = vpop.f32.mrf.mxu0
  %v275 = vadd.f32 %v125, %v274
  %v276 = vpop.f32.mrf.mxu0
  %277 = vmatprep.mubr.f32.mxu0 0.0
  %278 = vmatmul.mubr.f32.gmra.mxu0 %v194
  %v279 = vpop.f32.mrf.mxu0
  %v280 = vadd.f32 %v125, %v279
  %v281 = vpop.f32.mrf.mxu0
  %282 = vdwg.mxu0
  %v283 = vld [vmem:[%s1] sm:$0x3f]
  %v284 = vld [vmem:[%s1 + $0x8] sm:$0x3f]
  %v287 = vcombine.high %v283, %v283
  %v289 = vunpack.c.l.s4 1983009808
  %v290 = vunpack.c.0.s8 %v289
  %v291 = vlaneseq
  %v292 = vshrl.u32 %v291, 7
  %v293 = vsub.s32 %v290, %v292
  %v294 = vrot.slane %v283, %v293
  %v296 = vunpack.c.l.s4 1983009808
  %v297 = vunpack.c.0.s8 %v296
  %v298 = vlaneseq
  %v299 = vshrl.u32 %v298, 7
  %v300 = vsub.s32 %v297, %v299
  %v301 = vrot.slane %v287, %v300
  %v302 = vcombine.high %v294, %v294
  %v303 = vcombine.high %v284, %v284
  %v305 = vunpack.c.l.s4 1983009808
  %v306 = vunpack.c.0.s8 %v305
  %v307 = vlaneseq
  %v308 = vshrl.u32 %v307, 7
  %v309 = vsub.s32 %v306, %v308
  %v310 = vrot.slane %v284, %v309
  %v312 = vunpack.c.l.s4 1983009808
  %v313 = vunpack.c.0.s8 %v312
  %v314 = vlaneseq
  %v315 = vshrl.u32 %v314, 7
  %v316 = vsub.s32 %v313, %v315
  %v317 = vrot.slane %v303, %v316
  %v318 = vcombine.high %v310, %v310
  %v319 = vld [vmem:[%s4] sm:$0xff]
  %v320 = vld [vmem:[%s4 + $0x8] sm:$0xff]
  %v321 = vld [vmem:[%s4 + $0x10] sm:$0xff]
  %v322 = vld [vmem:[%s4 + $0x18] sm:$0xff]
  %v323 = vld [vmem:[%s5] sm:$0x1]
  %v325 = vlaneseq
  %v326 = vshrl.u32 %v325, 7
  %v327 = vsub.s32 0, %v326
  %v328 = vrot.slane %v323, %v327
  %v330 = vcombine.low %v294, %v302
  %v331 = vcombine.low %v301, %v310
  %v333 = vunpack.c.l.s4 1983009808
  %v334 = vunpack.c.0.s8 %v333
  %v335 = vlaneseq
  %v336 = vshrl.u32 %v335, 7
  %v337 = vsub.s32 %v334, %v336
  %v338 = vrot.slane %v330, %v337
  %v340 = vunpack.c.l.s4 1983009808
  %v341 = vunpack.c.0.s8 %v340
  %v342 = vlaneseq
  %v343 = vshrl.u32 %v342, 7
  %v344 = vsub.s32 %v341, %v343
  %v345 = vrot.slane %v331, %v344
  %v346 = vcombine.low %v338, %v345
  %v347 = vcombine.low %v318, %v317
  %v349 = vunpack.c.l.s4 1983009808
  %v350 = vunpack.c.0.s8 %v349
  %v351 = vlaneseq
  %v352 = vshrl.u32 %v351, 7
  %v353 = vsub.s32 %v350, %v352
  %v354 = vrot.slane %v347, %v353
  %v355 = vsel %vm191, %v346, 0
  %v357 = vsel %vm191, %v354, 0
  %v360 = vsel %vm191, %v319, 0
  %v363 = vsel %vm191, %v320, 0
  %v366 = vsel %vm191, %v321, 0
  %v369 = vsel %vm191, %v322, 0
  %371 = vmatprep.subr.mxu0 0.0
  %372 = vmatpush1.xpose.msra.mxu0 0.0
  %373 = vmatprep.subr.mxu0 0.0
  %374 = vmatpush1.xpose.msra.mxu0 0.0
  %375 = vmatprep.subr.mxu0 0.0
  %376 = vmatpush1.xpose.msra.mxu0 0.0
  %377 = vmatprep.subr.mxu0 0.0
  %378 = vmatpush1.xpose.msra.mxu0 0.0
  %379 = vmatprep.subr.mxu0 0.0
  %380 = vmatpush1.xpose.msra.mxu0 0.0
  %381 = vmatprep.subr.mxu0 0.0
  %382 = vmatpush1.xpose.msra.mxu0 0.0
  %383 = vmatprep.subr.mxu0 0.0
  %384 = vmatpush1.xpose.msra.mxu0 0.0
  %385 = vmatprep.subr.mxu0 0.0
  %386 = vmatpush1.xpose.msra.mxu0 0.0
  %387 = vmatprep.subr.mxu0 0.0
  %388 = vmatpush1.xpose.msra.mxu0 0.0
  %389 = vmatprep.subr.mxu0 0.0
  %390 = vmatpush1.xpose.msra.mxu0 0.0
  %391 = vmatprep.subr.mxu0 0.0
  %392 = vmatpush1.xpose.msra.mxu0 0.0
  %393 = vmatprep.subr.mxu0 0.0
  %394 = vmatpush1.xpose.msra.mxu0 0.0
  %395 = vmatprep.subr.mxu0 0.0
  %396 = vmatpush1.xpose.msra.mxu0 %v369
  %397 = vmatprep.subr.mxu0 0.0
  %398 = vmatpush1.xpose.msra.mxu0 %v366
  %399 = vmatprep.subr.mxu0 0.0
  %400 = vmatpush1.xpose.msra.mxu0 %v363
  %401 = vmatprep.subr.mxu0 0.0
  %402 = vmatpush1.xpose.msra.mxu0 %v360
  %403 = vmatprep.subr.mxu0 0.0
  %404 = vmatpush2.xpose.msra.mxu0 0.0
  %405 = vmatprep.subr.mxu0 0.0
  %406 = vmatpush2.xpose.msra.mxu0 0.0
  %407 = vmatprep.subr.mxu0 0.0
  %408 = vmatpush2.xpose.msra.mxu0 0.0
  %409 = vmatprep.subr.mxu0 0.0
  %410 = vmatpush2.xpose.msra.mxu0 0.0
  %411 = vmatprep.subr.mxu0 0.0
  %412 = vmatpush2.xpose.msra.mxu0 0.0
  %413 = vmatprep.subr.mxu0 0.0
  %414 = vmatpush2.xpose.msra.mxu0 0.0
  %415 = vmatprep.subr.mxu0 0.0
  %416 = vmatpush2.xpose.msra.mxu0 0.0
  %417 = vmatprep.subr.mxu0 0.0
  %418 = vmatpush2.xpose.msra.mxu0 0.0
  %419 = vmatprep.subr.mxu0 0.0
  %420 = vmatpush2.xpose.msra.mxu0 0.0
  %421 = vmatprep.subr.mxu0 0.0
  %422 = vmatpush2.xpose.msra.mxu0 0.0
  %423 = vmatprep.subr.mxu0 0.0
  %424 = vmatpush2.xpose.msra.mxu0 0.0
  %425 = vmatprep.subr.mxu0 0.0
  %426 = vmatpush2.xpose.msra.mxu0 0.0
  %427 = vmatprep.subr.mxu0 0.0
  %428 = vmatpush2.xpose.msra.mxu0 0.0
  %429 = vmatprep.subr.mxu0 0.0
  %430 = vmatpush2.xpose.msra.mxu0 0.0
  %431 = vmatprep.subr.mxu0 0.0
  %432 = vmatpush2.xpose.msra.mxu0 0.0
  %433 = vmatprep.subr.mxu0 0.0
  %434 = vmatpush2.xpose.msra.mxu0 0.0
  %435 = vmatprep.mubr.f32.mxu0 0.0
  %436 = vmatmul.mubr.f32.gmra.mxu0 %v355
  %v437 = vpop.f32.mrf.mxu0
  %v438 = vadd.f32 %v328, %v437
  %v439 = vpop.f32.mrf.mxu0
  %440 = vmatprep.mubr.f32.mxu0 0.0
  %441 = vmatmul.mubr.f32.gmra.mxu0 %v357
  %v442 = vpop.f32.mrf.mxu0
  %v443 = vadd.f32 %v328, %v442
  %v444 = vpop.f32.mrf.mxu0
  %445 = vdwg.mxu0
  %v446 = vld [vmem:[%s6] sm:$0xff]
  %v447 = vld [vmem:[%s6 + $0x8] sm:$0xff]
  %v448 = vld [vmem:[%s6 + $0x10] sm:$0xff]
  %v449 = vld [vmem:[%s6 + $0x18] sm:$0xff]
  %v451 = vsel %vm191, %v275, 0
  %v454 = vsel %vm191, %v280, 0
  %456 = vmatprep.subr.mxu0 0.0
  %457 = vmatpush1.msra.mxu0 0.0
  %458 = vmatprep.subr.mxu0 0.0
  %459 = vmatpush1.msra.mxu0 0.0
  %460 = vmatprep.subr.mxu0 0.0
  %461 = vmatpush1.msra.mxu0 0.0
  %462 = vmatprep.subr.mxu0 0.0
  %463 = vmatpush1.msra.mxu0 0.0
  %464 = vmatprep.subr.mxu0 0.0
  %465 = vmatpush1.msra.mxu0 0.0
  %466 = vmatprep.subr.mxu0 0.0
  %467 = vmatpush1.msra.mxu0 0.0
  %468 = vmatprep.subr.mxu0 0.0
  %469 = vmatpush1.msra.mxu0 0.0
  %470 = vmatprep.subr.mxu0 0.0
  %471 = vmatpush1.msra.mxu0 0.0
  %472 = vmatprep.subr.mxu0 0.0
  %473 = vmatpush1.msra.mxu0 0.0
  %474 = vmatprep.subr.mxu0 0.0
  %475 = vmatpush1.msra.mxu0 0.0
  %476 = vmatprep.subr.mxu0 0.0
  %477 = vmatpush1.msra.mxu0 0.0
  %478 = vmatprep.subr.mxu0 0.0
  %479 = vmatpush1.msra.mxu0 0.0
  %480 = vmatprep.subr.mxu0 0.0
  %481 = vmatpush1.msra.mxu0 %v449
  %482 = vmatprep.subr.mxu0 0.0
  %483 = vmatpush1.msra.mxu0 %v448
  %484 = vmatprep.subr.mxu0 0.0
  %485 = vmatpush1.msra.mxu0 %v447
  %486 = vmatprep.subr.mxu0 0.0
  %487 = vmatpush1.msra.mxu0 %v446
  %488 = vmatprep.subr.mxu0 0.0
  %489 = vmatpush2.msra.mxu0 0.0
  %490 = vmatprep.subr.mxu0 0.0
  %491 = vmatpush2.msra.mxu0 0.0
  %492 = vmatprep.subr.mxu0 0.0
  %493 = vmatpush2.msra.mxu0 0.0
  %494 = vmatprep.subr.mxu0 0.0
  %495 = vmatpush2.msra.mxu0 0.0
  %496 = vmatprep.subr.mxu0 0.0
  %497 = vmatpush2.msra.mxu0 0.0
  %498 = vmatprep.subr.mxu0 0.0
  %499 = vmatpush2.msra.mxu0 0.0
  %500 = vmatprep.subr.mxu0 0.0
  %501 = vmatpush2.msra.mxu0 0.0
  %502 = vmatprep.subr.mxu0 0.0
  %503 = vmatpush2.msra.mxu0 0.0
  %504 = vmatprep.subr.mxu0 0.0
  %505 = vmatpush2.msra.mxu0 0.0
  %506 = vmatprep.subr.mxu0 0.0
  %507 = vmatpush2.msra.mxu0 0.0
  %508 = vmatprep.subr.mxu0 0.0
  %509 = vmatpush2.msra.mxu0 0.0
  %510 = vmatprep.subr.mxu0 0.0
  %511 = vmatpush2.msra.mxu0 0.0
  %512 = vmatprep.subr.mxu0 0.0
  %513 = vmatpush2.msra.mxu0 0.0
  %514 = vmatprep.subr.mxu0 0.0
  %515 = vmatpush2.msra.mxu0 0.0
  %516 = vmatprep.subr.mxu0 0.0
  %517 = vmatpush2.msra.mxu0 0.0
  %518 = vmatprep.subr.mxu0 0.0
  %519 = vmatpush2.msra.mxu0 0.0
  %520 = vmatprep.mubr.f32.mxu0 0.0
  %521 = vmatmul.mubr.f32.gmra.mxu0 %v451
  %v522 = vpop.f32.mrf.mxu0
  %v523 = vadd.f32 0.0, %v522
  %v524 = vpop.f32.mrf.mxu0
  %525 = vmatprep.mubr.f32.mxu0 0.0
  %526 = vmatmul.mubr.f32.gmra.mxu0 %v454
  %v527 = vpop.f32.mrf.mxu0
  %v528 = vadd.f32 0.0, %v527
  %v529 = vpop.f32.mrf.mxu0
  %530 = vdwg.mxu0
  %v533 = vcombine.high %v523, %v523
  %v535 = vunpack.c.l.s4 1966171168
  %v536 = vunpack.c.0.s8 %v535
  %v537 = vlaneseq
  %v538 = vshrl.u32 %v537, 7
  %v539 = vsub.s32 %v536, %v538
  %v540 = vrot.slane %v523, %v539
  %v542 = vunpack.c.l.s4 1966171168
  %v543 = vunpack.c.0.s8 %v542
  %v544 = vlaneseq
  %v545 = vshrl.u32 %v544, 7
  %v546 = vsub.s32 %v543, %v545
  %v547 = vrot.slane %v533, %v546
  %v548 = vcombine.high %v540, %v540
  %v549 = vcombine.high %v547, %v547
  %v551 = vunpack.c.l.s4 1966171168
  %v552 = vunpack.c.0.s8 %v551
  %v553 = vlaneseq
  %v554 = vshrl.u32 %v553, 7
  %v555 = vsub.s32 %v552, %v554
  %v556 = vrot.slane %v540, %v555
  %v558 = vunpack.c.l.s4 1966171168
  %v559 = vunpack.c.0.s8 %v558
  %v560 = vlaneseq
  %v561 = vshrl.u32 %v560, 7
  %v562 = vsub.s32 %v559, %v561
  %v563 = vrot.slane %v547, %v562
  %v565 = vunpack.c.l.s4 1966171168
  %v566 = vunpack.c.0.s8 %v565
  %v567 = vlaneseq
  %v568 = vshrl.u32 %v567, 7
  %v569 = vsub.s32 %v566, %v568
  %v570 = vrot.slane %v548, %v569
  %v572 = vunpack.c.l.s4 1966171168
  %v573 = vunpack.c.0.s8 %v572
  %v574 = vlaneseq
  %v575 = vshrl.u32 %v574, 7
  %v576 = vsub.s32 %v573, %v575
  %v577 = vrot.slane %v549, %v576
  %v578 = vcombine.high %v556, %v556
  %v579 = vcombine.high %v563, %v563
  %v580 = vcombine.high %v570, %v570
  %v581 = vcombine.high %v577, %v577
  %v583 = vunpack.c.l.s4 1966171168
  %v584 = vunpack.c.0.s8 %v583
  %v585 = vlaneseq
  %v586 = vshrl.u32 %v585, 7
  %v587 = vsub.s32 %v584, %v586
  %v588 = vrot.slane %v528, %v587
  %v589 = vcombine.high %v588, %v588
  %v591 = vunpack.c.l.s4 1966171168
  %v592 = vunpack.c.0.s8 %v591
  %v593 = vlaneseq
  %v594 = vshrl.u32 %v593, 7
  %v595 = vsub.s32 %v592, %v594
  %v596 = vrot.slane %v588, %v595
  %v598 = vunpack.c.l.s4 1966171168
  %v599 = vunpack.c.0.s8 %v598
  %v600 = vlaneseq
  %v601 = vshrl.u32 %v600, 7
  %v602 = vsub.s32 %v599, %v601
  %v603 = vrot.slane %v589, %v602
  %v606 = vcombine.high %v438, %v438
  %v608 = vunpack.c.l.s4 1983009808
  %v609 = vunpack.c.0.s8 %v608
  %v610 = vlaneseq
  %v611 = vshrl.u32 %v610, 7
  %v612 = vsub.s32 %v609, %v611
  %v613 = vrot.slane %v438, %v612
  %v615 = vunpack.c.l.s4 1983009808
  %v616 = vunpack.c.0.s8 %v615
  %v617 = vlaneseq
  %v618 = vshrl.u32 %v617, 7
  %v619 = vsub.s32 %v616, %v618
  %v620 = vrot.slane %v606, %v619
  %v621 = vcombine.high %v613, %v613
  %v622 = vcombine.high %v620, %v620
  %v624 = vunpack.c.l.s4 1983009808
  %v625 = vunpack.c.0.s8 %v624
  %v626 = vlaneseq
  %v627 = vshrl.u32 %v626, 7
  %v628 = vsub.s32 %v625, %v627
  %v629 = vrot.slane %v443, %v628
  %v630 = vcombine.high %v629, %v629
  %v631 = vcombine.low %v556, %v570
  %v632 = vcombine.low %v578, %v580
  %v634 = vunpack.c.l.s4 1966171168
  %v635 = vunpack.c.0.s8 %v634
  %v636 = vlaneseq
  %v637 = vshrl.u32 %v636, 7
  %v638 = vsub.s32 %v635, %v637
  %v639 = vrot.slane %v631, %v638
  %v641 = vunpack.c.l.s4 1966171168
  %v642 = vunpack.c.0.s8 %v641
  %v643 = vlaneseq
  %v644 = vshrl.u32 %v643, 7
  %v645 = vsub.s32 %v642, %v644
  %v646 = vrot.slane %v632, %v645
  %v648 = vunpack.c.l.s4 1966171168
  %v649 = vunpack.c.0.s8 %v648
  %v650 = vlaneseq
  %v651 = vshrl.u32 %v650, 7
  %v652 = vsub.s32 %v649, %v651
  %v653 = vrot.slane %v563, %v652
  %v654 = vcombine.low %v639, %v646
  %v656 = vunpack.c.l.s4 1966171168
  %v657 = vunpack.c.0.s8 %v656
  %v658 = vlaneseq
  %v659 = vshrl.u32 %v658, 7
  %v660 = vsub.s32 %v657, %v659
  %v661 = vrot.slane %v654, %v660
  %v663 = vunpack.c.l.s4 1966171168
  %v664 = vunpack.c.0.s8 %v663
  %v665 = vlaneseq
  %v666 = vshrl.u32 %v665, 7
  %v667 = vsub.s32 %v664, %v666
  %v668 = vrot.slane %v653, %v667
  %v669 = vcombine.low %v661, %v668
  %v670 = vcombine.low %v613, %v621
  %v672 = vunpack.c.l.s4 1983009808
  %v673 = vunpack.c.0.s8 %v672
  %v674 = vlaneseq
  %v675 = vshrl.u32 %v674, 7
  %v676 = vsub.s32 %v673, %v675
  %v677 = vrot.slane %v670, %v676
  %v679 = vunpack.c.l.s4 1983009808
  %v680 = vunpack.c.0.s8 %v679
  %v681 = vlaneseq
  %v682 = vshrl.u32 %v681, 7
  %v683 = vsub.s32 %v680, %v682
  %v684 = vrot.slane %v620, %v683
  %v685 = vcombine.low %v677, %v684
  %v686 = vsel %vm191, %v669, 0
  %v688 = vsel %vm191, %v685, 0
  %690 = vmatprep.subr.mxu0 0.0
  %691 = vmatpush1.xpose.msra.mxu0 0.0
  %692 = vmatprep.subr.mxu0 0.0
  %693 = vmatpush1.xpose.msra.mxu0 0.0
  %694 = vmatprep.subr.mxu0 0.0
  %695 = vmatpush1.xpose.msra.mxu0 0.0
  %696 = vmatprep.subr.mxu0 0.0
  %697 = vmatpush1.xpose.msra.mxu0 0.0
  %698 = vmatprep.subr.mxu0 0.0
  %699 = vmatpush1.xpose.msra.mxu0 0.0
  %700 = vmatprep.subr.mxu0 0.0
  %701 = vmatpush1.xpose.msra.mxu0 0.0
  %702 = vmatprep.subr.mxu0 0.0
  %703 = vmatpush1.xpose.msra.mxu0 0.0
  %704 = vmatprep.subr.mxu0 0.0
  %705 = vmatpush1.xpose.msra.mxu0 0.0
  %706 = vmatprep.subr.mxu0 0.0
  %707 = vmatpush1.xpose.msra.mxu0 0.0
  %708 = vmatprep.subr.mxu0 0.0
  %709 = vmatpush1.xpose.msra.mxu0 0.0
  %710 = vmatprep.subr.mxu0 0.0
  %711 = vmatpush1.xpose.msra.mxu0 0.0
  %712 = vmatprep.subr.mxu0 0.0
  %713 = vmatpush1.xpose.msra.mxu0 0.0
  %714 = vmatprep.subr.mxu0 0.0
  %715 = vmatpush1.xpose.msra.mxu0 0.0
  %716 = vmatprep.subr.mxu0 0.0
  %717 = vmatpush1.xpose.msra.mxu0 0.0
  %718 = vmatprep.subr.mxu0 0.0
  %719 = vmatpush1.xpose.msra.mxu0 0.0
  %720 = vmatprep.subr.mxu0 0.0
  %721 = vmatpush1.xpose.msra.mxu0 %v688
  %722 = vmatprep.subr.mxu0 0.0
  %723 = vmatpush2.xpose.msra.mxu0 0.0
  %724 = vmatprep.subr.mxu0 0.0
  %725 = vmatpush2.xpose.msra.mxu0 0.0
  %726 = vmatprep.subr.mxu0 0.0
  %727 = vmatpush2.xpose.msra.mxu0 0.0
  %728 = vmatprep.subr.mxu0 0.0
  %729 = vmatpush2.xpose.msra.mxu0 0.0
  %730 = vmatprep.subr.mxu0 0.0
  %731 = vmatpush2.xpose.msra.mxu0 0.0
  %732 = vmatprep.subr.mxu0 0.0
  %733 = vmatpush2.xpose.msra.mxu0 0.0
  %734 = vmatprep.subr.mxu0 0.0
  %735 = vmatpush2.xpose.msra.mxu0 0.0
  %736 = vmatprep.subr.mxu0 0.0
  %737 = vmatpush2.xpose.msra.mxu0 0.0
  %738 = vmatprep.subr.mxu0 0.0
  %739 = vmatpush2.xpose.msra.mxu0 0.0
  %740 = vmatprep.subr.mxu0 0.0
  %741 = vmatpush2.xpose.msra.mxu0 0.0
  %742 = vmatprep.subr.mxu0 0.0
  %743 = vmatpush2.xpose.msra.mxu0 0.0
  %744 = vmatprep.subr.mxu0 0.0
  %745 = vmatpush2.xpose.msra.mxu0 0.0
  %746 = vmatprep.subr.mxu0 0.0
  %747 = vmatpush2.xpose.msra.mxu0 0.0
  %748 = vmatprep.subr.mxu0 0.0
  %749 = vmatpush2.xpose.msra.mxu0 0.0
  %750 = vmatprep.subr.mxu0 0.0
  %751 = vmatpush2.xpose.msra.mxu0 0.0
  %752 = vmatprep.subr.mxu0 0.0
  %753 = vmatpush2.xpose.msra.mxu0 0.0
  %754 = vmatprep.mubr.f32.mxu0 0.0
  %755 = vmatmul.mubr.f32.gmra.mxu0 %v686
  %v756 = vpop.f32.mrf.mxu0
  %v757 = vadd.f32 0.0, %v756
  %v758 = vpop.f32.mrf.mxu0
  %759 = vdwg.mxu0
  %v760 = vcombine.low %v577, %v579
  %v761 = vcombine.low %v581, %v596
  %v763 = vunpack.c.l.s4 1966171168
  %v764 = vunpack.c.0.s8 %v763
  %v765 = vlaneseq
  %v766 = vshrl.u32 %v765, 7
  %v767 = vsub.s32 %v764, %v766
  %v768 = vrot.slane %v760, %v767
  %v770 = vunpack.c.l.s4 1966171168
  %v771 = vunpack.c.0.s8 %v770
  %v772 = vlaneseq
  %v773 = vshrl.u32 %v772, 7
  %v774 = vsub.s32 %v771, %v773
  %v775 = vrot.slane %v761, %v774
  %v777 = vunpack.c.l.s4 1966171168
  %v778 = vunpack.c.0.s8 %v777
  %v779 = vlaneseq
  %v780 = vshrl.u32 %v779, 7
  %v781 = vsub.s32 %v778, %v780
  %v782 = vrot.slane %v603, %v781
  %v783 = vcombine.low %v768, %v775
  %v785 = vunpack.c.l.s4 1966171168
  %v786 = vunpack.c.0.s8 %v785
  %v787 = vlaneseq
  %v788 = vshrl.u32 %v787, 7
  %v789 = vsub.s32 %v786, %v788
  %v790 = vrot.slane %v783, %v789
  %v792 = vunpack.c.l.s4 1966171168
  %v793 = vunpack.c.0.s8 %v792
  %v794 = vlaneseq
  %v795 = vshrl.u32 %v794, 7
  %v796 = vsub.s32 %v793, %v795
  %v797 = vrot.slane %v782, %v796
  %v798 = vcombine.low %v790, %v797
  %v799 = vcombine.low %v622, %v629
  %v801 = vunpack.c.l.s4 1983009808
  %v802 = vunpack.c.0.s8 %v801
  %v803 = vlaneseq
  %v804 = vshrl.u32 %v803, 7
  %v805 = vsub.s32 %v802, %v804
  %v806 = vrot.slane %v799, %v805
  %v808 = vunpack.c.l.s4 1983009808
  %v809 = vunpack.c.0.s8 %v808
  %v810 = vlaneseq
  %v811 = vshrl.u32 %v810, 7
  %v812 = vsub.s32 %v809, %v811
  %v813 = vrot.slane %v630, %v812
  %v814 = vcombine.low %v806, %v813
  %v815 = vsel %vm191, %v798, 0
  %v817 = vsel %vm191, %v814, 0
  %819 = vmatprep.subr.mxu0 0.0
  %820 = vmatpush1.xpose.msra.mxu0 0.0
  %821 = vmatprep.subr.mxu0 0.0
  %822 = vmatpush1.xpose.msra.mxu0 0.0
  %823 = vmatprep.subr.mxu0 0.0
  %824 = vmatpush1.xpose.msra.mxu0 0.0
  %825 = vmatprep.subr.mxu0 0.0
  %826 = vmatpush1.xpose.msra.mxu0 0.0
  %827 = vmatprep.subr.mxu0 0.0
  %828 = vmatpush1.xpose.msra.mxu0 0.0
  %829 = vmatprep.subr.mxu0 0.0
  %830 = vmatpush1.xpose.msra.mxu0 0.0
  %831 = vmatprep.subr.mxu0 0.0
  %832 = vmatpush1.xpose.msra.mxu0 0.0
  %833 = vmatprep.subr.mxu0 0.0
  %834 = vmatpush1.xpose.msra.mxu0 0.0
  %835 = vmatprep.subr.mxu0 0.0
  %836 = vmatpush1.xpose.msra.mxu0 0.0
  %837 = vmatprep.subr.mxu0 0.0
  %838 = vmatpush1.xpose.msra.mxu0 0.0
  %839 = vmatprep.subr.mxu0 0.0
  %840 = vmatpush1.xpose.msra.mxu0 0.0
  %841 = vmatprep.subr.mxu0 0.0
  %842 = vmatpush1.xpose.msra.mxu0 0.0
  %843 = vmatprep.subr.mxu0 0.0
  %844 = vmatpush1.xpose.msra.mxu0 0.0
  %845 = vmatprep.subr.mxu0 0.0
  %846 = vmatpush1.xpose.msra.mxu0 0.0
  %847 = vmatprep.subr.mxu0 0.0
  %848 = vmatpush1.xpose.msra.mxu0 0.0
  %849 = vmatprep.subr.mxu0 0.0
  %850 = vmatpush1.xpose.msra.mxu0 %v817
  %851 = vmatprep.subr.mxu0 0.0
  %852 = vmatpush2.xpose.msra.mxu0 0.0
  %853 = vmatprep.subr.mxu0 0.0
  %854 = vmatpush2.xpose.msra.mxu0 0.0
  %855 = vmatprep.subr.mxu0 0.0
  %856 = vmatpush2.xpose.msra.mxu0 0.0
  %857 = vmatprep.subr.mxu0 0.0
  %858 = vmatpush2.xpose.msra.mxu0 0.0
  %859 = vmatprep.subr.mxu0 0.0
  %860 = vmatpush2.xpose.msra.mxu0 0.0
  %861 = vmatprep.subr.mxu0 0.0
  %862 = vmatpush2.xpose.msra.mxu0 0.0
  %863 = vmatprep.subr.mxu0 0.0
  %864 = vmatpush2.xpose.msra.mxu0 0.0
  %865 = vmatprep.subr.mxu0 0.0
  %866 = vmatpush2.xpose.msra.mxu0 0.0
  %867 = vmatprep.subr.mxu0 0.0
  %868 = vmatpush2.xpose.msra.mxu0 0.0
  %869 = vmatprep.subr.mxu0 0.0
  %870 = vmatpush2.xpose.msra.mxu0 0.0
  %871 = vmatprep.subr.mxu0 0.0
  %872 = vmatpush2.xpose.msra.mxu0 0.0
  %873 = vmatprep.subr.mxu0 0.0
  %874 = vmatpush2.xpose.msra.mxu0 0.0
  %875 = vmatprep.subr.mxu0 0.0
  %876 = vmatpush2.xpose.msra.mxu0 0.0
  %877 = vmatprep.subr.mxu0 0.0
  %878 = vmatpush2.xpose.msra.mxu0 0.0
  %879 = vmatprep.subr.mxu0 0.0
  %880 = vmatpush2.xpose.msra.mxu0 0.0
  %881 = vmatprep.subr.mxu0 0.0
  %882 = vmatpush2.xpose.msra.mxu0 0.0
  %883 = vmatprep.mubr.f32.mxu0 0.0
  %884 = vmatmul.mubr.f32.gmra.mxu0 %v815
  %v885 = vpop.f32.mrf.mxu0
  %v886 = vadd.f32 0.0, %v885
  %v887 = vpop.f32.mrf.mxu0
  %888 = vdwg.mxu0
  %vm889 = vcmask 45056
  %v890 = vsel %vm889, %v757, -inf
  %891 = vmax.xlane.f32.xlu0 %v890
  %v892 = vpop.xlane.xlu0 %891
  %v893 = vsel %vm889, %v886, -inf
  %894 = vmax.xlane.f32.xlu0 %v893
  %v895 = vpop.xlane.xlu0 %894
  %v896 = vrot.slane %v890, 4
  %v897 = vmax.f32 %v890, %v896
  %v898 = vrot.slane %v897, 2
  %v899 = vmax.f32 %v897, %v898
  %v900 = vrot.slane %v899, 1
  %v901 = vmax.f32 %v899, %v900
  %v902 = vrot.slane %v893, 4
  %v903 = vmax.f32 %v893, %v902
  %v904 = vrot.slane %v903, 2
  %v905 = vmax.f32 %v903, %v904
  %v906 = vrot.slane %v905, 1
  %v907 = vmax.f32 %v905, %v906
  %v908 = vld [vmem:[%s7] sm:$0x3]
  %v910 = vlaneseq
  %v911 = vshrl.u32 %v910, 7
  %v912 = vsub.s32 0, %v911
  %v913 = vrot.slane %v908, %v912
  %915 = vbcast.lane.b32.xlu0 %v913, 256
  %v916 = vpop.permute.xlu0 %915
  %v917 = vlaneseq
  %v918 = vshrl.u32 %v917, 7
  %v919 = vsub.s32 1, %v918
  %v920 = vrot.slane %v908, %v919
  %922 = vbcast.lane.b32.xlu0 %v920, 256
  %v923 = vpop.permute.xlu0 %922
  %v926 = vadd.f32 %v892, %v916
  %v927 = vadd.f32 %v895, %v923
  %930 = vset.pattern.permute.xlu0 0
  %931 = vperm.xlu0 %930, %v926
  %v932 = vpop.permute.xlu0 %931
  %933 = vset.pattern.permute.xlu0 0
  %934 = vperm.xlu0 %933, %v927
  %v935 = vpop.permute.xlu0 %934
  %v936 = vlaneseq
  %v937 = vand.u32 %v936, 127
  %v938 = vlaneseq
  %v939 = vshrl.u32 %v938, 7
  %v940 = vsub.s32 %v937, %v939
  %v941 = vrot.slane %v932, %v940
  %v942 = vlaneseq
  %v943 = vshrl.u32 %v942, 7
  %v944 = vsub.s32 %v937, %v943
  %v945 = vrot.slane %v935, %v944
  %vm946 = vcmask 1041409
  %v947 = vsel %vm946, %v945, %v941
  %vm949 = vcmask 33792
  %v950 = vsel %vm949, %v947, -inf
  %951 = vmax.xlane.f32.xlu0 %v950
  %v952 = vpop.xlane.xlu0 %951
  %v954 = vlaneseq
  %v955 = vshrl.u32 %v954, 7
  %v956 = vsub.s32 0, %v955
  %v957 = vrot.slane %v952, %v956
  %v958 = vlaneseq
  %v959 = vshrl.u32 %v958, 7
  %v960 = vsub.s32 1, %v959
  %v961 = vrot.slane %v952, %v960
  %vm964 = vcmp.ge.f32.partialorder %v926, %v957
  %vm965 = vcmp.ge.f32.partialorder %v927, %v961
  %967 = vbcast.lane.b32.xlu0 %v937, 256
  %v968 = vpop.permute.xlu0 %967
  %v969 = vsel %vm964, %v968, 5
  %v970 = vsel %vm965, %v968, 5
  %971 = vset.pattern.permute.xlu0 0
  %972 = vperm.xlu0 %971, %v969
  %v973 = vpop.permute.xlu0 %972
  %974 = vset.pattern.permute.xlu0 0
  %975 = vperm.xlu0 %974, %v970
  %v976 = vpop.permute.xlu0 %975
  %v977 = vlaneseq
  %v978 = vshrl.u32 %v977, 7
  %v979 = vsub.s32 %v937, %v978
  %v980 = vrot.slane %v973, %v979
  %v981 = vlaneseq
  %v982 = vshrl.u32 %v981, 7
  %v983 = vsub.s32 %v937, %v982
  %v984 = vrot.slane %v976, %v983
  %v985 = vsel %vm946, %v984, %v980
  %v986 = vsel %vm949, %v985, 2147483647
  %v987 = vand.u32 %v986, 65535
  %v988 = vshra.s32 %v986, 16
  %v989 = vcvt.s32.f32 %v987
  %v990 = vcvt.s32.f32 %v988
  %991 = vmin.xlane.f32.xlu0 %v990
  %v992 = vpop.xlane.xlu0 %991
  %vm993 = vcmp.eq.f32.partialorder %v990, %v992
  %v994 = vsel %vm993, %v989, inf
  %995 = vmin.xlane.f32.xlu0 %v994
  %v996 = vpop.xlane.xlu0 %995
  %v997 = vcvt.f32.s32 %v996
  %v998 = vcvt.f32.s32 %v992
  %v999 = vshll.u32 %v998, 16
  %v1000 = vadd.s32 %v999, %v997
  %vm1001 = vcmp.eq.s32.totalorder %v937, %v1000
  %v1002 = vsel %vm1001, 1, 0
  %v1003 = vcvt.s32.f32 %v1002
  %1004 = vst.msk [vmem:[%s9] sm:$0x3] %vm949, %v1003
  %v1005 = vld [vmem:[%s8] sm:$0x3]
  %v1007 = vrot.slane %v1005, 1
  %v1010 = vadd.f32 %v901, %v1005
  %v1011 = vadd.f32 %v907, %v1007
  %v1014 = vrot.slane %v1011, 7
  %v1015 = vsel %vm946, %v1014, %v1010
  %vm1017 = vcmask 41984
  %v1018 = vsel %vm1017, %v1015, -inf
  %1019 = vmax.xlane.f32.xlu0 %v1018
  %v1020 = vpop.xlane.xlu0 %1019
  %v1022 = vrot.slane %v1020, 1
  %vm1025 = vcmp.ge.f32.partialorder %v1010, %v1020
  %vm1026 = vcmp.ge.f32.partialorder %v1011, %v1022
  %v1027 = vsel %vm1025, %v937, 6
  %v1028 = vsel %vm1026, %v937, 6
  %v1029 = vrot.slane %v1028, 7
  %v1030 = vsel %vm946, %v1029, %v1027
  %v1031 = vsel %vm1017, %v1030, 2147483647
  %v1032 = vand.u32 %v1031, 65535
  %v1033 = vshra.s32 %v1031, 16
  %v1034 = vcvt.s32.f32 %v1032
  %v1035 = vcvt.s32.f32 %v1033
  %1036 = vmin.xlane.f32.xlu0 %v1035
  %v1037 = vpop.xlane.xlu0 %1036
  %vm1038 = vcmp.eq.f32.partialorder %v1035, %v1037
  %v1039 = vsel %vm1038, %v1034, inf
  %1040 = vmin.xlane.f32.xlu0 %v1039
  %v1041 = vpop.xlane.xlu0 %1040
  %v1042 = vcvt.f32.s32 %v1041
  %v1043 = vcvt.f32.s32 %v1037
  %v1044 = vshll.u32 %v1043, 16
  %v1045 = vadd.s32 %v1044, %v1042
  %vm1046 = vcmp.eq.s32.totalorder %v937, %v1045
  %v1047 = vsel %vm1046, 1, 0
  %v1048 = vcvt.s32.f32 %v1047
  %1049 = vst.msk [vmem:[%s10] sm:$0x3] %vm1017, %v1048
  // Predicated region
  $region38: #{mpcn_forward.12} parent=0 // pred_check
    _
  $region39: #{mpcn_forward.12} parent=0 // pred_check_branch
    %1051 = sbr.rel (0) target = $region41
  $region40: #{mpcn_forward.12} parent=0 // pred_region
    _
  $region41: #{mpcn_forward.12} parent=0 // pred_fallthru
    _
  // Predicated region
  $region42: #{mpcn_forward.12} parent=0 // pred_check
    _
  $region43: #{mpcn_forward.12} parent=0 // pred_check_branch
    %1053 = sbr.rel (0) target = $region45
  $region44: #{mpcn_forward.12} parent=0 // pred_region
    _
  $region45: #{mpcn_forward.12} parent=0 // pred_fallthru
    _
  // Predicated region
  $region46: #{mpcn_forward.12} parent=0 // pred_check
    _
  $region47: #{mpcn_forward.12} parent=0 // pred_check_branch
    %1055 = sbr.rel (0) target = $region49
  $region48: #{mpcn_forward.12} parent=0 // pred_region
    _
  $region49: #{mpcn_forward.12} parent=0 // pred_fallthru
    _
  // Predicated region
  $region50: #{mpcn_forward.12} parent=0 // pred_check
    _
  $region51: #{mpcn_forward.12} parent=0 // pred_check_branch
    %1057 = sbr.rel (0) target = $region53
  $region52: #{mpcn_forward.12} parent=0 // pred_region
    _
  $region53: #{mpcn_forward.12} parent=0 // pred_fallthru
    _

// kernel: mpcn_forward.13
$region0: #{mpcn_forward.13}
  #allocation0 [shape = 'u32[]', space=smem, size = 0x4, offset = 0x4, fixed_abs, tag = 'smem constant byte address 0x4 - core index']
  #allocation1 [shape = 'u32[144,128]{1,0:T(1,128)}', space=vmem, size = 0x12000, scoped, tag = 'internal scratch']
  %s0 = inlined_call_operand.vmem [shape: f32[2,7,32], index: 0, kind: input, shape index: {}]
  %s1 = inlined_call_operand.vmem [shape: f32[2,7,32], index: 1, kind: input, shape index: {}]
  %s2 = inlined_call_operand.vmem [shape: f32[32,32], index: 2, kind: input, shape index: {}]
  %s3 = inlined_call_operand.vmem [shape: f32[1,32], index: 3, kind: input, shape index: {}]
  %s4 = inlined_call_operand.vmem [shape: f32[32,32], index: 4, kind: input, shape index: {}]
  %s5 = inlined_call_operand.vmem [shape: f32[1,32], index: 5, kind: input, shape index: {}]
  %s6 = inlined_call_operand.vmem [shape: f32[32,32], index: 6, kind: input, shape index: {}]
  %s7 = inlined_call_operand.vmem [shape: f32[2,32], index: 7, kind: output, shape index: {0}]
  %s8 = inlined_call_operand.vmem [shape: f32[2,32], index: 8, kind: output, shape index: {1}]
  %9 = xla_tuple %s7, %s8
  %s10 = sld [smem:[#allocation0]]
  $region46: #{mpcn_forward.13} parent=0
    _
  %s12 = ssub.s32 1, %s10
  %s13 = scalar_select 0, %s12, %s10
  // Predicated region
  $region2: #{mpcn_forward.13} parent=0 // pred_check
    _
  $region3: #{mpcn_forward.13} parent=0 // pred_check_branch
    %15 = sbr.rel (0) target = $region5
  $region4: #{mpcn_forward.13} parent=0 // pred_region
    _
  $region5: #{mpcn_forward.13} parent=0 // pred_fallthru
    _
  // Predicated region
  $region6: #{mpcn_forward.13} parent=0 // pred_check
    _
  $region7: #{mpcn_forward.13} parent=0 // pred_check_branch
    %17 = sbr.rel (0) target = $region9
  $region8: #{mpcn_forward.13} parent=0 // pred_region
    _
  $region9: #{mpcn_forward.13} parent=0 // pred_fallthru
    _
  // Predicated region
  $region10: #{mpcn_forward.13} parent=0 // pred_check
    _
  $region11: #{mpcn_forward.13} parent=0 // pred_check_branch
    %19 = sbr.rel (0) target = $region13
  $region12: #{mpcn_forward.13} parent=0 // pred_region
    _
  $region13: #{mpcn_forward.13} parent=0 // pred_fallthru
    _
  // Predicated region
  $region14: #{mpcn_forward.13} parent=0 // pred_check
    _
  $region15: #{mpcn_forward.13} parent=0 // pred_check_branch
    %21 = sbr.rel (0) target = $region17
  $region16: #{mpcn_forward.13} parent=0 // pred_region
    _
  $region17: #{mpcn_forward.13} parent=0 // pred_fallthru
    _
  // Predicated region
  $region18: #{mpcn_forward.13} parent=0 // pred_check
    _
  $region19: #{mpcn_forward.13} parent=0 // pred_check_branch
    %23 = sbr.rel (0) target = $region21
  $region20: #{mpcn_forward.13} parent=0 // pred_region
    _
  $region21: #{mpcn_forward.13} parent=0 // pred_fallthru
    _
  // Predicated region
  $region22: #{mpcn_forward.13} parent=0 // pred_check
    _
  $region23: #{mpcn_forward.13} parent=0 // pred_check_branch
    %25 = sbr.rel (0) target = $region25
  $region24: #{mpcn_forward.13} parent=0 // pred_region
    _
  $region25: #{mpcn_forward.13} parent=0 // pred_fallthru
    _
  // Predicated region
  $region26: #{mpcn_forward.13} parent=0 // pred_check
    _
  $region27: #{mpcn_forward.13} parent=0 // pred_check_branch
    %27 = sbr.rel (0) target = $region29
  $region28: #{mpcn_forward.13} parent=0 // pred_region
    _
  $region29: #{mpcn_forward.13} parent=0 // pred_fallthru
    _
  %v28 = vld [vmem:[%s0] sm:$0x7f]
  %v29 = vld [vmem:[%s0 + $0x8] sm:$0x7f]
  %v32 = vcombine.high %v28, %v28
  %v34 = vunpack.c.l.s4 1966171168
  %v35 = vunpack.c.0.s8 %v34
  %v36 = vlaneseq
  %v37 = vshrl.u32 %v36, 7
  %v38 = vsub.s32 %v35, %v37
  %v39 = vrot.slane %v28, %v38
  %v41 = vunpack.c.l.s4 1966171168
  %v42 = vunpack.c.0.s8 %v41
  %v43 = vlaneseq
  %v44 = vshrl.u32 %v43, 7
  %v45 = vsub.s32 %v42, %v44
  %v46 = vrot.slane %v32, %v45
  %v47 = vcombine.high %v39, %v39
  %v48 = vcombine.high %v46, %v46
  %v50 = vunpack.c.l.s4 1966171168
  %v51 = vunpack.c.0.s8 %v50
  %v52 = vlaneseq
  %v53 = vshrl.u32 %v52, 7
  %v54 = vsub.s32 %v51, %v53
  %v55 = vrot.slane %v39, %v54
  %v57 = vunpack.c.l.s4 1966171168
  %v58 = vunpack.c.0.s8 %v57
  %v59 = vlaneseq
  %v60 = vshrl.u32 %v59, 7
  %v61 = vsub.s32 %v58, %v60
  %v62 = vrot.slane %v46, %v61
  %v64 = vunpack.c.l.s4 1966171168
  %v65 = vunpack.c.0.s8 %v64
  %v66 = vlaneseq
  %v67 = vshrl.u32 %v66, 7
  %v68 = vsub.s32 %v65, %v67
  %v69 = vrot.slane %v47, %v68
  %v71 = vunpack.c.l.s4 1966171168
  %v72 = vunpack.c.0.s8 %v71
  %v73 = vlaneseq
  %v74 = vshrl.u32 %v73, 7
  %v75 = vsub.s32 %v72, %v74
  %v76 = vrot.slane %v48, %v75
  %v77 = vcombine.high %v55, %v55
  %v78 = vcombine.high %v62, %v62
  %v79 = vcombine.high %v69, %v69
  %v80 = vcombine.high %v29, %v29
  %v82 = vunpack.c.l.s4 1966171168
  %v83 = vunpack.c.0.s8 %v82
  %v84 = vlaneseq
  %v85 = vshrl.u32 %v84, 7
  %v86 = vsub.s32 %v83, %v85
  %v87 = vrot.slane %v29, %v86
  %v89 = vunpack.c.l.s4 1966171168
  %v90 = vunpack.c.0.s8 %v89
  %v91 = vlaneseq
  %v92 = vshrl.u32 %v91, 7
  %v93 = vsub.s32 %v90, %v92
  %v94 = vrot.slane %v80, %v93
  %v95 = vcombine.high %v87, %v87
  %v96 = vcombine.high %v94, %v94
  %v98 = vunpack.c.l.s4 1966171168
  %v99 = vunpack.c.0.s8 %v98
  %v100 = vlaneseq
  %v101 = vshrl.u32 %v100, 7
  %v102 = vsub.s32 %v99, %v101
  %v103 = vrot.slane %v87, %v102
  %v105 = vunpack.c.l.s4 1966171168
  %v106 = vunpack.c.0.s8 %v105
  %v107 = vlaneseq
  %v108 = vshrl.u32 %v107, 7
  %v109 = vsub.s32 %v106, %v108
  %v110 = vrot.slane %v94, %v109
  %v112 = vunpack.c.l.s4 1966171168
  %v113 = vunpack.c.0.s8 %v112
  %v114 = vlaneseq
  %v115 = vshrl.u32 %v114, 7
  %v116 = vsub.s32 %v113, %v115
  %v117 = vrot.slane %v95, %v116
  %v119 = vunpack.c.l.s4 1966171168
  %v120 = vunpack.c.0.s8 %v119
  %v121 = vlaneseq
  %v122 = vshrl.u32 %v121, 7
  %v123 = vsub.s32 %v120, %v122
  %v124 = vrot.slane %v96, %v123
  %v125 = vcombine.high %v103, %v103
  %v126 = vcombine.high %v110, %v110
  %v127 = vcombine.high %v117, %v117
  %v128 = vld [vmem:[%s2] sm:$0xff]
  %v129 = vld [vmem:[%s2 + $0x8] sm:$0xff]
  %v130 = vld [vmem:[%s2 + $0x10] sm:$0xff]
  %v131 = vld [vmem:[%s2 + $0x18] sm:$0xff]
  %v132 = vld [vmem:[%s3] sm:$0x1]
  %v134 = vlaneseq
  %v135 = vshrl.u32 %v134, 7
  %v136 = vsub.s32 0, %v135
  %v137 = vrot.slane %v132, %v136
  %v139 = vcombine.low %v55, %v69
  %v140 = vcombine.low %v77, %v79
  %v141 = vcombine.low %v62, %v76
  %v142 = vcombine.low %v78, %v103
  %v144 = vunpack.c.l.s4 1966171168
  %v145 = vunpack.c.0.s8 %v144
  %v146 = vlaneseq
  %v147 = vshrl.u32 %v146, 7
  %v148 = vsub.s32 %v145, %v147
  %v149 = vrot.slane %v139, %v148
  %v151 = vunpack.c.l.s4 1966171168
  %v152 = vunpack.c.0.s8 %v151
  %v153 = vlaneseq
  %v154 = vshrl.u32 %v153, 7
  %v155 = vsub.s32 %v152, %v154
  %v156 = vrot.slane %v140, %v155
  %v158 = vunpack.c.l.s4 1966171168
  %v159 = vunpack.c.0.s8 %v158
  %v160 = vlaneseq
  %v161 = vshrl.u32 %v160, 7
  %v162 = vsub.s32 %v159, %v161
  %v163 = vrot.slane %v141, %v162
  %v165 = vunpack.c.l.s4 1966171168
  %v166 = vunpack.c.0.s8 %v165
  %v167 = vlaneseq
  %v168 = vshrl.u32 %v167, 7
  %v169 = vsub.s32 %v166, %v168
  %v170 = vrot.slane %v142, %v169
  %v171 = vcombine.low %v149, %v156
  %v172 = vcombine.low %v163, %v170
  %v174 = vunpack.c.l.s4 1966171168
  %v175 = vunpack.c.0.s8 %v174
  %v176 = vlaneseq
  %v177 = vshrl.u32 %v176, 7
  %v178 = vsub.s32 %v175, %v177
  %v179 = vrot.slane %v171, %v178
  %v181 = vunpack.c.l.s4 1966171168
  %v182 = vunpack.c.0.s8 %v181
  %v183 = vlaneseq
  %v184 = vshrl.u32 %v183, 7
  %v185 = vsub.s32 %v182, %v184
  %v186 = vrot.slane %v172, %v185
  %v187 = vcombine.low %v179, %v186
  %v188 = vcombine.low %v117, %v125
  %v189 = vcombine.low %v127, %v110
  %v190 = vcombine.low %v124, %v126
  %v192 = vunpack.c.l.s4 1966171168
  %v193 = vunpack.c.0.s8 %v192
  %v194 = vlaneseq
  %v195 = vshrl.u32 %v194, 7
  %v196 = vsub.s32 %v193, %v195
  %v197 = vrot.slane %v188, %v196
  %v199 = vunpack.c.l.s4 1966171168
  %v200 = vunpack.c.0.s8 %v199
  %v201 = vlaneseq
  %v202 = vshrl.u32 %v201, 7
  %v203 = vsub.s32 %v200, %v202
  %v204 = vrot.slane %v189, %v203
  %v206 = vunpack.c.l.s4 1966171168
  %v207 = vunpack.c.0.s8 %v206
  %v208 = vlaneseq
  %v209 = vshrl.u32 %v208, 7
  %v210 = vsub.s32 %v207, %v209
  %v211 = vrot.slane %v190, %v210
  %v212 = vcombine.low %v197, %v204
  %v214 = vunpack.c.l.s4 1966171168
  %v215 = vunpack.c.0.s8 %v214
  %v216 = vlaneseq
  %v217 = vshrl.u32 %v216, 7
  %v218 = vsub.s32 %v215, %v217
  %v219 = vrot.slane %v212, %v218
  %v221 = vunpack.c.l.s4 1966171168
  %v222 = vunpack.c.0.s8 %v221
  %v223 = vlaneseq
  %v224 = vshrl.u32 %v223, 7
  %v225 = vsub.s32 %v222, %v224
  %v226 = vrot.slane %v211, %v225
  %v227 = vcombine.low %v219, %v226
  %vm228 = vcmask 261120
  %v229 = vsel %vm228, %v187, 0
  %v231 = vsel %vm228, %v227, 0
  %v234 = vsel %vm228, %v128, 0
  %v237 = vsel %vm228, %v129, 0
  %v240 = vsel %vm228, %v130, 0
  %v243 = vsel %vm228, %v131, 0
  %245 = vmatprep.subr.mxu0 0.0
  %246 = vmatpush1.xpose.msra.mxu0 0.0
  %247 = vmatprep.subr.mxu0 0.0
  %248 = vmatpush1.xpose.msra.mxu0 0.0
  %249 = vmatprep.subr.mxu0 0.0
  %250 = vmatpush1.xpose.msra.mxu0 0.0
  %251 = vmatprep.subr.mxu0 0.0
  %252 = vmatpush1.xpose.msra.mxu0 0.0
  %253 = vmatprep.subr.mxu0 0.0
  %254 = vmatpush1.xpose.msra.mxu0 0.0
  %255 = vmatprep.subr.mxu0 0.0
  %256 = vmatpush1.xpose.msra.mxu0 0.0
  %257 = vmatprep.subr.mxu0 0.0
  %258 = vmatpush1.xpose.msra.mxu0 0.0
  %259 = vmatprep.subr.mxu0 0.0
  %260 = vmatpush1.xpose.msra.mxu0 0.0
  %261 = vmatprep.subr.mxu0 0.0
  %262 = vmatpush1.xpose.msra.mxu0 0.0
  %263 = vmatprep.subr.mxu0 0.0
  %264 = vmatpush1.xpose.msra.mxu0 0.0
  %265 = vmatprep.subr.mxu0 0.0
  %266 = vmatpush1.xpose.msra.mxu0 0.0
  %267 = vmatprep.subr.mxu0 0.0
  %268 = vmatpush1.xpose.msra.mxu0 0.0
  %269 = vmatprep.subr.mxu0 0.0
  %270 = vmatpush1.xpose.msra.mxu0 %v243
  %271 = vmatprep.subr.mxu0 0.0
  %272 = vmatpush1.xpose.msra.mxu0 %v240
  %273 = vmatprep.subr.mxu0 0.0
  %274 = vmatpush1.xpose.msra.mxu0 %v237
  %275 = vmatprep.subr.mxu0 0.0
  %276 = vmatpush1.xpose.msra.mxu0 %v234
  %277 = vmatprep.subr.mxu0 0.0
  %278 = vmatpush2.xpose.msra.mxu0 0.0
  %279 = vmatprep.subr.mxu0 0.0
  %280 = vmatpush2.xpose.msra.mxu0 0.0
  %281 = vmatprep.subr.mxu0 0.0
  %282 = vmatpush2.xpose.msra.mxu0 0.0
  %283 = vmatprep.subr.mxu0 0.0
  %284 = vmatpush2.xpose.msra.mxu0 0.0
  %285 = vmatprep.subr.mxu0 0.0
  %286 = vmatpush2.xpose.msra.mxu0 0.0
  %287 = vmatprep.subr.mxu0 0.0
  %288 = vmatpush2.xpose.msra.mxu0 0.0
  %289 = vmatprep.subr.mxu0 0.0
  %290 = vmatpush2.xpose.msra.mxu0 0.0
  %291 = vmatprep.subr.mxu0 0.0
  %292 = vmatpush2.xpose.msra.mxu0 0.0
  %293 = vmatprep.subr.mxu0 0.0
  %294 = vmatpush2.xpose.msra.mxu0 0.0
  %295 = vmatprep.subr.mxu0 0.0
  %296 = vmatpush2.xpose.msra.mxu0 0.0
  %297 = vmatprep.subr.mxu0 0.0
  %298 = vmatpush2.xpose.msra.mxu0 0.0
  %299 = vmatprep.subr.mxu0 0.0
  %300 = vmatpush2.xpose.msra.mxu0 0.0
  %301 = vmatprep.subr.mxu0 0.0
  %302 = vmatpush2.xpose.msra.mxu0 0.0
  %303 = vmatprep.subr.mxu0 0.0
  %304 = vmatpush2.xpose.msra.mxu0 0.0
  %305 = vmatprep.subr.mxu0 0.0
  %306 = vmatpush2.xpose.msra.mxu0 0.0
  %307 = vmatprep.subr.mxu0 0.0
  %308 = vmatpush2.xpose.msra.mxu0 0.0
  %309 = vmatprep.mubr.f32.mxu0 0.0
  %310 = vmatmul.mubr.f32.gmra.mxu0 %v229
  %v311 = vpop.f32.mrf.mxu0
  %v312 = vadd.f32 %v137, %v311
  %v313 = vpop.f32.mrf.mxu0
  %314 = vmatprep.mubr.f32.mxu0 0.0
  %315 = vmatmul.mubr.f32.gmra.mxu0 %v231
  %v316 = vpop.f32.mrf.mxu0
  %v317 = vadd.f32 %v137, %v316
  %v318 = vpop.f32.mrf.mxu0
  %319 = vdwg.mxu0
  %v320 = vld [vmem:[%s1] sm:$0x7f]
  %v321 = vld [vmem:[%s1 + $0x8] sm:$0x7f]
  %v324 = vcombine.high %v320, %v320
  %v326 = vunpack.c.l.s4 1966171168
  %v327 = vunpack.c.0.s8 %v326
  %v328 = vlaneseq
  %v329 = vshrl.u32 %v328, 7
  %v330 = vsub.s32 %v327, %v329
  %v331 = vrot.slane %v320, %v330
  %v333 = vunpack.c.l.s4 1966171168
  %v334 = vunpack.c.0.s8 %v333
  %v335 = vlaneseq
  %v336 = vshrl.u32 %v335, 7
  %v337 = vsub.s32 %v334, %v336
  %v338 = vrot.slane %v324, %v337
  %v339 = vcombine.high %v331, %v331
  %v340 = vcombine.high %v338, %v338
  %v342 = vunpack.c.l.s4 1966171168
  %v343 = vunpack.c.0.s8 %v342
  %v344 = vlaneseq
  %v345 = vshrl.u32 %v344, 7
  %v346 = vsub.s32 %v343, %v345
  %v347 = vrot.slane %v331, %v346
  %v349 = vunpack.c.l.s4 1966171168
  %v350 = vunpack.c.0.s8 %v349
  %v351 = vlaneseq
  %v352 = vshrl.u32 %v351, 7
  %v353 = vsub.s32 %v350, %v352
  %v354 = vrot.slane %v338, %v353
  %v356 = vunpack.c.l.s4 1966171168
  %v357 = vunpack.c.0.s8 %v356
  %v358 = vlaneseq
  %v359 = vshrl.u32 %v358, 7
  %v360 = vsub.s32 %v357, %v359
  %v361 = vrot.slane %v339, %v360
  %v363 = vunpack.c.l.s4 1966171168
  %v364 = vunpack.c.0.s8 %v363
  %v365 = vlaneseq
  %v366 = vshrl.u32 %v365, 7
  %v367 = vsub.s32 %v364, %v366
  %v368 = vrot.slane %v340, %v367
  %v369 = vcombine.high %v347, %v347
  %v370 = vcombine.high %v354, %v354
  %v371 = vcombine.high %v361, %v361
  %v372 = vcombine.high %v321, %v321
  %v374 = vunpack.c.l.s4 1966171168
  %v375 = vunpack.c.0.s8 %v374
  %v376 = vlaneseq
  %v377 = vshrl.u32 %v376, 7
  %v378 = vsub.s32 %v375, %v377
  %v379 = vrot.slane %v321, %v378
  %v381 = vunpack.c.l.s4 1966171168
  %v382 = vunpack.c.0.s8 %v381
  %v383 = vlaneseq
  %v384 = vshrl.u32 %v383, 7
  %v385 = vsub.s32 %v382, %v384
  %v386 = vrot.slane %v372, %v385
  %v387 = vcombine.high %v379, %v379
  %v388 = vcombine.high %v386, %v386
  %v390 = vunpack.c.l.s4 1966171168
  %v391 = vunpack.c.0.s8 %v390
  %v392 = vlaneseq
  %v393 = vshrl.u32 %v392, 7
  %v394 = vsub.s32 %v391, %v393
  %v395 = vrot.slane %v379, %v394
  %v397 = vunpack.c.l.s4 1966171168
  %v398 = vunpack.c.0.s8 %v397
  %v399 = vlaneseq
  %v400 = vshrl.u32 %v399, 7
  %v401 = vsub.s32 %v398, %v400
  %v402 = vrot.slane %v386, %v401
  %v404 = vunpack.c.l.s4 1966171168
  %v405 = vunpack.c.0.s8 %v404
  %v406 = vlaneseq
  %v407 = vshrl.u32 %v406, 7
  %v408 = vsub.s32 %v405, %v407
  %v409 = vrot.slane %v387, %v408
  %v411 = vunpack.c.l.s4 1966171168
  %v412 = vunpack.c.0.s8 %v411
  %v413 = vlaneseq
  %v414 = vshrl.u32 %v413, 7
  %v415 = vsub.s32 %v412, %v414
  %v416 = vrot.slane %v388, %v415
  %v417 = vcombine.high %v395, %v395
  %v418 = vcombine.high %v402, %v402
  %v419 = vcombine.high %v409, %v409
  %v420 = vld [vmem:[%s4] sm:$0xff]
  %v421 = vld [vmem:[%s4 + $0x8] sm:$0xff]
  %v422 = vld [vmem:[%s4 + $0x10] sm:$0xff]
  %v423 = vld [vmem:[%s4 + $0x18] sm:$0xff]
  %v424 = vld [vmem:[%s5] sm:$0x1]
  %v426 = vlaneseq
  %v427 = vshrl.u32 %v426, 7
  %v428 = vsub.s32 0, %v427
  %v429 = vrot.slane %v424, %v428
  %v431 = vcombine.low %v347, %v361
  %v432 = vcombine.low %v369, %v371
  %v433 = vcombine.low %v354, %v368
  %v434 = vcombine.low %v370, %v395
  %v436 = vunpack.c.l.s4 1966171168
  %v437 = vunpack.c.0.s8 %v436
  %v438 = vlaneseq
  %v439 = vshrl.u32 %v438, 7
  %v440 = vsub.s32 %v437, %v439
  %v441 = vrot.slane %v431, %v440
  %v443 = vunpack.c.l.s4 1966171168
  %v444 = vunpack.c.0.s8 %v443
  %v445 = vlaneseq
  %v446 = vshrl.u32 %v445, 7
  %v447 = vsub.s32 %v444, %v446
  %v448 = vrot.slane %v432, %v447
  %v450 = vunpack.c.l.s4 1966171168
  %v451 = vunpack.c.0.s8 %v450
  %v452 = vlaneseq
  %v453 = vshrl.u32 %v452, 7
  %v454 = vsub.s32 %v451, %v453
  %v455 = vrot.slane %v433, %v454
  %v457 = vunpack.c.l.s4 1966171168
  %v458 = vunpack.c.0.s8 %v457
  %v459 = vlaneseq
  %v460 = vshrl.u32 %v459, 7
  %v461 = vsub.s32 %v458, %v460
  %v462 = vrot.slane %v434, %v461
  %v463 = vcombine.low %v441, %v448
  %v464 = vcombine.low %v455, %v462
  %v466 = vunpack.c.l.s4 1966171168
  %v467 = vunpack.c.0.s8 %v466
  %v468 = vlaneseq
  %v469 = vshrl.u32 %v468, 7
  %v470 = vsub.s32 %v467, %v469
  %v471 = vrot.slane %v463, %v470
  %v473 = vunpack.c.l.s4 1966171168
  %v474 = vunpack.c.0.s8 %v473
  %v475 = vlaneseq
  %v476 = vshrl.u32 %v475, 7
  %v477 = vsub.s32 %v474, %v476
  %v478 = vrot.slane %v464, %v477
  %v479 = vcombine.low %v471, %v478
  %v480 = vcombine.low %v409, %v417
  %v481 = vcombine.low %v419, %v402
  %v482 = vcombine.low %v416, %v418
  %v484 = vunpack.c.l.s4 1966171168
  %v485 = vunpack.c.0.s8 %v484
  %v486 = vlaneseq
  %v487 = vshrl.u32 %v486, 7
  %v488 = vsub.s32 %v485, %v487
  %v489 = vrot.slane %v480, %v488
  %v491 = vunpack.c.l.s4 1966171168
  %v492 = vunpack.c.0.s8 %v491
  %v493 = vlaneseq
  %v494 = vshrl.u32 %v493, 7
  %v495 = vsub.s32 %v492, %v494
  %v496 = vrot.slane %v481, %v495
  %v498 = vunpack.c.l.s4 1966171168
  %v499 = vunpack.c.0.s8 %v498
  %v500 = vlaneseq
  %v501 = vshrl.u32 %v500, 7
  %v502 = vsub.s32 %v499, %v501
  %v503 = vrot.slane %v482, %v502
  %v504 = vcombine.low %v489, %v496
  %v506 = vunpack.c.l.s4 1966171168
  %v507 = vunpack.c.0.s8 %v506
  %v508 = vlaneseq
  %v509 = vshrl.u32 %v508, 7
  %v510 = vsub.s32 %v507, %v509
  %v511 = vrot.slane %v504, %v510
  %v513 = vunpack.c.l.s4 1966171168
  %v514 = vunpack.c.0.s8 %v513
  %v515 = vlaneseq
  %v516 = vshrl.u32 %v515, 7
  %v517 = vsub.s32 %v514, %v516
  %v518 = vrot.slane %v503, %v517
  %v519 = vcombine.low %v511, %v518
  %v520 = vsel %vm228, %v479, 0
  %v522 = vsel %vm228, %v519, 0
  %v525 = vsel %vm228, %v420, 0
  %v528 = vsel %vm228, %v421, 0
  %v531 = vsel %vm228, %v422, 0
  %v534 = vsel %vm228, %v423, 0
  %536 = vmatprep.subr.mxu0 0.0
  %537 = vmatpush1.xpose.msra.mxu0 0.0
  %538 = vmatprep.subr.mxu0 0.0
  %539 = vmatpush1.xpose.msra.mxu0 0.0
  %540 = vmatprep.subr.mxu0 0.0
  %541 = vmatpush1.xpose.msra.mxu0 0.0
  %542 = vmatprep.subr.mxu0 0.0
  %543 = vmatpush1.xpose.msra.mxu0 0.0
  %544 = vmatprep.subr.mxu0 0.0
  %545 = vmatpush1.xpose.msra.mxu0 0.0
  %546 = vmatprep.subr.mxu0 0.0
  %547 = vmatpush1.xpose.msra.mxu0 0.0
  %548 = vmatprep.subr.mxu0 0.0
  %549 = vmatpush1.xpose.msra.mxu0 0.0
  %550 = vmatprep.subr.mxu0 0.0
  %551 = vmatpush1.xpose.msra.mxu0 0.0
  %552 = vmatprep.subr.mxu0 0.0
  %553 = vmatpush1.xpose.msra.mxu0 0.0
  %554 = vmatprep.subr.mxu0 0.0
  %555 = vmatpush1.xpose.msra.mxu0 0.0
  %556 = vmatprep.subr.mxu0 0.0
  %557 = vmatpush1.xpose.msra.mxu0 0.0
  %558 = vmatprep.subr.mxu0 0.0
  %559 = vmatpush1.xpose.msra.mxu0 0.0
  %560 = vmatprep.subr.mxu0 0.0
  %561 = vmatpush1.xpose.msra.mxu0 %v534
  %562 = vmatprep.subr.mxu0 0.0
  %563 = vmatpush1.xpose.msra.mxu0 %v531
  %564 = vmatprep.subr.mxu0 0.0
  %565 = vmatpush1.xpose.msra.mxu0 %v528
  %566 = vmatprep.subr.mxu0 0.0
  %567 = vmatpush1.xpose.msra.mxu0 %v525
  %568 = vmatprep.subr.mxu0 0.0
  %569 = vmatpush2.xpose.msra.mxu0 0.0
  %570 = vmatprep.subr.mxu0 0.0
  %571 = vmatpush2.xpose.msra.mxu0 0.0
  %572 = vmatprep.subr.mxu0 0.0
  %573 = vmatpush2.xpose.msra.mxu0 0.0
  %574 = vmatprep.subr.mxu0 0.0
  %575 = vmatpush2.xpose.msra.mxu0 0.0
  %576 = vmatprep.subr.mxu0 0.0
  %577 = vmatpush2.xpose.msra.mxu0 0.0
  %578 = vmatprep.subr.mxu0 0.0
  %579 = vmatpush2.xpose.msra.mxu0 0.0
  %580 = vmatprep.subr.mxu0 0.0
  %581 = vmatpush2.xpose.msra.mxu0 0.0
  %582 = vmatprep.subr.mxu0 0.0
  %583 = vmatpush2.xpose.msra.mxu0 0.0
  %584 = vmatprep.subr.mxu0 0.0
  %585 = vmatpush2.xpose.msra.mxu0 0.0
  %586 = vmatprep.subr.mxu0 0.0
  %587 = vmatpush2.xpose.msra.mxu0 0.0
  %588 = vmatprep.subr.mxu0 0.0
  %589 = vmatpush2.xpose.msra.mxu0 0.0
  %590 = vmatprep.subr.mxu0 0.0
  %591 = vmatpush2.xpose.msra.mxu0 0.0
  %592 = vmatprep.subr.mxu0 0.0
  %593 = vmatpush2.xpose.msra.mxu0 0.0
  %594 = vmatprep.subr.mxu0 0.0
  %595 = vmatpush2.xpose.msra.mxu0 0.0
  %596 = vmatprep.subr.mxu0 0.0
  %597 = vmatpush2.xpose.msra.mxu0 0.0
  %598 = vmatprep.subr.mxu0 0.0
  %599 = vmatpush2.xpose.msra.mxu0 0.0
  %600 = vmatprep.mubr.f32.mxu0 0.0
  %601 = vmatmul.mubr.f32.gmra.mxu0 %v520
  %v602 = vpop.f32.mrf.mxu0
  %v603 = vadd.f32 %v429, %v602
  %v604 = vpop.f32.mrf.mxu0
  %605 = vmatprep.mubr.f32.mxu0 0.0
  %606 = vmatmul.mubr.f32.gmra.mxu0 %v522
  %v607 = vpop.f32.mrf.mxu0
  %v608 = vadd.f32 %v429, %v607
  %v609 = vpop.f32.mrf.mxu0
  %610 = vdwg.mxu0
  %v611 = vld [vmem:[%s6] sm:$0xff]
  %v612 = vld [vmem:[%s6 + $0x8] sm:$0xff]
  %v613 = vld [vmem:[%s6 + $0x10] sm:$0xff]
  %v614 = vld [vmem:[%s6 + $0x18] sm:$0xff]
  %v616 = vsel %vm228, %v312, 0
  %v619 = vsel %vm228, %v317, 0
  %621 = vmatprep.subr.mxu0 0.0
  %622 = vmatpush1.msra.mxu0 0.0
  %623 = vmatprep.subr.mxu0 0.0
  %624 = vmatpush1.msra.mxu0 0.0
  %625 = vmatprep.subr.mxu0 0.0
  %626 = vmatpush1.msra.mxu0 0.0
  %627 = vmatprep.subr.mxu0 0.0
  %628 = vmatpush1.msra.mxu0 0.0
  %629 = vmatprep.subr.mxu0 0.0
  %630 = vmatpush1.msra.mxu0 0.0
  %631 = vmatprep.subr.mxu0 0.0
  %632 = vmatpush1.msra.mxu0 0.0
  %633 = vmatprep.subr.mxu0 0.0
  %634 = vmatpush1.msra.mxu0 0.0
  %635 = vmatprep.subr.mxu0 0.0
  %636 = vmatpush1.msra.mxu0 0.0
  %637 = vmatprep.subr.mxu0 0.0
  %638 = vmatpush1.msra.mxu0 0.0
  %639 = vmatprep.subr.mxu0 0.0
  %640 = vmatpush1.msra.mxu0 0.0
  %641 = vmatprep.subr.mxu0 0.0
  %642 = vmatpush1.msra.mxu0 0.0
  %643 = vmatprep.subr.mxu0 0.0
  %644 = vmatpush1.msra.mxu0 0.0
  %645 = vmatprep.subr.mxu0 0.0
  %646 = vmatpush1.msra.mxu0 %v614
  %647 = vmatprep.subr.mxu0 0.0
  %648 = vmatpush1.msra.mxu0 %v613
  %649 = vmatprep.subr.mxu0 0.0
  %650 = vmatpush1.msra.mxu0 %v612
  %651 = vmatprep.subr.mxu0 0.0
  %652 = vmatpush1.msra.mxu0 %v611
  %653 = vmatprep.subr.mxu0 0.0
  %654 = vmatpush2.msra.mxu0 0.0
  %655 = vmatprep.subr.mxu0 0.0
  %656 = vmatpush2.msra.mxu0 0.0
  %657 = vmatprep.subr.mxu0 0.0
  %658 = vmatpush2.msra.mxu0 0.0
  %659 = vmatprep.subr.mxu0 0.0
  %660 = vmatpush2.msra.mxu0 0.0
  %661 = vmatprep.subr.mxu0 0.0
  %662 = vmatpush2.msra.mxu0 0.0
  %663 = vmatprep.subr.mxu0 0.0
  %664 = vmatpush2.msra.mxu0 0.0
  %665 = vmatprep.subr.mxu0 0.0
  %666 = vmatpush2.msra.mxu0 0.0
  %667 = vmatprep.subr.mxu0 0.0
  %668 = vmatpush2.msra.mxu0 0.0
  %669 = vmatprep.subr.mxu0 0.0
  %670 = vmatpush2.msra.mxu0 0.0
  %671 = vmatprep.subr.mxu0 0.0
  %672 = vmatpush2.msra.mxu0 0.0
  %673 = vmatprep.subr.mxu0 0.0
  %674 = vmatpush2.msra.mxu0 0.0
  %675 = vmatprep.subr.mxu0 0.0
  %676 = vmatpush2.msra.mxu0 0.0
  %677 = vmatprep.subr.mxu0 0.0
  %678 = vmatpush2.msra.mxu0 0.0
  %679 = vmatprep.subr.mxu0 0.0
  %680 = vmatpush2.msra.mxu0 0.0
  %681 = vmatprep.subr.mxu0 0.0
  %682 = vmatpush2.msra.mxu0 0.0
  %683 = vmatprep.subr.mxu0 0.0
  %684 = vmatpush2.msra.mxu0 0.0
  %685 = vmatprep.mubr.f32.mxu0 0.0
  %686 = vmatmul.mubr.f32.gmra.mxu0 %v616
  %v687 = vpop.f32.mrf.mxu0
  %v688 = vadd.f32 0.0, %v687
  %v689 = vpop.f32.mrf.mxu0
  %690 = vmatprep.mubr.f32.mxu0 0.0
  %691 = vmatmul.mubr.f32.gmra.mxu0 %v619
  %v692 = vpop.f32.mrf.mxu0
  %v693 = vadd.f32 0.0, %v692
  %v694 = vpop.f32.mrf.mxu0
  %695 = vdwg.mxu0
  %v698 = vcombine.high %v688, %v688
  %v700 = vunpack.c.l.s4 1966171168
  %v701 = vunpack.c.0.s8 %v700
  %v702 = vlaneseq
  %v703 = vshrl.u32 %v702, 7
  %v704 = vsub.s32 %v701, %v703
  %v705 = vrot.slane %v688, %v704
  %v707 = vunpack.c.l.s4 1966171168
  %v708 = vunpack.c.0.s8 %v707
  %v709 = vlaneseq
  %v710 = vshrl.u32 %v709, 7
  %v711 = vsub.s32 %v708, %v710
  %v712 = vrot.slane %v698, %v711
  %v713 = vcombine.high %v705, %v705
  %v714 = vcombine.high %v712, %v712
  %v716 = vunpack.c.l.s4 1966171168
  %v717 = vunpack.c.0.s8 %v716
  %v718 = vlaneseq
  %v719 = vshrl.u32 %v718, 7
  %v720 = vsub.s32 %v717, %v719
  %v721 = vrot.slane %v705, %v720
  %v723 = vunpack.c.l.s4 1966171168
  %v724 = vunpack.c.0.s8 %v723
  %v725 = vlaneseq
  %v726 = vshrl.u32 %v725, 7
  %v727 = vsub.s32 %v724, %v726
  %v728 = vrot.slane %v712, %v727
  %v730 = vunpack.c.l.s4 1966171168
  %v731 = vunpack.c.0.s8 %v730
  %v732 = vlaneseq
  %v733 = vshrl.u32 %v732, 7
  %v734 = vsub.s32 %v731, %v733
  %v735 = vrot.slane %v713, %v734
  %v737 = vunpack.c.l.s4 1966171168
  %v738 = vunpack.c.0.s8 %v737
  %v739 = vlaneseq
  %v740 = vshrl.u32 %v739, 7
  %v741 = vsub.s32 %v738, %v740
  %v742 = vrot.slane %v714, %v741
  %v743 = vcombine.high %v721, %v721
  %v744 = vcombine.high %v728, %v728
  %v745 = vcombine.high %v735, %v735
  %v746 = vcombine.high %v742, %v742
  %v747 = vcombine.high %v693, %v693
  %v749 = vunpack.c.l.s4 1966171168
  %v750 = vunpack.c.0.s8 %v749
  %v751 = vlaneseq
  %v752 = vshrl.u32 %v751, 7
  %v753 = vsub.s32 %v750, %v752
  %v754 = vrot.slane %v693, %v753
  %v756 = vunpack.c.l.s4 1966171168
  %v757 = vunpack.c.0.s8 %v756
  %v758 = vlaneseq
  %v759 = vshrl.u32 %v758, 7
  %v760 = vsub.s32 %v757, %v759
  %v761 = vrot.slane %v747, %v760
  %v762 = vcombine.high %v754, %v754
  %v763 = vcombine.high %v761, %v761
  %v765 = vunpack.c.l.s4 1966171168
  %v766 = vunpack.c.0.s8 %v765
  %v767 = vlaneseq
  %v768 = vshrl.u32 %v767, 7
  %v769 = vsub.s32 %v766, %v768
  %v770 = vrot.slane %v754, %v769
  %v772 = vunpack.c.l.s4 1966171168
  %v773 = vunpack.c.0.s8 %v772
  %v774 = vlaneseq
  %v775 = vshrl.u32 %v774, 7
  %v776 = vsub.s32 %v773, %v775
  %v777 = vrot.slane %v761, %v776
  %v779 = vunpack.c.l.s4 1966171168
  %v780 = vunpack.c.0.s8 %v779
  %v781 = vlaneseq
  %v782 = vshrl.u32 %v781, 7
  %v783 = vsub.s32 %v780, %v782
  %v784 = vrot.slane %v762, %v783
  %v786 = vunpack.c.l.s4 1966171168
  %v787 = vunpack.c.0.s8 %v786
  %v788 = vlaneseq
  %v789 = vshrl.u32 %v788, 7
  %v790 = vsub.s32 %v787, %v789
  %v791 = vrot.slane %v763, %v790
  %v792 = vcombine.high %v770, %v770
  %v793 = vcombine.high %v784, %v784
  %v796 = vcombine.high %v603, %v603
  %v798 = vunpack.c.l.s4 1966171168
  %v799 = vunpack.c.0.s8 %v798
  %v800 = vlaneseq
  %v801 = vshrl.u32 %v800, 7
  %v802 = vsub.s32 %v799, %v801
  %v803 = vrot.slane %v603, %v802
  %v805 = vunpack.c.l.s4 1966171168
  %v806 = vunpack.c.0.s8 %v805
  %v807 = vlaneseq
  %v808 = vshrl.u32 %v807, 7
  %v809 = vsub.s32 %v806, %v808
  %v810 = vrot.slane %v796, %v809
  %v811 = vcombine.high %v803, %v803
  %v812 = vcombine.high %v810, %v810
  %v814 = vunpack.c.l.s4 1966171168
  %v815 = vunpack.c.0.s8 %v814
  %v816 = vlaneseq
  %v817 = vshrl.u32 %v816, 7
  %v818 = vsub.s32 %v815, %v817
  %v819 = vrot.slane %v803, %v818
  %v821 = vunpack.c.l.s4 1966171168
  %v822 = vunpack.c.0.s8 %v821
  %v823 = vlaneseq
  %v824 = vshrl.u32 %v823, 7
  %v825 = vsub.s32 %v822, %v824
  %v826 = vrot.slane %v810, %v825
  %v828 = vunpack.c.l.s4 1966171168
  %v829 = vunpack.c.0.s8 %v828
  %v830 = vlaneseq
  %v831 = vshrl.u32 %v830, 7
  %v832 = vsub.s32 %v829, %v831
  %v833 = vrot.slane %v811, %v832
  %v835 = vunpack.c.l.s4 1966171168
  %v836 = vunpack.c.0.s8 %v835
  %v837 = vlaneseq
  %v838 = vshrl.u32 %v837, 7
  %v839 = vsub.s32 %v836, %v838
  %v840 = vrot.slane %v812, %v839
  %v841 = vcombine.high %v819, %v819
  %v842 = vcombine.high %v826, %v826
  %v843 = vcombine.high %v833, %v833
  %v844 = vcombine.high %v840, %v840
  %v845 = vcombine.high %v608, %v608
  %v847 = vunpack.c.l.s4 1966171168
  %v848 = vunpack.c.0.s8 %v847
  %v849 = vlaneseq
  %v850 = vshrl.u32 %v849, 7
  %v851 = vsub.s32 %v848, %v850
  %v852 = vrot.slane %v608, %v851
  %v854 = vunpack.c.l.s4 1966171168
  %v855 = vunpack.c.0.s8 %v854
  %v856 = vlaneseq
  %v857 = vshrl.u32 %v856, 7
  %v858 = vsub.s32 %v855, %v857
  %v859 = vrot.slane %v845, %v858
  %v860 = vcombine.high %v852, %v852
  %v861 = vcombine.high %v859, %v859
  %v863 = vunpack.c.l.s4 1966171168
  %v864 = vunpack.c.0.s8 %v863
  %v865 = vlaneseq
  %v866 = vshrl.u32 %v865, 7
  %v867 = vsub.s32 %v864, %v866
  %v868 = vrot.slane %v852, %v867
  %v870 = vunpack.c.l.s4 1966171168
  %v871 = vunpack.c.0.s8 %v870
  %v872 = vlaneseq
  %v873 = vshrl.u32 %v872, 7
  %v874 = vsub.s32 %v871, %v873
  %v875 = vrot.slane %v859, %v874
  %v877 = vunpack.c.l.s4 1966171168
  %v878 = vunpack.c.0.s8 %v877
  %v879 = vlaneseq
  %v880 = vshrl.u32 %v879, 7
  %v881 = vsub.s32 %v878, %v880
  %v882 = vrot.slane %v860, %v881
  %v884 = vunpack.c.l.s4 1966171168
  %v885 = vunpack.c.0.s8 %v884
  %v886 = vlaneseq
  %v887 = vshrl.u32 %v886, 7
  %v888 = vsub.s32 %v885, %v887
  %v889 = vrot.slane %v861, %v888
  %v890 = vcombine.high %v868, %v868
  %v891 = vcombine.high %v882, %v882
  %v892 = vcombine.low %v721, %v735
  %v893 = vcombine.low %v743, %v745
  %v894 = vcombine.low %v728, %v742
  %v896 = vunpack.c.l.s4 1966171168
  %v897 = vunpack.c.0.s8 %v896
  %v898 = vlaneseq
  %v899 = vshrl.u32 %v898, 7
  %v900 = vsub.s32 %v897, %v899
  %v901 = vrot.slane %v892, %v900
  %v903 = vunpack.c.l.s4 1966171168
  %v904 = vunpack.c.0.s8 %v903
  %v905 = vlaneseq
  %v906 = vshrl.u32 %v905, 7
  %v907 = vsub.s32 %v904, %v906
  %v908 = vrot.slane %v893, %v907
  %v910 = vunpack.c.l.s4 1966171168
  %v911 = vunpack.c.0.s8 %v910
  %v912 = vlaneseq
  %v913 = vshrl.u32 %v912, 7
  %v914 = vsub.s32 %v911, %v913
  %v915 = vrot.slane %v894, %v914
  %v917 = vunpack.c.l.s4 1966171168
  %v918 = vunpack.c.0.s8 %v917
  %v919 = vlaneseq
  %v920 = vshrl.u32 %v919, 7
  %v921 = vsub.s32 %v918, %v920
  %v922 = vrot.slane %v744, %v921
  %v923 = vcombine.low %v901, %v908
  %v924 = vcombine.low %v915, %v922
  %v926 = vunpack.c.l.s4 1966171168
  %v927 = vunpack.c.0.s8 %v926
  %v928 = vlaneseq
  %v929 = vshrl.u32 %v928, 7
  %v930 = vsub.s32 %v927, %v929
  %v931 = vrot.slane %v923, %v930
  %v933 = vunpack.c.l.s4 1966171168
  %v934 = vunpack.c.0.s8 %v933
  %v935 = vlaneseq
  %v936 = vshrl.u32 %v935, 7
  %v937 = vsub.s32 %v934, %v936
  %v938 = vrot.slane %v924, %v937
  %v939 = vcombine.low %v931, %v938
  %v940 = vcombine.low %v819, %v833
  %v941 = vcombine.low %v841, %v843
  %v942 = vcombine.low %v826, %v840
  %v944 = vunpack.c.l.s4 1966171168
  %v945 = vunpack.c.0.s8 %v944
  %v946 = vlaneseq
  %v947 = vshrl.u32 %v946, 7
  %v948 = vsub.s32 %v945, %v947
  %v949 = vrot.slane %v940, %v948
  %v951 = vunpack.c.l.s4 1966171168
  %v952 = vunpack.c.0.s8 %v951
  %v953 = vlaneseq
  %v954 = vshrl.u32 %v953, 7
  %v955 = vsub.s32 %v952, %v954
  %v956 = vrot.slane %v941, %v955
  %v958 = vunpack.c.l.s4 1966171168
  %v959 = vunpack.c.0.s8 %v958
  %v960 = vlaneseq
  %v961 = vshrl.u32 %v960, 7
  %v962 = vsub.s32 %v959, %v961
  %v963 = vrot.slane %v942, %v962
  %v965 = vunpack.c.l.s4 1966171168
  %v966 = vunpack.c.0.s8 %v965
  %v967 = vlaneseq
  %v968 = vshrl.u32 %v967, 7
  %v969 = vsub.s32 %v966, %v968
  %v970 = vrot.slane %v842, %v969
  %v971 = vcombine.low %v949, %v956
  %v972 = vcombine.low %v963, %v970
  %v974 = vunpack.c.l.s4 1966171168
  %v975 = vunpack.c.0.s8 %v974
  %v976 = vlaneseq
  %v977 = vshrl.u32 %v976, 7
  %v978 = vsub.s32 %v975, %v977
  %v979 = vrot.slane %v971, %v978
  %v981 = vunpack.c.l.s4 1966171168
  %v982 = vunpack.c.0.s8 %v981
  %v983 = vlaneseq
  %v984 = vshrl.u32 %v983, 7
  %v985 = vsub.s32 %v982, %v984
  %v986 = vrot.slane %v972, %v985
  %v987 = vcombine.low %v979, %v986
  %v988 = vsel %vm228, %v939, 0
  %v990 = vsel %vm228, %v987, 0
  %992 = vmatprep.subr.mxu0 0.0
  %993 = vmatpush1.xpose.msra.mxu0 0.0
  %994 = vmatprep.subr.mxu0 0.0
  %995 = vmatpush1.xpose.msra.mxu0 0.0
  %996 = vmatprep.subr.mxu0 0.0
  %997 = vmatpush1.xpose.msra.mxu0 0.0
  %998 = vmatprep.subr.mxu0 0.0
  %999 = vmatpush1.xpose.msra.mxu0 0.0
  %1000 = vmatprep.subr.mxu0 0.0
  %1001 = vmatpush1.xpose.msra.mxu0 0.0
  %1002 = vmatprep.subr.mxu0 0.0
  %1003 = vmatpush1.xpose.msra.mxu0 0.0
  %1004 = vmatprep.subr.mxu0 0.0
  %1005 = vmatpush1.xpose.msra.mxu0 0.0
  %1006 = vmatprep.subr.mxu0 0.0
  %1007 = vmatpush1.xpose.msra.mxu0 0.0
  %1008 = vmatprep.subr.mxu0 0.0
  %1009 = vmatpush1.xpose.msra.mxu0 0.0
  %1010 = vmatprep.subr.mxu0 0.0
  %1011 = vmatpush1.xpose.msra.mxu0 0.0
  %1012 = vmatprep.subr.mxu0 0.0
  %1013 = vmatpush1.xpose.msra.mxu0 0.0
  %1014 = vmatprep.subr.mxu0 0.0
  %1015 = vmatpush1.xpose.msra.mxu0 0.0
  %1016 = vmatprep.subr.mxu0 0.0
  %1017 = vmatpush1.xpose.msra.mxu0 0.0
  %1018 = vmatprep.subr.mxu0 0.0
  %1019 = vmatpush1.xpose.msra.mxu0 0.0
  %1020 = vmatprep.subr.mxu0 0.0
  %1021 = vmatpush1.xpose.msra.mxu0 0.0
  %1022 = vmatprep.subr.mxu0 0.0
  %1023 = vmatpush1.xpose.msra.mxu0 %v990
  %1024 = vmatprep.subr.mxu0 0.0
  %1025 = vmatpush2.xpose.msra.mxu0 0.0
  %1026 = vmatprep.subr.mxu0 0.0
  %1027 = vmatpush2.xpose.msra.mxu0 0.0
  %1028 = vmatprep.subr.mxu0 0.0
  %1029 = vmatpush2.xpose.msra.mxu0 0.0
  %1030 = vmatprep.subr.mxu0 0.0
  %1031 = vmatpush2.xpose.msra.mxu0 0.0
  %1032 = vmatprep.subr.mxu0 0.0
  %1033 = vmatpush2.xpose.msra.mxu0 0.0
  %1034 = vmatprep.subr.mxu0 0.0
  %1035 = vmatpush2.xpose.msra.mxu0 0.0
  %1036 = vmatprep.subr.mxu0 0.0
  %1037 = vmatpush2.xpose.msra.mxu0 0.0
  %1038 = vmatprep.subr.mxu0 0.0
  %1039 = vmatpush2.xpose.msra.mxu0 0.0
  %1040 = vmatprep.subr.mxu0 0.0
  %1041 = vmatpush2.xpose.msra.mxu0 0.0
  %1042 = vmatprep.subr.mxu0 0.0
  %1043 = vmatpush2.xpose.msra.mxu0 0.0
  %1044 = vmatprep.subr.mxu0 0.0
  %1045 = vmatpush2.xpose.msra.mxu0 0.0
  %1046 = vmatprep.subr.mxu0 0.0
  %1047 = vmatpush2.xpose.msra.mxu0 0.0
  %1048 = vmatprep.subr.mxu0 0.0
  %1049 = vmatpush2.xpose.msra.mxu0 0.0
  %1050 = vmatprep.subr.mxu0 0.0
  %1051 = vmatpush2.xpose.msra.mxu0 0.0
  %1052 = vmatprep.subr.mxu0 0.0
  %1053 = vmatpush2.xpose.msra.mxu0 0.0
  %1054 = vmatprep.subr.mxu0 0.0
  %1055 = vmatpush2.xpose.msra.mxu0 0.0
  %1056 = vmatprep.mubr.f32.mxu0 0.0
  %1057 = vmatmul.mubr.f32.gmra.mxu0 %v988
  %v1058 = vpop.f32.mrf.mxu0
  %v1059 = vadd.f32 0.0, %v1058
  %v1060 = vpop.f32.mrf.mxu0
  %1061 = vdwg.mxu0
  %v1062 = vcombine.low %v746, %v770
  %v1063 = vcombine.low %v784, %v792
  %v1064 = vcombine.low %v793, %v777
  %v1066 = vunpack.c.l.s4 1966171168
  %v1067 = vunpack.c.0.s8 %v1066
  %v1068 = vlaneseq
  %v1069 = vshrl.u32 %v1068, 7
  %v1070 = vsub.s32 %v1067, %v1069
  %v1071 = vrot.slane %v1062, %v1070
  %v1073 = vunpack.c.l.s4 1966171168
  %v1074 = vunpack.c.0.s8 %v1073
  %v1075 = vlaneseq
  %v1076 = vshrl.u32 %v1075, 7
  %v1077 = vsub.s32 %v1074, %v1076
  %v1078 = vrot.slane %v1063, %v1077
  %v1080 = vunpack.c.l.s4 1966171168
  %v1081 = vunpack.c.0.s8 %v1080
  %v1082 = vlaneseq
  %v1083 = vshrl.u32 %v1082, 7
  %v1084 = vsub.s32 %v1081, %v1083
  %v1085 = vrot.slane %v1064, %v1084
  %v1087 = vunpack.c.l.s4 1966171168
  %v1088 = vunpack.c.0.s8 %v1087
  %v1089 = vlaneseq
  %v1090 = vshrl.u32 %v1089, 7
  %v1091 = vsub.s32 %v1088, %v1090
  %v1092 = vrot.slane %v791, %v1091
  %v1093 = vcombine.low %v1071, %v1078
  %v1094 = vcombine.low %v1085, %v1092
  %v1096 = vunpack.c.l.s4 1966171168
  %v1097 = vunpack.c.0.s8 %v1096
  %v1098 = vlaneseq
  %v1099 = vshrl.u32 %v1098, 7
  %v1100 = vsub.s32 %v1097, %v1099
  %v1101 = vrot.slane %v1093, %v1100
  %v1103 = vunpack.c.l.s4 1966171168
  %v1104 = vunpack.c.0.s8 %v1103
  %v1105 = vlaneseq
  %v1106 = vshrl.u32 %v1105, 7
  %v1107 = vsub.s32 %v1104, %v1106
  %v1108 = vrot.slane %v1094, %v1107
  %v1109 = vcombine.low %v1101, %v1108
  %v1110 = vcombine.low %v844, %v868
  %v1111 = vcombine.low %v882, %v890
  %v1112 = vcombine.low %v891, %v875
  %v1114 = vunpack.c.l.s4 1966171168
  %v1115 = vunpack.c.0.s8 %v1114
  %v1116 = vlaneseq
  %v1117 = vshrl.u32 %v1116, 7
  %v1118 = vsub.s32 %v1115, %v1117
  %v1119 = vrot.slane %v1110, %v1118
  %v1121 = vunpack.c.l.s4 1966171168
  %v1122 = vunpack.c.0.s8 %v1121
  %v1123 = vlaneseq
  %v1124 = vshrl.u32 %v1123, 7
  %v1125 = vsub.s32 %v1122, %v1124
  %v1126 = vrot.slane %v1111, %v1125
  %v1128 = vunpack.c.l.s4 1966171168
  %v1129 = vunpack.c.0.s8 %v1128
  %v1130 = vlaneseq
  %v1131 = vshrl.u32 %v1130, 7
  %v1132 = vsub.s32 %v1129, %v1131
  %v1133 = vrot.slane %v1112, %v1132
  %v1135 = vunpack.c.l.s4 1966171168
  %v1136 = vunpack.c.0.s8 %v1135
  %v1137 = vlaneseq
  %v1138 = vshrl.u32 %v1137, 7
  %v1139 = vsub.s32 %v1136, %v1138
  %v1140 = vrot.slane %v889, %v1139
  %v1141 = vcombine.low %v1119, %v1126
  %v1142 = vcombine.low %v1133, %v1140
  %v1144 = vunpack.c.l.s4 1966171168
  %v1145 = vunpack.c.0.s8 %v1144
  %v1146 = vlaneseq
  %v1147 = vshrl.u32 %v1146, 7
  %v1148 = vsub.s32 %v1145, %v1147
  %v1149 = vrot.slane %v1141, %v1148
  %v1151 = vunpack.c.l.s4 1966171168
  %v1152 = vunpack.c.0.s8 %v1151
  %v1153 = vlaneseq
  %v1154 = vshrl.u32 %v1153, 7
  %v1155 = vsub.s32 %v1152, %v1154
  %v1156 = vrot.slane %v1142, %v1155
  %v1157 = vcombine.low %v1149, %v1156
  %v1158 = vsel %vm228, %v1109, 0
  %v1160 = vsel %vm228, %v1157, 0
  %1162 = vmatprep.subr.mxu0 0.0
  %1163 = vmatpush1.xpose.msra.mxu0 0.0
  %1164 = vmatprep.subr.mxu0 0.0
  %1165 = vmatpush1.xpose.msra.mxu0 0.0
  %1166 = vmatprep.subr.mxu0 0.0
  %1167 = vmatpush1.xpose.msra.mxu0 0.0
  %1168 = vmatprep.subr.mxu0 0.0
  %1169 = vmatpush1.xpose.msra.mxu0 0.0
  %1170 = vmatprep.subr.mxu0 0.0
  %1171 = vmatpush1.xpose.msra.mxu0 0.0
  %1172 = vmatprep.subr.mxu0 0.0
  %1173 = vmatpush1.xpose.msra.mxu0 0.0
  %1174 = vmatprep.subr.mxu0 0.0
  %1175 = vmatpush1.xpose.msra.mxu0 0.0
  %1176 = vmatprep.subr.mxu0 0.0
  %1177 = vmatpush1.xpose.msra.mxu0 0.0
  %1178 = vmatprep.subr.mxu0 0.0
  %1179 = vmatpush1.xpose.msra.mxu0 0.0
  %1180 = vmatprep.subr.mxu0 0.0
  %1181 = vmatpush1.xpose.msra.mxu0 0.0
  %1182 = vmatprep.subr.mxu0 0.0
  %1183 = vmatpush1.xpose.msra.mxu0 0.0
  %1184 = vmatprep.subr.mxu0 0.0
  %1185 = vmatpush1.xpose.msra.mxu0 0.0
  %1186 = vmatprep.subr.mxu0 0.0
  %1187 = vmatpush1.xpose.msra.mxu0 0.0
  %1188 = vmatprep.subr.mxu0 0.0
  %1189 = vmatpush1.xpose.msra.mxu0 0.0
  %1190 = vmatprep.subr.mxu0 0.0
  %1191 = vmatpush1.xpose.msra.mxu0 0.0
  %1192 = vmatprep.subr.mxu0 0.0
  %1193 = vmatpush1.xpose.msra.mxu0 %v1160
  %1194 = vmatprep.subr.mxu0 0.0
  %1195 = vmatpush2.xpose.msra.mxu0 0.0
  %1196 = vmatprep.subr.mxu0 0.0
  %1197 = vmatpush2.xpose.msra.mxu0 0.0
  %1198 = vmatprep.subr.mxu0 0.0
  %1199 = vmatpush2.xpose.msra.mxu0 0.0
  %1200 = vmatprep.subr.mxu0 0.0
  %1201 = vmatpush2.xpose.msra.mxu0 0.0
  %1202 = vmatprep.subr.mxu0 0.0
  %1203 = vmatpush2.xpose.msra.mxu0 0.0
  %1204 = vmatprep.subr.mxu0 0.0
  %1205 = vmatpush2.xpose.msra.mxu0 0.0
  %1206 = vmatprep.subr.mxu0 0.0
  %1207 = vmatpush2.xpose.msra.mxu0 0.0
  %1208 = vmatprep.subr.mxu0 0.0
  %1209 = vmatpush2.xpose.msra.mxu0 0.0
  %1210 = vmatprep.subr.mxu0 0.0
  %1211 = vmatpush2.xpose.msra.mxu0 0.0
  %1212 = vmatprep.subr.mxu0 0.0
  %1213 = vmatpush2.xpose.msra.mxu0 0.0
  %1214 = vmatprep.subr.mxu0 0.0
  %1215 = vmatpush2.xpose.msra.mxu0 0.0
  %1216 = vmatprep.subr.mxu0 0.0
  %1217 = vmatpush2.xpose.msra.mxu0 0.0
  %1218 = vmatprep.subr.mxu0 0.0
  %1219 = vmatpush2.xpose.msra.mxu0 0.0
  %1220 = vmatprep.subr.mxu0 0.0
  %1221 = vmatpush2.xpose.msra.mxu0 0.0
  %1222 = vmatprep.subr.mxu0 0.0
  %1223 = vmatpush2.xpose.msra.mxu0 0.0
  %1224 = vmatprep.subr.mxu0 0.0
  %1225 = vmatpush2.xpose.msra.mxu0 0.0
  %1226 = vmatprep.mubr.f32.mxu0 0.0
  %1227 = vmatmul.mubr.f32.gmra.mxu0 %v1158
  %v1228 = vpop.f32.mrf.mxu0
  %v1229 = vadd.f32 0.0, %v1228
  %v1230 = vpop.f32.mrf.mxu0
  %1231 = vdwg.mxu0
  %vm1232 = vcmask 55296
  %v1233 = vsel %vm1232, %v1059, 0.0
  %1234 = vadd.xlane.f32.xlu0 %v1233
  %v1235 = vpop.xlane.xlu0 %1234
  %v1236 = vsel %vm1232, %v1229, 0.0
  %1237 = vadd.xlane.f32.xlu0 %v1236
  %v1238 = vpop.xlane.xlu0 %1237
  %v1239 = vrcp.pop 7.0
  %v1240 = vmul.f32 %v1235, %v1239
  %v1241 = vmul.f32 %v1238, %v1239
  %v1244 = vlaneseq
  %v1245 = vand.u32 %v1244, 127
  %v1246 = vlaneseq
  %v1247 = vshrl.u32 %v1246, 7
  %v1248 = vsub.s32 %v1245, %v1247
  %v1249 = vrot.slane %v1240, %v1248
  %v1250 = vlaneseq
  %v1251 = vshrl.u32 %v1250, 7
  %v1252 = vsub.s32 %v1245, %v1251
  %v1253 = vrot.slane %v1241, %v1252
  %vm1254 = vcmask 1041409
  %v1255 = vsel %vm1254, %v1253, %v1249
  %vm1257 = vcmask 50176
  %v1258 = vsel %vm1257, %v1255, -inf
  %1259 = vmax.xlane.f32.xlu0 %v1258
  %v1260 = vpop.xlane.xlu0 %1259
  %v1262 = vlaneseq
  %v1263 = vshrl.u32 %v1262, 7
  %v1264 = vsub.s32 0, %v1263
  %v1265 = vrot.slane %v1260, %v1264
  %v1266 = vlaneseq
  %v1267 = vshrl.u32 %v1266, 7
  %v1268 = vsub.s32 1, %v1267
  %v1269 = vrot.slane %v1260, %v1268
  %v1272 = vsub.f32 %v1240, %v1265
  %v1273 = vsub.f32 %v1241, %v1269
  %v1274 = vmul.f32 %v1272, 1.442695
  %v1275 = vpow.pop %v1274
  %v1276 = vmul.f32 %v1273, 1.442695
  %v1277 = vpow.pop %v1276
  %1280 = vset.pattern.permute.xlu0 0
  %1281 = vperm.xlu0 %1280, %v1275
  %v1282 = vpop.permute.xlu0 %1281
  %1283 = vset.pattern.permute.xlu0 0
  %1284 = vperm.xlu0 %1283, %v1277
  %v1285 = vpop.permute.xlu0 %1284
  %v1286 = vlaneseq
  %v1287 = vshrl.u32 %v1286, 7
  %v1288 = vsub.s32 %v1245, %v1287
  %v1289 = vrot.slane %v1282, %v1288
  %v1290 = vlaneseq
  %v1291 = vshrl.u32 %v1290, 7
  %v1292 = vsub.s32 %v1245, %v1291
  %v1293 = vrot.slane %v1285, %v1292
  %v1294 = vsel %vm1254, %v1293, %v1289
  %v1296 = vsel %vm1257, %v1294, 0.0
  %1297 = vadd.xlane.f32.xlu0 %v1296
  %v1298 = vpop.xlane.xlu0 %1297
  %v1300 = vlaneseq
  %v1301 = vshrl.u32 %v1300, 7
  %v1302 = vsub.s32 0, %v1301
  %v1303 = vrot.slane %v1298, %v1302
  %v1304 = vlaneseq
  %v1305 = vshrl.u32 %v1304, 7
  %v1306 = vsub.s32 1, %v1305
  %v1307 = vrot.slane %v1298, %v1306
  %v1310 = vrcp.pop %v1303
  %v1311 = vmul.f32 %v1275, %v1310
  %v1312 = vrcp.pop %v1307
  %v1313 = vmul.f32 %v1277, %v1312
  %v1314 = vrot.slane %v1233, 4
  %v1315 = vadd.f32 %v1233, %v1314
  %v1316 = vrot.slane %v1315, 2
  %v1317 = vadd.f32 %v1315, %v1316
  %v1318 = vrot.slane %v1317, 1
  %v1319 = vadd.f32 %v1317, %v1318
  %v1320 = vrot.slane %v1236, 4
  %v1321 = vadd.f32 %v1236, %v1320
  %v1322 = vrot.slane %v1321, 2
  %v1323 = vadd.f32 %v1321, %v1322
  %v1324 = vrot.slane %v1323, 1
  %v1325 = vadd.f32 %v1323, %v1324
  %v1326 = vmul.f32 %v1319, %v1239
  %v1327 = vmul.f32 %v1325, %v1239
  %v1330 = vsel %vm1254, %v1327, %v1326
  %v1332 = vsel %vm1257, %v1330, -inf
  %1333 = vmax.xlane.f32.xlu0 %v1332
  %v1334 = vpop.xlane.xlu0 %1333
  %v1336 = vrot.slane %v1334, 1
  %v1339 = vsub.f32 %v1326, %v1334
  %v1340 = vsub.f32 %v1327, %v1336
  %v1341 = vmul.f32 %v1339, 1.442695
  %v1342 = vpow.pop %v1341
  %v1343 = vmul.f32 %v1340, 1.442695
  %v1344 = vpow.pop %v1343
  %v1347 = vrot.slane %v1344, 7
  %v1348 = vsel %vm1254, %v1347, %v1342
  %v1350 = vsel %vm1257, %v1348, 0.0
  %1351 = vadd.xlane.f32.xlu0 %v1350
  %v1352 = vpop.xlane.xlu0 %1351
  %v1354 = vrot.slane %v1352, 1
  %v1357 = vrcp.pop %v1352
  %v1358 = vmul.f32 %v1342, %v1357
  %v1359 = vrcp.pop %v1354
  %v1360 = vmul.f32 %v1344, %v1359
  %1362 = vset.pattern.permute.xlu0 0
  %1363 = vperm.xlu0 %1362, %v1311
  %v1364 = vpop.permute.xlu0 %1363
  %1367 = vset.pattern.permute.xlu0 0
  %1368 = vperm.xlu0 %1367, %v1313
  %v1369 = vpop.permute.xlu0 %1368
  %v1371 = vmul.f32 %v28, %v1364
  %v1372 = vmul.f32 %v29, %v1369
  %vm1373 = vcmask 260096
  %v1374 = vsel %vm1373, %v1371, 0.0
  %v1375 = vrot.slane %v1374, 4
  %v1376 = vadd.f32 %v1374, %v1375
  %v1377 = vrot.slane %v1376, 2
  %v1378 = vadd.f32 %v1376, %v1377
  %v1379 = vrot.slane %v1378, 1
  %v1380 = vadd.f32 %v1378, %v1379
  %v1381 = vsel %vm1373, %v1372, 0.0
  %v1382 = vrot.slane %v1381, 4
  %v1383 = vadd.f32 %v1381, %v1382
  %v1384 = vrot.slane %v1383, 2
  %v1385 = vadd.f32 %v1383, %v1384
  %v1386 = vrot.slane %v1385, 1
  %v1387 = vadd.f32 %v1385, %v1386
  %v1390 = vsel %vm1254, %v1387, %v1380
  %vm1392 = vcmask 254976
  %1393 = vst.msk [vmem:[%s7] sm:$0x3] %vm1392, %v1390
  %v1394 = vlaneseq
  %v1395 = vshrl.u32 %v1394, 7
  %v1396 = vsub.s32 0, %v1395
  %v1397 = vrot.slane %v1358, %v1396
  %1399 = vbcast.lane.b32.xlu0 %v1397, 256
  %v1400 = vpop.permute.xlu0 %1399
  %v1401 = vlaneseq
  %v1402 = vshrl.u32 %v1401, 7
  %v1403 = vsub.s32 0, %v1402
  %v1404 = vrot.slane %v1360, %v1403
  %1406 = vbcast.lane.b32.xlu0 %v1404, 256
  %v1407 = vpop.permute.xlu0 %1406
  %v1408 = vmul.f32 %v28, %v1400
  %v1409 = vmul.f32 %v29, %v1407
  %v1410 = vsel %vm1373, %v1408, 0.0
  %v1411 = vrot.slane %v1410, 4
  %v1412 = vadd.f32 %v1410, %v1411
  %v1413 = vrot.slane %v1412, 2
  %v1414 = vadd.f32 %v1412, %v1413
  %v1415 = vrot.slane %v1414, 1
  %v1416 = vadd.f32 %v1414, %v1415
  %v1417 = vsel %vm1373, %v1409, 0.0
  %v1418 = vrot.slane %v1417, 4
  %v1419 = vadd.f32 %v1417, %v1418
  %v1420 = vrot.slane %v1419, 2
  %v1421 = vadd.f32 %v1419, %v1420
  %v1422 = vrot.slane %v1421, 1
  %v1423 = vadd.f32 %v1421, %v1422
  %v1426 = vsel %vm1254, %v1423, %v1416
  %1428 = vst.msk [vmem:[%s8] sm:$0x3] %vm1392, %v1426
  // Predicated region
  $region30: #{mpcn_forward.13} parent=0 // pred_check
    _
  $region31: #{mpcn_forward.13} parent=0 // pred_check_branch
    %1430 = sbr.rel (0) target = $region33
  $region32: #{mpcn_forward.13} parent=0 // pred_region
    _
  $region33: #{mpcn_forward.13} parent=0 // pred_fallthru
    _
  // Predicated region
  $region34: #{mpcn_forward.13} parent=0 // pred_check
    _
  $region35: #{mpcn_forward.13} parent=0 // pred_check_branch
    %1432 = sbr.rel (0) target = $region37
  $region36: #{mpcn_forward.13} parent=0 // pred_region
    _
  $region37: #{mpcn_forward.13} parent=0 // pred_fallthru
    _
  // Predicated region
  $region38: #{mpcn_forward.13} parent=0 // pred_check
    _
  $region39: #{mpcn_forward.13} parent=0 // pred_check_branch
    %1434 = sbr.rel (0) target = $region41
  $region40: #{mpcn_forward.13} parent=0 // pred_region
    _
  $region41: #{mpcn_forward.13} parent=0 // pred_fallthru
    _
  // Predicated region
  $region42: #{mpcn_forward.13} parent=0 // pred_check
    _
  $region43: #{mpcn_forward.13} parent=0 // pred_check_branch
    %1436 = sbr.rel (0) target = $region45
  $region44: #{mpcn_forward.13} parent=0 // pred_region
    _
  $region45: #{mpcn_forward.13} parent=0 // pred_fallthru
    _

// kernel: mpcn_forward.19
$region0: #{mpcn_forward.19}
  #allocation0 [shape = 'u32[]', space=smem, size = 0x4, offset = 0x4, fixed_abs, tag = 'smem constant byte address 0x4 - core index']
  #allocation1 [shape = 'u32[144,128]{1,0:T(1,128)}', space=vmem, size = 0x12000, scoped, tag = 'internal scratch']
  %s0 = inlined_call_operand.vmem [shape: f32[2,96], index: 0, kind: input, shape index: {}]
  %s1 = inlined_call_operand.vmem [shape: f32[32,96], index: 1, kind: input, shape index: {}]
  %s2 = inlined_call_operand.vmem [shape: f32[1,32], index: 2, kind: input, shape index: {}]
  %s3 = inlined_call_operand.vmem [shape: f32[8,32], index: 3, kind: input, shape index: {}]
  %s4 = inlined_call_operand.vmem [shape: f32[1,8], index: 4, kind: input, shape index: {}]
  %s5 = inlined_call_operand.hbm [shape: f32[2,8], index: 5, kind: output, shape index: {}]
  %s6 = sld [smem:[#allocation0]]
  $region30: #{mpcn_forward.19} parent=0
    _
  %s8 = ssub.s32 1, %s6
  %s9 = scalar_select 0, %s8, %s6
  $region1: #{mpcn_forward.19} parent=0
    #allocation2 [shape = 'u8[1024]{0}', space=vmem, size = 0x400, scoped, tag = 'output window, operand 0, single buffered']
    #allocation3 [shape = 's32[1]{0}', space=sflag, size = 0x4, scoped, tag = 'scoped memory for mpcn_forward.19']
    %10 = vsyncpa [#allocation3], 0
    // Predicated region
    $region2: #{mpcn_forward.19} parent=1 // pred_check
      _
    $region3: #{mpcn_forward.19} parent=1 // pred_check_branch
      %12 = sbr.rel (0) target = $region5
    $region4: #{mpcn_forward.19} parent=1 // pred_region
      _
    $region5: #{mpcn_forward.19} parent=1 // pred_fallthru
      _
    // Predicated region
    $region6: #{mpcn_forward.19} parent=1 // pred_check
      _
    $region7: #{mpcn_forward.19} parent=1 // pred_check_branch
      %14 = sbr.rel (0) target = $region9
    $region8: #{mpcn_forward.19} parent=1 // pred_region
      _
    $region9: #{mpcn_forward.19} parent=1 // pred_fallthru
      _
    // Predicated region
    $region10: #{mpcn_forward.19} parent=1 // pred_check
      _
    $region11: #{mpcn_forward.19} parent=1 // pred_check_branch
      %16 = sbr.rel (0) target = $region13
    $region12: #{mpcn_forward.19} parent=1 // pred_region
      _
    $region13: #{mpcn_forward.19} parent=1 // pred_fallthru
      _
    // Predicated region
    $region14: #{mpcn_forward.19} parent=1 // pred_check
      _
    $region15: #{mpcn_forward.19} parent=1 // pred_check_branch
      %18 = sbr.rel (0) target = $region17
    $region16: #{mpcn_forward.19} parent=1 // pred_region
      _
    $region17: #{mpcn_forward.19} parent=1 // pred_fallthru
      _
    // Predicated region
    $region18: #{mpcn_forward.19} parent=1 // pred_check
      _
    $region19: #{mpcn_forward.19} parent=1 // pred_check_branch
      %20 = sbr.rel (0) target = $region21
    $region20: #{mpcn_forward.19} parent=1 // pred_region
      _
    $region21: #{mpcn_forward.19} parent=1 // pred_fallthru
      _
    %v21 = vld [vmem:[%s0] sm:$0x3]
    %v22 = vld [vmem:[%s1] sm:$0xff]
    %v23 = vld [vmem:[%s1 + $0x8] sm:$0xff]
    %v24 = vld [vmem:[%s1 + $0x10] sm:$0xff]
    %v25 = vld [vmem:[%s1 + $0x18] sm:$0xff]
    %v26 = vld [vmem:[%s2] sm:$0x1]
    %v28 = vlaneseq
    %v29 = vshrl.u32 %v28, 7
    %v30 = vsub.s32 0, %v29
    %v31 = vrot.slane %v26, %v30
    %vm33 = vcmask 785408
    %v35 = vsel %vm33, %v21, 0
    %v38 = vsel %vm33, %v22, 0
    %v41 = vsel %vm33, %v23, 0
    %v44 = vsel %vm33, %v24, 0
    %v47 = vsel %vm33, %v25, 0
    %49 = vmatprep.subr.mxu0 0.0
    %50 = vmatpush1.xpose.msra.mxu0 0.0
    %51 = vmatprep.subr.mxu0 0.0
    %52 = vmatpush1.xpose.msra.mxu0 0.0
    %53 = vmatprep.subr.mxu0 0.0
    %54 = vmatpush1.xpose.msra.mxu0 0.0
    %55 = vmatprep.subr.mxu0 0.0
    %56 = vmatpush1.xpose.msra.mxu0 0.0
    %57 = vmatprep.subr.mxu0 0.0
    %58 = vmatpush1.xpose.msra.mxu0 0.0
    %59 = vmatprep.subr.mxu0 0.0
    %60 = vmatpush1.xpose.msra.mxu0 0.0
    %61 = vmatprep.subr.mxu0 0.0
    %62 = vmatpush1.xpose.msra.mxu0 0.0
    %63 = vmatprep.subr.mxu0 0.0
    %64 = vmatpush1.xpose.msra.mxu0 0.0
    %65 = vmatprep.subr.mxu0 0.0
    %66 = vmatpush1.xpose.msra.mxu0 0.0
    %67 = vmatprep.subr.mxu0 0.0
    %68 = vmatpush1.xpose.msra.mxu0 0.0
    %69 = vmatprep.subr.mxu0 0.0
    %70 = vmatpush1.xpose.msra.mxu0 0.0
    %71 = vmatprep.subr.mxu0 0.0
    %72 = vmatpush1.xpose.msra.mxu0 0.0
    %73 = vmatprep.subr.mxu0 0.0
    %74 = vmatpush1.xpose.msra.mxu0 %v47
    %75 = vmatprep.subr.mxu0 0.0
    %76 = vmatpush1.xpose.msra.mxu0 %v44
    %77 = vmatprep.subr.mxu0 0.0
    %78 = vmatpush1.xpose.msra.mxu0 %v41
    %79 = vmatprep.subr.mxu0 0.0
    %80 = vmatpush1.xpose.msra.mxu0 %v38
    %81 = vmatprep.subr.mxu0 0.0
    %82 = vmatpush2.xpose.msra.mxu0 0.0
    %83 = vmatprep.subr.mxu0 0.0
    %84 = vmatpush2.xpose.msra.mxu0 0.0
    %85 = vmatprep.subr.mxu0 0.0
    %86 = vmatpush2.xpose.msra.mxu0 0.0
    %87 = vmatprep.subr.mxu0 0.0
    %88 = vmatpush2.xpose.msra.mxu0 0.0
    %89 = vmatprep.subr.mxu0 0.0
    %90 = vmatpush2.xpose.msra.mxu0 0.0
    %91 = vmatprep.subr.mxu0 0.0
    %92 = vmatpush2.xpose.msra.mxu0 0.0
    %93 = vmatprep.subr.mxu0 0.0
    %94 = vmatpush2.xpose.msra.mxu0 0.0
    %95 = vmatprep.subr.mxu0 0.0
    %96 = vmatpush2.xpose.msra.mxu0 0.0
    %97 = vmatprep.subr.mxu0 0.0
    %98 = vmatpush2.xpose.msra.mxu0 0.0
    %99 = vmatprep.subr.mxu0 0.0
    %100 = vmatpush2.xpose.msra.mxu0 0.0
    %101 = vmatprep.subr.mxu0 0.0
    %102 = vmatpush2.xpose.msra.mxu0 0.0
    %103 = vmatprep.subr.mxu0 0.0
    %104 = vmatpush2.xpose.msra.mxu0 0.0
    %105 = vmatprep.subr.mxu0 0.0
    %106 = vmatpush2.xpose.msra.mxu0 0.0
    %107 = vmatprep.subr.mxu0 0.0
    %108 = vmatpush2.xpose.msra.mxu0 0.0
    %109 = vmatprep.subr.mxu0 0.0
    %110 = vmatpush2.xpose.msra.mxu0 0.0
    %111 = vmatprep.subr.mxu0 0.0
    %112 = vmatpush2.xpose.msra.mxu0 0.0
    %113 = vmatprep.mubr.f32.mxu0 0.0
    %114 = vmatmul.mubr.f32.gmra.mxu0 %v35
    %v115 = vpop.f32.mrf.mxu0
    %v116 = vadd.f32 %v31, %v115
    %v117 = vpop.f32.mrf.mxu0
    %118 = vdwg.mxu0
    %v119 = vmax.f32 %v116, 0.0
    %v120 = vld [vmem:[%s3] sm:$0xff]
    %v121 = vld [vmem:[%s4] sm:$0x1]
    %v123 = vlaneseq
    %v124 = vshrl.u32 %v123, 7
    %v125 = vsub.s32 0, %v124
    %v126 = vrot.slane %v121, %v125
    %vm128 = vcmask 261120
    %v130 = vsel %vm128, %v119, 0
    %v133 = vsel %vm128, %v120, 0
    %135 = vmatprep.subr.mxu0 0.0
    %136 = vmatpush1.xpose.msra.mxu0 0.0
    %137 = vmatprep.subr.mxu0 0.0
    %138 = vmatpush1.xpose.msra.mxu0 0.0
    %139 = vmatprep.subr.mxu0 0.0
    %140 = vmatpush1.xpose.msra.mxu0 0.0
    %141 = vmatprep.subr.mxu0 0.0
    %142 = vmatpush1.xpose.msra.mxu0 0.0
    %143 = vmatprep.subr.mxu0 0.0
    %144 = vmatpush1.xpose.msra.mxu0 0.0
    %145 = vmatprep.subr.mxu0 0.0
    %146 = vmatpush1.xpose.msra.mxu0 0.0
    %147 = vmatprep.subr.mxu0 0.0
    %148 = vmatpush1.xpose.msra.mxu0 0.0
    %149 = vmatprep.subr.mxu0 0.0
    %150 = vmatpush1.xpose.msra.mxu0 0.0
    %151 = vmatprep.subr.mxu0 0.0
    %152 = vmatpush1.xpose.msra.mxu0 0.0
    %153 = vmatprep.subr.mxu0 0.0
    %154 = vmatpush1.xpose.msra.mxu0 0.0
    %155 = vmatprep.subr.mxu0 0.0
    %156 = vmatpush1.xpose.msra.mxu0 0.0
    %157 = vmatprep.subr.mxu0 0.0
    %158 = vmatpush1.xpose.msra.mxu0 0.0
    %159 = vmatprep.subr.mxu0 0.0
    %160 = vmatpush1.xpose.msra.mxu0 0.0
    %161 = vmatprep.subr.mxu0 0.0
    %162 = vmatpush1.xpose.msra.mxu0 0.0
    %163 = vmatprep.subr.mxu0 0.0
    %164 = vmatpush1.xpose.msra.mxu0 0.0
    %165 = vmatprep.subr.mxu0 0.0
    %166 = vmatpush1.xpose.msra.mxu0 %v133
    %167 = vmatprep.subr.mxu0 0.0
    %168 = vmatpush2.xpose.msra.mxu0 0.0
    %169 = vmatprep.subr.mxu0 0.0
    %170 = vmatpush2.xpose.msra.mxu0 0.0
    %171 = vmatprep.subr.mxu0 0.0
    %172 = vmatpush2.xpose.msra.mxu0 0.0
    %173 = vmatprep.subr.mxu0 0.0
    %174 = vmatpush2.xpose.msra.mxu0 0.0
    %175 = vmatprep.subr.mxu0 0.0
    %176 = vmatpush2.xpose.msra.mxu0 0.0
    %177 = vmatprep.subr.mxu0 0.0
    %178 = vmatpush2.xpose.msra.mxu0 0.0
    %179 = vmatprep.subr.mxu0 0.0
    %180 = vmatpush2.xpose.msra.mxu0 0.0
    %181 = vmatprep.subr.mxu0 0.0
    %182 = vmatpush2.xpose.msra.mxu0 0.0
    %183 = vmatprep.subr.mxu0 0.0
    %184 = vmatpush2.xpose.msra.mxu0 0.0
    %185 = vmatprep.subr.mxu0 0.0
    %186 = vmatpush2.xpose.msra.mxu0 0.0
    %187 = vmatprep.subr.mxu0 0.0
    %188 = vmatpush2.xpose.msra.mxu0 0.0
    %189 = vmatprep.subr.mxu0 0.0
    %190 = vmatpush2.xpose.msra.mxu0 0.0
    %191 = vmatprep.subr.mxu0 0.0
    %192 = vmatpush2.xpose.msra.mxu0 0.0
    %193 = vmatprep.subr.mxu0 0.0
    %194 = vmatpush2.xpose.msra.mxu0 0.0
    %195 = vmatprep.subr.mxu0 0.0
    %196 = vmatpush2.xpose.msra.mxu0 0.0
    %197 = vmatprep.subr.mxu0 0.0
    %198 = vmatpush2.xpose.msra.mxu0 0.0
    %199 = vmatprep.mubr.f32.mxu0 0.0
    %200 = vmatmul.mubr.f32.gmra.mxu0 %v130
    %v201 = vpop.f32.mrf.mxu0
    %v202 = vadd.f32 %v126, %v201
    %v203 = vpop.f32.mrf.mxu0
    %204 = vdwg.mxu0
    %vm205 = vcmask 58368
    %206 = vst.msk [vmem:[#allocation2] sm:$0x3] %vm205, %v202
    // Predicated region
    $region22: #{mpcn_forward.19} parent=1 // pred_check
      _
    $region23: #{mpcn_forward.19} parent=1 // pred_check_branch
      %208 = sbr.rel (0) target = $region25
    $region24: #{mpcn_forward.19} parent=1 // pred_region
      %s210 = ssub.s32 32, 32
      %211 = vsyncadd [#allocation3], %s210
      %s213 = sshll.u32 [#allocation2], 4
      %s214 = int_to_ptr.vmem [resolvable:$true] %s213
      %216 = dma.vmem_to_hbm [thread:$0]  %s214, 32, %s5, [#allocation3]
    $region25: #{mpcn_forward.19} parent=1 // pred_fallthru
      _
    // Predicated region
    $region26: #{mpcn_forward.19} parent=1 // pred_check
      _
    $region27: #{mpcn_forward.19} parent=1 // pred_check_branch
      %218 = sbr.rel (0) target = $region29
    $region28: #{mpcn_forward.19} parent=1 // pred_region
      %219 = dma.done [#allocation3], 32
    $region29: #{mpcn_forward.19} parent=1 // pred_fallthru
      _
    %220 = vsyncpa [#allocation3], 1

</llo_original>
